<compile_context>
chip_gen: v7x
topology: tpu7x:2x2x1
jax: 0.10.0
libtpu: 0.0.40
codegen_flags: <defaults>
</compile_context>

<pallas_src>
import numpy as np
import jax
import jax.numpy as jnp
from jax import lax
from jax.experimental import pallas as pl
from jax.experimental.pallas import tpu as pltpu


def _round_up(x, m):
    return (x + m - 1) // m * m


# ---------------------------------------------------------------------------
# Host-side constant builders (hoisted out of the kernel per the perf review)
# ---------------------------------------------------------------------------

def _tap_mask_array(h, w, nc):
    """(9, nc*h*w) f32 validity masks for the 9 taps of a 3x3/pad=1 conv, computed
    per-image (index mod h*w) so lane-packed images never leak into each other."""
    l = np.arange(nc * h * w)
    q = l % (h * w)
    y, x = q // w, q % w
    rows = []
    for oy in (-1, 0, 1):
        for ox in (-1, 0, 1):
            rows.append(((y + oy >= 0) & (y + oy < h) &
                         (x + ox >= 0) & (x + ox < w)).astype(np.float32))
    return jnp.asarray(np.stack(rows, axis=0))


def _pool_sel_array(h, w, nc):
    """(nc*h*w, nc*(h//2)*(w//2)) one-hot gather compacting even (y, x) positions,
    block-diagonal over the nc lane-packed images."""
    ho, wo = h // 2, w // 2
    src = np.arange(nc * h * w)[:, None]
    dst = np.arange(nc * ho * wo)[None, :]
    ns, qs = src // (h * w), src % (h * w)
    nd, qd = dst // (ho * wo), dst % (ho * wo)
    ys, xs = qs // w, qs % w
    yd, xd = qd // wo, qd % wo
    sel = (ns == nd) & (ys == 2 * yd) & (xs == 2 * xd)
    return jnp.asarray(sel.astype(np.float32))


# ---------------------------------------------------------------------------
# Parameters: raw (PyTorch-equivalent, eval mode) + one-time kernel-layout prep
# ---------------------------------------------------------------------------

def init_params(key, nr_conv_blocks=2, channels=4, embedding_size=32, shape=16):
    dims = [1] + [channels * 2 ** i for i in range(nr_conv_blocks)]
    params = {"blocks": []}
    eps = 1e-5
    for bi in range(nr_conv_blocks):
        in_dim, out_dim = dims[bi], dims[bi + 1]
        layers = []
        for (ci, co) in [(in_dim, out_dim), (out_dim, out_dim), (out_dim, out_dim)]:
            key, kw, kg, kb = jax.random.split(key, 4)
            w = 0.1 * jax.random.normal(kw, (3, 3, ci, co), jnp.float32)   # HWIO
            gamma = 1.0 + 0.1 * jax.random.normal(kg, (co,), jnp.float32)
            beta = 0.1 * jax.random.normal(kb, (co,), jnp.float32)
            running_mean = jnp.zeros((co,), jnp.float32)
            running_var = jnp.ones((co,), jnp.float32)
            scale = gamma / jnp.sqrt(running_var + eps)        # BN eval-mode fold
            bias = beta - running_mean * scale
            layers.append({"w_hwio": w, "scale": scale, "bias": bias})
        params["blocks"].append(layers)
    feat = int(channels * 2 ** (nr_conv_blocks - 1) * (shape / 2 ** nr_conv_blocks) ** 2)
    key, kw, kb = jax.random.split(key, 3)
    params["lin_w"] = 0.05 * jax.random.normal(kw, (embedding_size, feat), jnp.float32)
    params["lin_b"] = 0.01 * jax.random.normal(kb, (embedding_size,), jnp.float32)
    return params


def prepare_params(params, shape, images_per_step):
    """One-time transform into kernel layout for a fixed packing factor `nc`:
    BN folded into conv weights, channels padded to multiples of 8, tap masks /
    pool gathers / flatten+Linear matrices precomputed host-side."""
    nc = int(images_per_step)
    consts, layer_channels = [], []
    h = w = shape
    cin_first = int(params["blocks"][0][0]["w_hwio"].shape[2])
    chans = []
    for layers in params["blocks"]:
        chans = []
        for lyr in layers:
            wk = lyr["w_hwio"]
            ci, co = int(wk.shape[2]), int(wk.shape[3])
            cip, cop = _round_up(ci, 8), _round_up(co, 8)
            wsc = jnp.transpose(wk.reshape(9, ci, co) * lyr["scale"], (2, 0, 1))
            w2 = jnp.zeros((cop, 9, cip), jnp.float32).at[:co, :, :ci].set(wsc)
            consts.append(w2.reshape(cop, 9 * cip))                       # folded conv weight
            consts.append(jnp.zeros((cop, 1), jnp.float32).at[:co, 0].set(lyr["bias"]))
            chans.append(co)
        consts.append(_tap_mask_array(h, w, nc))                          # (9, nc*h*w)
        consts.append(_pool_sel_array(h, w, nc))                          # pool gather
        layer_channels.append(chans)
        h //= 2
        w //= 2

    # ---- NCHW flatten + Linear as three small one-hot/weight matmuls ----
    c_last = chans[-1]
    cpl = _round_up(c_last, 8)
    p_last = h * w
    e = int(params["lin_w"].shape[0])
    rep = np.zeros((cpl * p_last, cpl), np.float32)                       # row replicate
    rep[np.arange(cpl * p_last), np.arange(cpl * p_last) // p_last] = 1.0
    rowp = (np.arange(cpl * p_last) % p_last)[:, None]                    # diagonal select
    colp = (np.arange(nc * p_last) % p_last)[None, :]
    diag = (rowp == colp).astype(np.float32)
    csum = ((np.arange(nc * p_last)[:, None] // p_last)                   # per-image col sum
            == np.arange(nc)[None, :]).astype(np.float32)
    wlt = np.zeros((e, cpl * p_last), np.float32)                         # (E, Cpad*P)
    wlt[:, :c_last * p_last] = np.asarray(params["lin_w"], np.float32)
    consts += [jnp.asarray(rep), jnp.asarray(diag), jnp.asarray(csum),
               jnp.asarray(wlt), jnp.asarray(params["lin_b"]).reshape(e, 1)]

    return {"consts": consts, "layer_channels": layer_channels, "shape": shape,
            "nc": nc, "cin": cin_first, "cpad_in": _round_up(cin_first, 8),
            "embedding_size": e}


# ---------------------------------------------------------------------------
# The single fused kernel
# ---------------------------------------------------------------------------

def _make_fused_kernel(layer_channels, shape):

    def _conv_bn_relu(act, w2_ref, b_ref, mask_ref, width):
        # 3x3 conv (padding=1) + folded BN + ReLU on channel-major, lane-packed act.
        pieces, t = [], 0
        for oy in (-1, 0, 1):
            for ox in (-1, 0, 1):
                sft = oy * width + ox
                shifted = act if sft == 0 else jnp.roll(act, -sft, axis=1)
                if oy == 0 and ox == 0:
                    pieces.append(shifted)                 # centre tap always valid
                else:
                    pieces.append(shifted * mask_ref[t:t + 1, :])
                t += 1
        taps = jnp.concatenate(pieces, axis=0)             # (9*Cin_pad, nc*h*w)
        y = jnp.dot(w2_ref[...], taps, preferred_element_type=jnp.float32)
        return jnp.maximum(y + b_ref[...], 0.0)

    def kernel(*refs):
        x_ref, out_ref = refs[0], refs[-1]
        cr = refs[1:-1]
        p = 0
        act = x_ref[0]                                     # (Cpad0, nc*shape*shape)
        h = w = shape
        for convs in layer_channels:
            conv_refs = []
            for _ in convs:
                conv_refs.append((cr[p], cr[p + 1]))
                p += 2
            mask_ref, sel_ref = cr[p], cr[p + 1]
            p += 2
            for w2_ref, b_ref in conv_refs:
                act = _conv_bn_relu(act, w2_ref, b_ref, mask_ref, w)
            # MaxPool2d(2): two pairwise maxes + precomputed even-index gather matmul.
            m = jnp.maximum(act, jnp.roll(act, -1, axis=1))
            m = jnp.maximum(m, jnp.roll(m, -w, axis=1))
            act = jnp.dot(m, sel_ref[...], preferred_element_type=jnp.float32)
            h //= 2
            w //= 2

        # NCHW flatten + Linear for all nc packed images, MXU-only (no relayouts):
        #   repl[c*P+p, :]    = act[c, :]
        #   feats_T[c*P+p, n] = act[c, n*P+p]
        #   out_T[e, n]       = sum_{c,p} W[e, c*P+p] * feats_T[c*P+p, n] + b[e]
        rep_ref, diag_ref, csum_ref, wlt_ref, lb_ref = cr[p:p + 5]
        repl = jnp.dot(rep_ref[...], act, preferred_element_type=jnp.float32)
        feats_t = jnp.dot(repl * diag_ref[...], csum_ref[...],
                          preferred_element_type=jnp.float32)
        out_t = jnp.dot(wlt_ref[...], feats_t, preferred_element_type=jnp.float32)
        out_ref[0] = out_t + lb_ref[...]

    return kernel


# ---------------------------------------------------------------------------
# Forward: single fused pallas_call, grid over lane-packed image chunks
# ---------------------------------------------------------------------------

def forward(kparams, x_nchw):
    n, cin, s, _ = x_nchw.shape
    nc = kparams["nc"]
    cpad0 = kparams["cpad_in"]
    e = kparams["embedding_size"]
    consts = kparams["consts"]
    assert s == kparams["shape"] and cin == kparams["cin"]

    n_pad = _round_up(n, nc)
    n_chunks = n_pad // nc

    # NCHW -> per-chunk channel-major with images lane-packed: (chunks, Cpad0, nc*S*S)
    xr = x_nchw.reshape(n, cin, s * s).astype(jnp.float32)
    xr = jnp.pad(xr, ((0, n_pad - n), (0, 0), (0, 0)))
    xr = xr.reshape(n_chunks, nc, cin, s * s)
    xr = jnp.transpose(xr, (0, 2, 1, 3)).reshape(n_chunks, cin, nc * s * s)
    x3 = jnp.pad(xr, ((0, 0), (0, cpad0 - cin), (0, 0)))

    def _const_map(ndim):
        return lambda b: (0,) * ndim

    in_specs = [pl.BlockSpec((1, cpad0, nc * s * s), lambda b: (b, 0, 0))]
    in_specs += [pl.BlockSpec(c.shape, _const_map(c.ndim)) for c in consts]

    out = pl.pallas_call(
        _make_fused_kernel(kparams["layer_channels"], s),
        out_shape=jax.ShapeDtypeStruct((n_chunks, e, nc), jnp.float32),
        grid=(n_chunks,),
        in_specs=in_specs,
        out_specs=pl.BlockSpec((1, e, nc), lambda b: (b, 0, 0)),
        compiler_params=pltpu.CompilerParams(
            dimension_semantics=("parallel",)),   # chunks split across v7x's 2 TCs
    )(x3, *consts)

    # (chunks, E, nc) -> (N, E)
    return jnp.transpose(out, (0, 2, 1)).reshape(n_pad, e)[:n]


# ---------------------------------------------------------------------------
# Pure-JAX reference (same math) for a correctness sanity check
# ---------------------------------------------------------------------------

def reference_forward(params, x_nchw):
    x = jnp.transpose(x_nchw, (0, 2, 3, 1))
    for layers in params["blocks"]:
        for lyr in layers:
            x = lax.conv_general_dilated(
                x, lyr["w_hwio"], window_strides=(1, 1), padding="SAME",
                dimension_numbers=("NHWC", "HWIO", "NHWC"))
            x = jnp.maximum(x * lyr["scale"] + lyr["bias"], 0.0)
        x = lax.reduce_window(x, -jnp.inf, lax.max,
                              (1, 2, 2, 1), (1, 2, 2, 1), "VALID")
    n = x.shape[0]
    x = jnp.transpose(x, (0, 3, 1, 2)).reshape(n, -1)
    return x @ params["lin_w"].T + params["lin_b"]


if __name__ == "__main__":
    key = jax.random.PRNGKey(0)
    kx, kp = jax.random.split(key)

    # nr_conv_blocks=2, channels=4, embedding_size=32, shape=16, batch=2
    #   -> Linear(4*2*(16/4)^2 = 128, 32)
    N, C_IN, S = 2, 1, 16
    x = jax.random.normal(kx, (N, C_IN, S, S), jnp.float32)   # NCHW like PyTorch
    params = init_params(kp, nr_conv_blocks=2, channels=4,
                         embedding_size=32, shape=S)

    # Lane-pack the whole (tiny) batch into one grid step.  For larger batches on
    # v7x use images_per_step ~= ceil(N/2) (capped at ~8) so both TCs get a chunk.
    kparams = prepare_params(params, shape=S, images_per_step=min(N, 8))

    out = jax.block_until_ready(forward(kparams, x))
    assert out.shape == (N, 32), out.shape

    ref = reference_forward(params, x)
    assert jnp.allclose(out, ref, atol=1e-3, rtol=1e-3), \
        float(jnp.max(jnp.abs(out - ref)))

    print("KERNEL_OK")
</pallas_src>

<mosaic_0001>
module attributes {stable_mosaic.version = 11 : i64} {
  func.func @kernel(%arg0: i32, %arg1: memref<1x8x512xf32, #tpu.memory_space<vmem>>, %arg2: memref<8x72xf32, #tpu.memory_space<vmem>>, %arg3: memref<8x1xf32, #tpu.memory_space<vmem>>, %arg4: memref<8x72xf32, #tpu.memory_space<vmem>>, %arg5: memref<8x1xf32, #tpu.memory_space<vmem>>, %arg6: memref<8x72xf32, #tpu.memory_space<vmem>>, %arg7: memref<8x1xf32, #tpu.memory_space<vmem>>, %arg8: memref<9x512xf32, #tpu.memory_space<vmem>>, %arg9: memref<512x128xf32, #tpu.memory_space<vmem>>, %arg10: memref<8x72xf32, #tpu.memory_space<vmem>>, %arg11: memref<8x1xf32, #tpu.memory_space<vmem>>, %arg12: memref<8x72xf32, #tpu.memory_space<vmem>>, %arg13: memref<8x1xf32, #tpu.memory_space<vmem>>, %arg14: memref<8x72xf32, #tpu.memory_space<vmem>>, %arg15: memref<8x1xf32, #tpu.memory_space<vmem>>, %arg16: memref<9x128xf32, #tpu.memory_space<vmem>>, %arg17: memref<128x32xf32, #tpu.memory_space<vmem>>, %arg18: memref<128x8xf32, #tpu.memory_space<vmem>>, %arg19: memref<128x32xf32, #tpu.memory_space<vmem>>, %arg20: memref<32x2xf32, #tpu.memory_space<vmem>>, %arg21: memref<32x128xf32, #tpu.memory_space<vmem>>, %arg22: memref<32x1xf32, #tpu.memory_space<vmem>>, %arg23: memref<1x32x2xf32, #tpu.memory_space<vmem>>) attributes {dimension_semantics = [#tpu.dimension_semantics<parallel>], iteration_bounds = array<i64: 1>, scalar_prefetch = 0 : i64, scratch_operands = 0 : i64, tpu.core_type = #tpu.core_type<tc>, window_params = [{transform_indices = @transform_0, window_bounds = array<i64: 1, 8, 512>}, {pipeline_mode = #tpu.pipeline_mode<synchronous>, transform_indices = @transform_1, window_bounds = array<i64: 8, 72>}, {pipeline_mode = #tpu.pipeline_mode<synchronous>, transform_indices = @transform_2, window_bounds = array<i64: 8, 1>}, {pipeline_mode = #tpu.pipeline_mode<synchronous>, transform_indices = @transform_3, window_bounds = array<i64: 8, 72>}, {pipeline_mode = #tpu.pipeline_mode<synchronous>, transform_indices = @transform_4, window_bounds = array<i64: 8, 1>}, {pipeline_mode = #tpu.pipeline_mode<synchronous>, transform_indices = @transform_5, window_bounds = array<i64: 8, 72>}, {pipeline_mode = #tpu.pipeline_mode<synchronous>, transform_indices = @transform_6, window_bounds = array<i64: 8, 1>}, {pipeline_mode = #tpu.pipeline_mode<synchronous>, transform_indices = @transform_7, window_bounds = array<i64: 9, 512>}, {pipeline_mode = #tpu.pipeline_mode<synchronous>, transform_indices = @transform_8, window_bounds = array<i64: 512, 128>}, {pipeline_mode = #tpu.pipeline_mode<synchronous>, transform_indices = @transform_9, window_bounds = array<i64: 8, 72>}, {pipeline_mode = #tpu.pipeline_mode<synchronous>, transform_indices = @transform_10, window_bounds = array<i64: 8, 1>}, {pipeline_mode = #tpu.pipeline_mode<synchronous>, transform_indices = @transform_11, window_bounds = array<i64: 8, 72>}, {pipeline_mode = #tpu.pipeline_mode<synchronous>, transform_indices = @transform_12, window_bounds = array<i64: 8, 1>}, {pipeline_mode = #tpu.pipeline_mode<synchronous>, transform_indices = @transform_13, window_bounds = array<i64: 8, 72>}, {pipeline_mode = #tpu.pipeline_mode<synchronous>, transform_indices = @transform_14, window_bounds = array<i64: 8, 1>}, {pipeline_mode = #tpu.pipeline_mode<synchronous>, transform_indices = @transform_15, window_bounds = array<i64: 9, 128>}, {pipeline_mode = #tpu.pipeline_mode<synchronous>, transform_indices = @transform_16, window_bounds = array<i64: 128, 32>}, {pipeline_mode = #tpu.pipeline_mode<synchronous>, transform_indices = @transform_17, window_bounds = array<i64: 128, 8>}, {pipeline_mode = #tpu.pipeline_mode<synchronous>, transform_indices = @transform_18, window_bounds = array<i64: 128, 32>}, {pipeline_mode = #tpu.pipeline_mode<synchronous>, transform_indices = @transform_19, window_bounds = array<i64: 32, 2>}, {pipeline_mode = #tpu.pipeline_mode<synchronous>, transform_indices = @transform_20, window_bounds = array<i64: 32, 128>}, {pipeline_mode = #tpu.pipeline_mode<synchronous>, transform_indices = @transform_21, window_bounds = array<i64: 32, 1>}, {transform_indices = @transform_22, window_bounds = array<i64: 1, 32, 2>}]} {
    %c0 = arith.constant 0 : index
    %c0_0 = arith.constant 0 : index
    %c0_1 = arith.constant 0 : index
    %0 = vector.load %arg1[%c0, %c0_0, %c0_1] : memref<1x8x512xf32, #tpu.memory_space<vmem>>, vector<1x8x512xf32>
    %1 = vector.shape_cast %0 : vector<1x8x512xf32> to vector<8x512xf32>
    %2 = vector.extract_strided_slice %1 {offsets = [0, 495], sizes = [8, 17], strides = [1, 1]} : vector<8x512xf32> to vector<8x17xf32>
    %3 = vector.extract_strided_slice %1 {offsets = [0, 0], sizes = [8, 495], strides = [1, 1]} : vector<8x512xf32> to vector<8x495xf32>
    %4 = tpu.concatenate %2, %3 in 1 : vector<8x17xf32>, vector<8x495xf32> -> vector<8x512xf32>
    %c0_2 = arith.constant 0 : index
    %c0_3 = arith.constant 0 : index
    %5 = vector.load %arg8[%c0_2, %c0_3] : memref<9x512xf32, #tpu.memory_space<vmem>>, vector<1x512xf32>
    %6 = vector.broadcast %5 : vector<1x512xf32> to vector<8x512xf32>
    %7 = arith.mulf %4, %6 : vector<8x512xf32>
    %8 = vector.extract_strided_slice %1 {offsets = [0, 496], sizes = [8, 16], strides = [1, 1]} : vector<8x512xf32> to vector<8x16xf32>
    %9 = vector.extract_strided_slice %1 {offsets = [0, 0], sizes = [8, 496], strides = [1, 1]} : vector<8x512xf32> to vector<8x496xf32>
    %10 = tpu.concatenate %8, %9 in 1 : vector<8x16xf32>, vector<8x496xf32> -> vector<8x512xf32>
    %c1 = arith.constant 1 : index
    %c0_4 = arith.constant 0 : index
    %11 = vector.load %arg8[%c1, %c0_4] : memref<9x512xf32, #tpu.memory_space<vmem>>, vector<1x512xf32>
    %12 = vector.broadcast %11 : vector<1x512xf32> to vector<8x512xf32>
    %13 = arith.mulf %10, %12 : vector<8x512xf32>
    %14 = vector.extract_strided_slice %1 {offsets = [0, 497], sizes = [8, 15], strides = [1, 1]} : vector<8x512xf32> to vector<8x15xf32>
    %15 = vector.extract_strided_slice %1 {offsets = [0, 0], sizes = [8, 497], strides = [1, 1]} : vector<8x512xf32> to vector<8x497xf32>
    %16 = tpu.concatenate %14, %15 in 1 : vector<8x15xf32>, vector<8x497xf32> -> vector<8x512xf32>
    %c2 = arith.constant 2 : index
    %c0_5 = arith.constant 0 : index
    %17 = vector.load %arg8[%c2, %c0_5] : memref<9x512xf32, #tpu.memory_space<vmem>>, vector<1x512xf32>
    %18 = vector.broadcast %17 : vector<1x512xf32> to vector<8x512xf32>
    %19 = arith.mulf %16, %18 : vector<8x512xf32>
    %20 = vector.extract_strided_slice %1 {offsets = [0, 511], sizes = [8, 1], strides = [1, 1]} : vector<8x512xf32> to vector<8x1xf32>
    %21 = vector.extract_strided_slice %1 {offsets = [0, 0], sizes = [8, 511], strides = [1, 1]} : vector<8x512xf32> to vector<8x511xf32>
    %22 = tpu.concatenate %20, %21 in 1 : vector<8x1xf32>, vector<8x511xf32> -> vector<8x512xf32>
    %c3 = arith.constant 3 : index
    %c0_6 = arith.constant 0 : index
    %23 = vector.load %arg8[%c3, %c0_6] : memref<9x512xf32, #tpu.memory_space<vmem>>, vector<1x512xf32>
    %24 = vector.broadcast %23 : vector<1x512xf32> to vector<8x512xf32>
    %25 = arith.mulf %22, %24 : vector<8x512xf32>
    %26 = vector.extract_strided_slice %1 {offsets = [0, 1], sizes = [8, 511], strides = [1, 1]} : vector<8x512xf32> to vector<8x511xf32>
    %27 = vector.extract_strided_slice %1 {offsets = [0, 0], sizes = [8, 1], strides = [1, 1]} : vector<8x512xf32> to vector<8x1xf32>
    %28 = tpu.concatenate %26, %27 in 1 : vector<8x511xf32>, vector<8x1xf32> -> vector<8x512xf32>
    %c5 = arith.constant 5 : index
    %c0_7 = arith.constant 0 : index
    %29 = vector.load %arg8[%c5, %c0_7] : memref<9x512xf32, #tpu.memory_space<vmem>>, vector<1x512xf32>
    %30 = vector.broadcast %29 : vector<1x512xf32> to vector<8x512xf32>
    %31 = arith.mulf %28, %30 : vector<8x512xf32>
    %32 = vector.extract_strided_slice %1 {offsets = [0, 15], sizes = [8, 497], strides = [1, 1]} : vector<8x512xf32> to vector<8x497xf32>
    %33 = vector.extract_strided_slice %1 {offsets = [0, 0], sizes = [8, 15], strides = [1, 1]} : vector<8x512xf32> to vector<8x15xf32>
    %34 = tpu.concatenate %32, %33 in 1 : vector<8x497xf32>, vector<8x15xf32> -> vector<8x512xf32>
    %c6 = arith.constant 6 : index
    %c0_8 = arith.constant 0 : index
    %35 = vector.load %arg8[%c6, %c0_8] : memref<9x512xf32, #tpu.memory_space<vmem>>, vector<1x512xf32>
    %36 = vector.broadcast %35 : vector<1x512xf32> to vector<8x512xf32>
    %37 = arith.mulf %34, %36 : vector<8x512xf32>
    %38 = vector.extract_strided_slice %1 {offsets = [0, 16], sizes = [8, 496], strides = [1, 1]} : vector<8x512xf32> to vector<8x496xf32>
    %39 = vector.extract_strided_slice %1 {offsets = [0, 0], sizes = [8, 16], strides = [1, 1]} : vector<8x512xf32> to vector<8x16xf32>
    %40 = tpu.concatenate %38, %39 in 1 : vector<8x496xf32>, vector<8x16xf32> -> vector<8x512xf32>
    %c7 = arith.constant 7 : index
    %c0_9 = arith.constant 0 : index
    %41 = vector.load %arg8[%c7, %c0_9] : memref<9x512xf32, #tpu.memory_space<vmem>>, vector<1x512xf32>
    %42 = vector.broadcast %41 : vector<1x512xf32> to vector<8x512xf32>
    %43 = arith.mulf %40, %42 : vector<8x512xf32>
    %44 = vector.extract_strided_slice %1 {offsets = [0, 17], sizes = [8, 495], strides = [1, 1]} : vector<8x512xf32> to vector<8x495xf32>
    %45 = vector.extract_strided_slice %1 {offsets = [0, 0], sizes = [8, 17], strides = [1, 1]} : vector<8x512xf32> to vector<8x17xf32>
    %46 = tpu.concatenate %44, %45 in 1 : vector<8x495xf32>, vector<8x17xf32> -> vector<8x512xf32>
    %c8 = arith.constant 8 : index
    %c0_10 = arith.constant 0 : index
    %47 = vector.load %arg8[%c8, %c0_10] : memref<9x512xf32, #tpu.memory_space<vmem>>, vector<1x512xf32>
    %48 = vector.broadcast %47 : vector<1x512xf32> to vector<8x512xf32>
    %49 = arith.mulf %46, %48 : vector<8x512xf32>
    %50 = tpu.concatenate %7, %13, %19, %25, %1, %31, %37, %43, %49 in 0 : vector<8x512xf32>, vector<8x512xf32>, vector<8x512xf32>, vector<8x512xf32>, vector<8x512xf32>, vector<8x512xf32>, vector<8x512xf32>, vector<8x512xf32>, vector<8x512xf32> -> vector<72x512xf32>
    %c0_11 = arith.constant 0 : index
    %c0_12 = arith.constant 0 : index
    %51 = vector.load %arg2[%c0_11, %c0_12] : memref<8x72xf32, #tpu.memory_space<vmem>>, vector<8x72xf32>
    %cst = arith.constant dense<0.000000e+00> : vector<8x512xf32>
    %52 = tpu.matmul %51, %50, %cst {dimension_numbers = #tpu.dot_dimension_numbers<[1], [0], [0], [1], [0, 0, 1, 1], [], []>} : vector<8x72xf32>, vector<72x512xf32>, vector<8x512xf32> -> vector<8x512xf32>
    %c0_13 = arith.constant 0 : index
    %c0_14 = arith.constant 0 : index
    %53 = vector.load %arg3[%c0_13, %c0_14] : memref<8x1xf32, #tpu.memory_space<vmem>>, vector<8x1xf32>
    %54 = vector.broadcast %53 : vector<8x1xf32> to vector<8x512xf32>
    %55 = arith.addf %52, %54 : vector<8x512xf32>
    %cst_15 = arith.constant 0.000000e+00 : f32
    %56 = vector.broadcast %cst_15 : f32 to vector<8x512xf32>
    %57 = arith.maximumf %55, %56 : vector<8x512xf32>
    %58 = vector.extract_strided_slice %57 {offsets = [0, 495], sizes = [8, 17], strides = [1, 1]} : vector<8x512xf32> to vector<8x17xf32>
    %59 = vector.extract_strided_slice %57 {offsets = [0, 0], sizes = [8, 495], strides = [1, 1]} : vector<8x512xf32> to vector<8x495xf32>
    %60 = tpu.concatenate %58, %59 in 1 : vector<8x17xf32>, vector<8x495xf32> -> vector<8x512xf32>
    %c0_16 = arith.constant 0 : index
    %c0_17 = arith.constant 0 : index
    %61 = vector.load %arg8[%c0_16, %c0_17] : memref<9x512xf32, #tpu.memory_space<vmem>>, vector<1x512xf32>
    %62 = vector.broadcast %61 : vector<1x512xf32> to vector<8x512xf32>
    %63 = arith.mulf %60, %62 : vector<8x512xf32>
    %64 = vector.extract_strided_slice %57 {offsets = [0, 496], sizes = [8, 16], strides = [1, 1]} : vector<8x512xf32> to vector<8x16xf32>
    %65 = vector.extract_strided_slice %57 {offsets = [0, 0], sizes = [8, 496], strides = [1, 1]} : vector<8x512xf32> to vector<8x496xf32>
    %66 = tpu.concatenate %64, %65 in 1 : vector<8x16xf32>, vector<8x496xf32> -> vector<8x512xf32>
    %c1_18 = arith.constant 1 : index
    %c0_19 = arith.constant 0 : index
    %67 = vector.load %arg8[%c1_18, %c0_19] : memref<9x512xf32, #tpu.memory_space<vmem>>, vector<1x512xf32>
    %68 = vector.broadcast %67 : vector<1x512xf32> to vector<8x512xf32>
    %69 = arith.mulf %66, %68 : vector<8x512xf32>
    %70 = vector.extract_strided_slice %57 {offsets = [0, 497], sizes = [8, 15], strides = [1, 1]} : vector<8x512xf32> to vector<8x15xf32>
    %71 = vector.extract_strided_slice %57 {offsets = [0, 0], sizes = [8, 497], strides = [1, 1]} : vector<8x512xf32> to vector<8x497xf32>
    %72 = tpu.concatenate %70, %71 in 1 : vector<8x15xf32>, vector<8x497xf32> -> vector<8x512xf32>
    %c2_20 = arith.constant 2 : index
    %c0_21 = arith.constant 0 : index
    %73 = vector.load %arg8[%c2_20, %c0_21] : memref<9x512xf32, #tpu.memory_space<vmem>>, vector<1x512xf32>
    %74 = vector.broadcast %73 : vector<1x512xf32> to vector<8x512xf32>
    %75 = arith.mulf %72, %74 : vector<8x512xf32>
    %76 = vector.extract_strided_slice %57 {offsets = [0, 511], sizes = [8, 1], strides = [1, 1]} : vector<8x512xf32> to vector<8x1xf32>
    %77 = vector.extract_strided_slice %57 {offsets = [0, 0], sizes = [8, 511], strides = [1, 1]} : vector<8x512xf32> to vector<8x511xf32>
    %78 = tpu.concatenate %76, %77 in 1 : vector<8x1xf32>, vector<8x511xf32> -> vector<8x512xf32>
    %c3_22 = arith.constant 3 : index
    %c0_23 = arith.constant 0 : index
    %79 = vector.load %arg8[%c3_22, %c0_23] : memref<9x512xf32, #tpu.memory_space<vmem>>, vector<1x512xf32>
    %80 = vector.broadcast %79 : vector<1x512xf32> to vector<8x512xf32>
    %81 = arith.mulf %78, %80 : vector<8x512xf32>
    %82 = vector.extract_strided_slice %57 {offsets = [0, 1], sizes = [8, 511], strides = [1, 1]} : vector<8x512xf32> to vector<8x511xf32>
    %83 = vector.extract_strided_slice %57 {offsets = [0, 0], sizes = [8, 1], strides = [1, 1]} : vector<8x512xf32> to vector<8x1xf32>
    %84 = tpu.concatenate %82, %83 in 1 : vector<8x511xf32>, vector<8x1xf32> -> vector<8x512xf32>
    %c5_24 = arith.constant 5 : index
    %c0_25 = arith.constant 0 : index
    %85 = vector.load %arg8[%c5_24, %c0_25] : memref<9x512xf32, #tpu.memory_space<vmem>>, vector<1x512xf32>
    %86 = vector.broadcast %85 : vector<1x512xf32> to vector<8x512xf32>
    %87 = arith.mulf %84, %86 : vector<8x512xf32>
    %88 = vector.extract_strided_slice %57 {offsets = [0, 15], sizes = [8, 497], strides = [1, 1]} : vector<8x512xf32> to vector<8x497xf32>
    %89 = vector.extract_strided_slice %57 {offsets = [0, 0], sizes = [8, 15], strides = [1, 1]} : vector<8x512xf32> to vector<8x15xf32>
    %90 = tpu.concatenate %88, %89 in 1 : vector<8x497xf32>, vector<8x15xf32> -> vector<8x512xf32>
    %c6_26 = arith.constant 6 : index
    %c0_27 = arith.constant 0 : index
    %91 = vector.load %arg8[%c6_26, %c0_27] : memref<9x512xf32, #tpu.memory_space<vmem>>, vector<1x512xf32>
    %92 = vector.broadcast %91 : vector<1x512xf32> to vector<8x512xf32>
    %93 = arith.mulf %90, %92 : vector<8x512xf32>
    %94 = vector.extract_strided_slice %57 {offsets = [0, 16], sizes = [8, 496], strides = [1, 1]} : vector<8x512xf32> to vector<8x496xf32>
    %95 = vector.extract_strided_slice %57 {offsets = [0, 0], sizes = [8, 16], strides = [1, 1]} : vector<8x512xf32> to vector<8x16xf32>
    %96 = tpu.concatenate %94, %95 in 1 : vector<8x496xf32>, vector<8x16xf32> -> vector<8x512xf32>
    %c7_28 = arith.constant 7 : index
    %c0_29 = arith.constant 0 : index
    %97 = vector.load %arg8[%c7_28, %c0_29] : memref<9x512xf32, #tpu.memory_space<vmem>>, vector<1x512xf32>
    %98 = vector.broadcast %97 : vector<1x512xf32> to vector<8x512xf32>
    %99 = arith.mulf %96, %98 : vector<8x512xf32>
    %100 = vector.extract_strided_slice %57 {offsets = [0, 17], sizes = [8, 495], strides = [1, 1]} : vector<8x512xf32> to vector<8x495xf32>
    %101 = vector.extract_strided_slice %57 {offsets = [0, 0], sizes = [8, 17], strides = [1, 1]} : vector<8x512xf32> to vector<8x17xf32>
    %102 = tpu.concatenate %100, %101 in 1 : vector<8x495xf32>, vector<8x17xf32> -> vector<8x512xf32>
    %c8_30 = arith.constant 8 : index
    %c0_31 = arith.constant 0 : index
    %103 = vector.load %arg8[%c8_30, %c0_31] : memref<9x512xf32, #tpu.memory_space<vmem>>, vector<1x512xf32>
    %104 = vector.broadcast %103 : vector<1x512xf32> to vector<8x512xf32>
    %105 = arith.mulf %102, %104 : vector<8x512xf32>
    %106 = tpu.concatenate %63, %69, %75, %81, %57, %87, %93, %99, %105 in 0 : vector<8x512xf32>, vector<8x512xf32>, vector<8x512xf32>, vector<8x512xf32>, vector<8x512xf32>, vector<8x512xf32>, vector<8x512xf32>, vector<8x512xf32>, vector<8x512xf32> -> vector<72x512xf32>
    %c0_32 = arith.constant 0 : index
    %c0_33 = arith.constant 0 : index
    %107 = vector.load %arg4[%c0_32, %c0_33] : memref<8x72xf32, #tpu.memory_space<vmem>>, vector<8x72xf32>
    %cst_34 = arith.constant dense<0.000000e+00> : vector<8x512xf32>
    %108 = tpu.matmul %107, %106, %cst_34 {dimension_numbers = #tpu.dot_dimension_numbers<[1], [0], [0], [1], [0, 0, 1, 1], [], []>} : vector<8x72xf32>, vector<72x512xf32>, vector<8x512xf32> -> vector<8x512xf32>
    %c0_35 = arith.constant 0 : index
    %c0_36 = arith.constant 0 : index
    %109 = vector.load %arg5[%c0_35, %c0_36] : memref<8x1xf32, #tpu.memory_space<vmem>>, vector<8x1xf32>
    %110 = vector.broadcast %109 : vector<8x1xf32> to vector<8x512xf32>
    %111 = arith.addf %108, %110 : vector<8x512xf32>
    %cst_37 = arith.constant 0.000000e+00 : f32
    %112 = vector.broadcast %cst_37 : f32 to vector<8x512xf32>
    %113 = arith.maximumf %111, %112 : vector<8x512xf32>
    %114 = vector.extract_strided_slice %113 {offsets = [0, 495], sizes = [8, 17], strides = [1, 1]} : vector<8x512xf32> to vector<8x17xf32>
    %115 = vector.extract_strided_slice %113 {offsets = [0, 0], sizes = [8, 495], strides = [1, 1]} : vector<8x512xf32> to vector<8x495xf32>
    %116 = tpu.concatenate %114, %115 in 1 : vector<8x17xf32>, vector<8x495xf32> -> vector<8x512xf32>
    %c0_38 = arith.constant 0 : index
    %c0_39 = arith.constant 0 : index
    %117 = vector.load %arg8[%c0_38, %c0_39] : memref<9x512xf32, #tpu.memory_space<vmem>>, vector<1x512xf32>
    %118 = vector.broadcast %117 : vector<1x512xf32> to vector<8x512xf32>
    %119 = arith.mulf %116, %118 : vector<8x512xf32>
    %120 = vector.extract_strided_slice %113 {offsets = [0, 496], sizes = [8, 16], strides = [1, 1]} : vector<8x512xf32> to vector<8x16xf32>
    %121 = vector.extract_strided_slice %113 {offsets = [0, 0], sizes = [8, 496], strides = [1, 1]} : vector<8x512xf32> to vector<8x496xf32>
    %122 = tpu.concatenate %120, %121 in 1 : vector<8x16xf32>, vector<8x496xf32> -> vector<8x512xf32>
    %c1_40 = arith.constant 1 : index
    %c0_41 = arith.constant 0 : index
    %123 = vector.load %arg8[%c1_40, %c0_41] : memref<9x512xf32, #tpu.memory_space<vmem>>, vector<1x512xf32>
    %124 = vector.broadcast %123 : vector<1x512xf32> to vector<8x512xf32>
    %125 = arith.mulf %122, %124 : vector<8x512xf32>
    %126 = vector.extract_strided_slice %113 {offsets = [0, 497], sizes = [8, 15], strides = [1, 1]} : vector<8x512xf32> to vector<8x15xf32>
    %127 = vector.extract_strided_slice %113 {offsets = [0, 0], sizes = [8, 497], strides = [1, 1]} : vector<8x512xf32> to vector<8x497xf32>
    %128 = tpu.concatenate %126, %127 in 1 : vector<8x15xf32>, vector<8x497xf32> -> vector<8x512xf32>
    %c2_42 = arith.constant 2 : index
    %c0_43 = arith.constant 0 : index
    %129 = vector.load %arg8[%c2_42, %c0_43] : memref<9x512xf32, #tpu.memory_space<vmem>>, vector<1x512xf32>
    %130 = vector.broadcast %129 : vector<1x512xf32> to vector<8x512xf32>
    %131 = arith.mulf %128, %130 : vector<8x512xf32>
    %132 = vector.extract_strided_slice %113 {offsets = [0, 511], sizes = [8, 1], strides = [1, 1]} : vector<8x512xf32> to vector<8x1xf32>
    %133 = vector.extract_strided_slice %113 {offsets = [0, 0], sizes = [8, 511], strides = [1, 1]} : vector<8x512xf32> to vector<8x511xf32>
    %134 = tpu.concatenate %132, %133 in 1 : vector<8x1xf32>, vector<8x511xf32> -> vector<8x512xf32>
    %c3_44 = arith.constant 3 : index
    %c0_45 = arith.constant 0 : index
    %135 = vector.load %arg8[%c3_44, %c0_45] : memref<9x512xf32, #tpu.memory_space<vmem>>, vector<1x512xf32>
    %136 = vector.broadcast %135 : vector<1x512xf32> to vector<8x512xf32>
    %137 = arith.mulf %134, %136 : vector<8x512xf32>
    %138 = vector.extract_strided_slice %113 {offsets = [0, 1], sizes = [8, 511], strides = [1, 1]} : vector<8x512xf32> to vector<8x511xf32>
    %139 = vector.extract_strided_slice %113 {offsets = [0, 0], sizes = [8, 1], strides = [1, 1]} : vector<8x512xf32> to vector<8x1xf32>
    %140 = tpu.concatenate %138, %139 in 1 : vector<8x511xf32>, vector<8x1xf32> -> vector<8x512xf32>
    %c5_46 = arith.constant 5 : index
    %c0_47 = arith.constant 0 : index
    %141 = vector.load %arg8[%c5_46, %c0_47] : memref<9x512xf32, #tpu.memory_space<vmem>>, vector<1x512xf32>
    %142 = vector.broadcast %141 : vector<1x512xf32> to vector<8x512xf32>
    %143 = arith.mulf %140, %142 : vector<8x512xf32>
    %144 = vector.extract_strided_slice %113 {offsets = [0, 15], sizes = [8, 497], strides = [1, 1]} : vector<8x512xf32> to vector<8x497xf32>
    %145 = vector.extract_strided_slice %113 {offsets = [0, 0], sizes = [8, 15], strides = [1, 1]} : vector<8x512xf32> to vector<8x15xf32>
    %146 = tpu.concatenate %144, %145 in 1 : vector<8x497xf32>, vector<8x15xf32> -> vector<8x512xf32>
    %c6_48 = arith.constant 6 : index
    %c0_49 = arith.constant 0 : index
    %147 = vector.load %arg8[%c6_48, %c0_49] : memref<9x512xf32, #tpu.memory_space<vmem>>, vector<1x512xf32>
    %148 = vector.broadcast %147 : vector<1x512xf32> to vector<8x512xf32>
    %149 = arith.mulf %146, %148 : vector<8x512xf32>
    %150 = vector.extract_strided_slice %113 {offsets = [0, 16], sizes = [8, 496], strides = [1, 1]} : vector<8x512xf32> to vector<8x496xf32>
    %151 = vector.extract_strided_slice %113 {offsets = [0, 0], sizes = [8, 16], strides = [1, 1]} : vector<8x512xf32> to vector<8x16xf32>
    %152 = tpu.concatenate %150, %151 in 1 : vector<8x496xf32>, vector<8x16xf32> -> vector<8x512xf32>
    %c7_50 = arith.constant 7 : index
    %c0_51 = arith.constant 0 : index
    %153 = vector.load %arg8[%c7_50, %c0_51] : memref<9x512xf32, #tpu.memory_space<vmem>>, vector<1x512xf32>
    %154 = vector.broadcast %153 : vector<1x512xf32> to vector<8x512xf32>
    %155 = arith.mulf %152, %154 : vector<8x512xf32>
    %156 = vector.extract_strided_slice %113 {offsets = [0, 17], sizes = [8, 495], strides = [1, 1]} : vector<8x512xf32> to vector<8x495xf32>
    %157 = vector.extract_strided_slice %113 {offsets = [0, 0], sizes = [8, 17], strides = [1, 1]} : vector<8x512xf32> to vector<8x17xf32>
    %158 = tpu.concatenate %156, %157 in 1 : vector<8x495xf32>, vector<8x17xf32> -> vector<8x512xf32>
    %c8_52 = arith.constant 8 : index
    %c0_53 = arith.constant 0 : index
    %159 = vector.load %arg8[%c8_52, %c0_53] : memref<9x512xf32, #tpu.memory_space<vmem>>, vector<1x512xf32>
    %160 = vector.broadcast %159 : vector<1x512xf32> to vector<8x512xf32>
    %161 = arith.mulf %158, %160 : vector<8x512xf32>
    %162 = tpu.concatenate %119, %125, %131, %137, %113, %143, %149, %155, %161 in 0 : vector<8x512xf32>, vector<8x512xf32>, vector<8x512xf32>, vector<8x512xf32>, vector<8x512xf32>, vector<8x512xf32>, vector<8x512xf32>, vector<8x512xf32>, vector<8x512xf32> -> vector<72x512xf32>
    %c0_54 = arith.constant 0 : index
    %c0_55 = arith.constant 0 : index
    %163 = vector.load %arg6[%c0_54, %c0_55] : memref<8x72xf32, #tpu.memory_space<vmem>>, vector<8x72xf32>
    %cst_56 = arith.constant dense<0.000000e+00> : vector<8x512xf32>
    %164 = tpu.matmul %163, %162, %cst_56 {dimension_numbers = #tpu.dot_dimension_numbers<[1], [0], [0], [1], [0, 0, 1, 1], [], []>} : vector<8x72xf32>, vector<72x512xf32>, vector<8x512xf32> -> vector<8x512xf32>
    %c0_57 = arith.constant 0 : index
    %c0_58 = arith.constant 0 : index
    %165 = vector.load %arg7[%c0_57, %c0_58] : memref<8x1xf32, #tpu.memory_space<vmem>>, vector<8x1xf32>
    %166 = vector.broadcast %165 : vector<8x1xf32> to vector<8x512xf32>
    %167 = arith.addf %164, %166 : vector<8x512xf32>
    %cst_59 = arith.constant 0.000000e+00 : f32
    %168 = vector.broadcast %cst_59 : f32 to vector<8x512xf32>
    %169 = arith.maximumf %167, %168 : vector<8x512xf32>
    %170 = vector.extract_strided_slice %169 {offsets = [0, 1], sizes = [8, 511], strides = [1, 1]} : vector<8x512xf32> to vector<8x511xf32>
    %171 = vector.extract_strided_slice %169 {offsets = [0, 0], sizes = [8, 1], strides = [1, 1]} : vector<8x512xf32> to vector<8x1xf32>
    %172 = tpu.concatenate %170, %171 in 1 : vector<8x511xf32>, vector<8x1xf32> -> vector<8x512xf32>
    %173 = arith.maximumf %169, %172 : vector<8x512xf32>
    %174 = vector.extract_strided_slice %173 {offsets = [0, 16], sizes = [8, 496], strides = [1, 1]} : vector<8x512xf32> to vector<8x496xf32>
    %175 = vector.extract_strided_slice %173 {offsets = [0, 0], sizes = [8, 16], strides = [1, 1]} : vector<8x512xf32> to vector<8x16xf32>
    %176 = tpu.concatenate %174, %175 in 1 : vector<8x496xf32>, vector<8x16xf32> -> vector<8x512xf32>
    %177 = arith.maximumf %173, %176 : vector<8x512xf32>
    %c0_60 = arith.constant 0 : index
    %c0_61 = arith.constant 0 : index
    %178 = vector.load %arg9[%c0_60, %c0_61] : memref<512x128xf32, #tpu.memory_space<vmem>>, vector<512x128xf32>
    %cst_62 = arith.constant dense<0.000000e+00> : vector<8x128xf32>
    %179 = tpu.matmul %177, %178, %cst_62 {dimension_numbers = #tpu.dot_dimension_numbers<[1], [0], [0], [1], [0, 0, 1, 1], [], []>} : vector<8x512xf32>, vector<512x128xf32>, vector<8x128xf32> -> vector<8x128xf32>
    %180 = vector.extract_strided_slice %179 {offsets = [0, 119], sizes = [8, 9], strides = [1, 1]} : vector<8x128xf32> to vector<8x9xf32>
    %181 = vector.extract_strided_slice %179 {offsets = [0, 0], sizes = [8, 119], strides = [1, 1]} : vector<8x128xf32> to vector<8x119xf32>
    %182 = tpu.concatenate %180, %181 in 1 : vector<8x9xf32>, vector<8x119xf32> -> vector<8x128xf32>
    %c0_63 = arith.constant 0 : index
    %c0_64 = arith.constant 0 : index
    %183 = vector.load %arg16[%c0_63, %c0_64] : memref<9x128xf32, #tpu.memory_space<vmem>>, vector<1x128xf32>
    %184 = vector.broadcast %183 : vector<1x128xf32> to vector<8x128xf32>
    %185 = arith.mulf %182, %184 : vector<8x128xf32>
    %186 = vector.extract_strided_slice %179 {offsets = [0, 120], sizes = [8, 8], strides = [1, 1]} : vector<8x128xf32> to vector<8x8xf32>
    %187 = vector.extract_strided_slice %179 {offsets = [0, 0], sizes = [8, 120], strides = [1, 1]} : vector<8x128xf32> to vector<8x120xf32>
    %188 = tpu.concatenate %186, %187 in 1 : vector<8x8xf32>, vector<8x120xf32> -> vector<8x128xf32>
    %c1_65 = arith.constant 1 : index
    %c0_66 = arith.constant 0 : index
    %189 = vector.load %arg16[%c1_65, %c0_66] : memref<9x128xf32, #tpu.memory_space<vmem>>, vector<1x128xf32>
    %190 = vector.broadcast %189 : vector<1x128xf32> to vector<8x128xf32>
    %191 = arith.mulf %188, %190 : vector<8x128xf32>
    %192 = vector.extract_strided_slice %179 {offsets = [0, 121], sizes = [8, 7], strides = [1, 1]} : vector<8x128xf32> to vector<8x7xf32>
    %193 = vector.extract_strided_slice %179 {offsets = [0, 0], sizes = [8, 121], strides = [1, 1]} : vector<8x128xf32> to vector<8x121xf32>
    %194 = tpu.concatenate %192, %193 in 1 : vector<8x7xf32>, vector<8x121xf32> -> vector<8x128xf32>
    %c2_67 = arith.constant 2 : index
    %c0_68 = arith.constant 0 : index
    %195 = vector.load %arg16[%c2_67, %c0_68] : memref<9x128xf32, #tpu.memory_space<vmem>>, vector<1x128xf32>
    %196 = vector.broadcast %195 : vector<1x128xf32> to vector<8x128xf32>
    %197 = arith.mulf %194, %196 : vector<8x128xf32>
    %198 = vector.extract_strided_slice %179 {offsets = [0, 127], sizes = [8, 1], strides = [1, 1]} : vector<8x128xf32> to vector<8x1xf32>
    %199 = vector.extract_strided_slice %179 {offsets = [0, 0], sizes = [8, 127], strides = [1, 1]} : vector<8x128xf32> to vector<8x127xf32>
    %200 = tpu.concatenate %198, %199 in 1 : vector<8x1xf32>, vector<8x127xf32> -> vector<8x128xf32>
    %c3_69 = arith.constant 3 : index
    %c0_70 = arith.constant 0 : index
    %201 = vector.load %arg16[%c3_69, %c0_70] : memref<9x128xf32, #tpu.memory_space<vmem>>, vector<1x128xf32>
    %202 = vector.broadcast %201 : vector<1x128xf32> to vector<8x128xf32>
    %203 = arith.mulf %200, %202 : vector<8x128xf32>
    %204 = vector.extract_strided_slice %179 {offsets = [0, 1], sizes = [8, 127], strides = [1, 1]} : vector<8x128xf32> to vector<8x127xf32>
    %205 = vector.extract_strided_slice %179 {offsets = [0, 0], sizes = [8, 1], strides = [1, 1]} : vector<8x128xf32> to vector<8x1xf32>
    %206 = tpu.concatenate %204, %205 in 1 : vector<8x127xf32>, vector<8x1xf32> -> vector<8x128xf32>
    %c5_71 = arith.constant 5 : index
    %c0_72 = arith.constant 0 : index
    %207 = vector.load %arg16[%c5_71, %c0_72] : memref<9x128xf32, #tpu.memory_space<vmem>>, vector<1x128xf32>
    %208 = vector.broadcast %207 : vector<1x128xf32> to vector<8x128xf32>
    %209 = arith.mulf %206, %208 : vector<8x128xf32>
    %210 = vector.extract_strided_slice %179 {offsets = [0, 7], sizes = [8, 121], strides = [1, 1]} : vector<8x128xf32> to vector<8x121xf32>
    %211 = vector.extract_strided_slice %179 {offsets = [0, 0], sizes = [8, 7], strides = [1, 1]} : vector<8x128xf32> to vector<8x7xf32>
    %212 = tpu.concatenate %210, %211 in 1 : vector<8x121xf32>, vector<8x7xf32> -> vector<8x128xf32>
    %c6_73 = arith.constant 6 : index
    %c0_74 = arith.constant 0 : index
    %213 = vector.load %arg16[%c6_73, %c0_74] : memref<9x128xf32, #tpu.memory_space<vmem>>, vector<1x128xf32>
    %214 = vector.broadcast %213 : vector<1x128xf32> to vector<8x128xf32>
    %215 = arith.mulf %212, %214 : vector<8x128xf32>
    %216 = vector.extract_strided_slice %179 {offsets = [0, 8], sizes = [8, 120], strides = [1, 1]} : vector<8x128xf32> to vector<8x120xf32>
    %217 = vector.extract_strided_slice %179 {offsets = [0, 0], sizes = [8, 8], strides = [1, 1]} : vector<8x128xf32> to vector<8x8xf32>
    %218 = tpu.concatenate %216, %217 in 1 : vector<8x120xf32>, vector<8x8xf32> -> vector<8x128xf32>
    %c7_75 = arith.constant 7 : index
    %c0_76 = arith.constant 0 : index
    %219 = vector.load %arg16[%c7_75, %c0_76] : memref<9x128xf32, #tpu.memory_space<vmem>>, vector<1x128xf32>
    %220 = vector.broadcast %219 : vector<1x128xf32> to vector<8x128xf32>
    %221 = arith.mulf %218, %220 : vector<8x128xf32>
    %222 = vector.extract_strided_slice %179 {offsets = [0, 9], sizes = [8, 119], strides = [1, 1]} : vector<8x128xf32> to vector<8x119xf32>
    %223 = vector.extract_strided_slice %179 {offsets = [0, 0], sizes = [8, 9], strides = [1, 1]} : vector<8x128xf32> to vector<8x9xf32>
    %224 = tpu.concatenate %222, %223 in 1 : vector<8x119xf32>, vector<8x9xf32> -> vector<8x128xf32>
    %c8_77 = arith.constant 8 : index
    %c0_78 = arith.constant 0 : index
    %225 = vector.load %arg16[%c8_77, %c0_78] : memref<9x128xf32, #tpu.memory_space<vmem>>, vector<1x128xf32>
    %226 = vector.broadcast %225 : vector<1x128xf32> to vector<8x128xf32>
    %227 = arith.mulf %224, %226 : vector<8x128xf32>
    %228 = tpu.concatenate %185, %191, %197, %203, %179, %209, %215, %221, %227 in 0 : vector<8x128xf32>, vector<8x128xf32>, vector<8x128xf32>, vector<8x128xf32>, vector<8x128xf32>, vector<8x128xf32>, vector<8x128xf32>, vector<8x128xf32>, vector<8x128xf32> -> vector<72x128xf32>
    %c0_79 = arith.constant 0 : index
    %c0_80 = arith.constant 0 : index
    %229 = vector.load %arg10[%c0_79, %c0_80] : memref<8x72xf32, #tpu.memory_space<vmem>>, vector<8x72xf32>
    %cst_81 = arith.constant dense<0.000000e+00> : vector<8x128xf32>
    %230 = tpu.matmul %229, %228, %cst_81 {dimension_numbers = #tpu.dot_dimension_numbers<[1], [0], [0], [1], [0, 0, 1, 1], [], []>} : vector<8x72xf32>, vector<72x128xf32>, vector<8x128xf32> -> vector<8x128xf32>
    %c0_82 = arith.constant 0 : index
    %c0_83 = arith.constant 0 : index
    %231 = vector.load %arg11[%c0_82, %c0_83] : memref<8x1xf32, #tpu.memory_space<vmem>>, vector<8x1xf32>
    %232 = vector.broadcast %231 : vector<8x1xf32> to vector<8x128xf32>
    %233 = arith.addf %230, %232 : vector<8x128xf32>
    %cst_84 = arith.constant 0.000000e+00 : f32
    %234 = vector.broadcast %cst_84 : f32 to vector<8x128xf32>
    %235 = arith.maximumf %233, %234 : vector<8x128xf32>
    %236 = vector.extract_strided_slice %235 {offsets = [0, 119], sizes = [8, 9], strides = [1, 1]} : vector<8x128xf32> to vector<8x9xf32>
    %237 = vector.extract_strided_slice %235 {offsets = [0, 0], sizes = [8, 119], strides = [1, 1]} : vector<8x128xf32> to vector<8x119xf32>
    %238 = tpu.concatenate %236, %237 in 1 : vector<8x9xf32>, vector<8x119xf32> -> vector<8x128xf32>
    %c0_85 = arith.constant 0 : index
    %c0_86 = arith.constant 0 : index
    %239 = vector.load %arg16[%c0_85, %c0_86] : memref<9x128xf32, #tpu.memory_space<vmem>>, vector<1x128xf32>
    %240 = vector.broadcast %239 : vector<1x128xf32> to vector<8x128xf32>
    %241 = arith.mulf %238, %240 : vector<8x128xf32>
    %242 = vector.extract_strided_slice %235 {offsets = [0, 120], sizes = [8, 8], strides = [1, 1]} : vector<8x128xf32> to vector<8x8xf32>
    %243 = vector.extract_strided_slice %235 {offsets = [0, 0], sizes = [8, 120], strides = [1, 1]} : vector<8x128xf32> to vector<8x120xf32>
    %244 = tpu.concatenate %242, %243 in 1 : vector<8x8xf32>, vector<8x120xf32> -> vector<8x128xf32>
    %c1_87 = arith.constant 1 : index
    %c0_88 = arith.constant 0 : index
    %245 = vector.load %arg16[%c1_87, %c0_88] : memref<9x128xf32, #tpu.memory_space<vmem>>, vector<1x128xf32>
    %246 = vector.broadcast %245 : vector<1x128xf32> to vector<8x128xf32>
    %247 = arith.mulf %244, %246 : vector<8x128xf32>
    %248 = vector.extract_strided_slice %235 {offsets = [0, 121], sizes = [8, 7], strides = [1, 1]} : vector<8x128xf32> to vector<8x7xf32>
    %249 = vector.extract_strided_slice %235 {offsets = [0, 0], sizes = [8, 121], strides = [1, 1]} : vector<8x128xf32> to vector<8x121xf32>
    %250 = tpu.concatenate %248, %249 in 1 : vector<8x7xf32>, vector<8x121xf32> -> vector<8x128xf32>
    %c2_89 = arith.constant 2 : index
    %c0_90 = arith.constant 0 : index
    %251 = vector.load %arg16[%c2_89, %c0_90] : memref<9x128xf32, #tpu.memory_space<vmem>>, vector<1x128xf32>
    %252 = vector.broadcast %251 : vector<1x128xf32> to vector<8x128xf32>
    %253 = arith.mulf %250, %252 : vector<8x128xf32>
    %254 = vector.extract_strided_slice %235 {offsets = [0, 127], sizes = [8, 1], strides = [1, 1]} : vector<8x128xf32> to vector<8x1xf32>
    %255 = vector.extract_strided_slice %235 {offsets = [0, 0], sizes = [8, 127], strides = [1, 1]} : vector<8x128xf32> to vector<8x127xf32>
    %256 = tpu.concatenate %254, %255 in 1 : vector<8x1xf32>, vector<8x127xf32> -> vector<8x128xf32>
    %c3_91 = arith.constant 3 : index
    %c0_92 = arith.constant 0 : index
    %257 = vector.load %arg16[%c3_91, %c0_92] : memref<9x128xf32, #tpu.memory_space<vmem>>, vector<1x128xf32>
    %258 = vector.broadcast %257 : vector<1x128xf32> to vector<8x128xf32>
    %259 = arith.mulf %256, %258 : vector<8x128xf32>
    %260 = vector.extract_strided_slice %235 {offsets = [0, 1], sizes = [8, 127], strides = [1, 1]} : vector<8x128xf32> to vector<8x127xf32>
    %261 = vector.extract_strided_slice %235 {offsets = [0, 0], sizes = [8, 1], strides = [1, 1]} : vector<8x128xf32> to vector<8x1xf32>
    %262 = tpu.concatenate %260, %261 in 1 : vector<8x127xf32>, vector<8x1xf32> -> vector<8x128xf32>
    %c5_93 = arith.constant 5 : index
    %c0_94 = arith.constant 0 : index
    %263 = vector.load %arg16[%c5_93, %c0_94] : memref<9x128xf32, #tpu.memory_space<vmem>>, vector<1x128xf32>
    %264 = vector.broadcast %263 : vector<1x128xf32> to vector<8x128xf32>
    %265 = arith.mulf %262, %264 : vector<8x128xf32>
    %266 = vector.extract_strided_slice %235 {offsets = [0, 7], sizes = [8, 121], strides = [1, 1]} : vector<8x128xf32> to vector<8x121xf32>
    %267 = vector.extract_strided_slice %235 {offsets = [0, 0], sizes = [8, 7], strides = [1, 1]} : vector<8x128xf32> to vector<8x7xf32>
    %268 = tpu.concatenate %266, %267 in 1 : vector<8x121xf32>, vector<8x7xf32> -> vector<8x128xf32>
    %c6_95 = arith.constant 6 : index
    %c0_96 = arith.constant 0 : index
    %269 = vector.load %arg16[%c6_95, %c0_96] : memref<9x128xf32, #tpu.memory_space<vmem>>, vector<1x128xf32>
    %270 = vector.broadcast %269 : vector<1x128xf32> to vector<8x128xf32>
    %271 = arith.mulf %268, %270 : vector<8x128xf32>
    %272 = vector.extract_strided_slice %235 {offsets = [0, 8], sizes = [8, 120], strides = [1, 1]} : vector<8x128xf32> to vector<8x120xf32>
    %273 = vector.extract_strided_slice %235 {offsets = [0, 0], sizes = [8, 8], strides = [1, 1]} : vector<8x128xf32> to vector<8x8xf32>
    %274 = tpu.concatenate %272, %273 in 1 : vector<8x120xf32>, vector<8x8xf32> -> vector<8x128xf32>
    %c7_97 = arith.constant 7 : index
    %c0_98 = arith.constant 0 : index
    %275 = vector.load %arg16[%c7_97, %c0_98] : memref<9x128xf32, #tpu.memory_space<vmem>>, vector<1x128xf32>
    %276 = vector.broadcast %275 : vector<1x128xf32> to vector<8x128xf32>
    %277 = arith.mulf %274, %276 : vector<8x128xf32>
    %278 = vector.extract_strided_slice %235 {offsets = [0, 9], sizes = [8, 119], strides = [1, 1]} : vector<8x128xf32> to vector<8x119xf32>
    %279 = vector.extract_strided_slice %235 {offsets = [0, 0], sizes = [8, 9], strides = [1, 1]} : vector<8x128xf32> to vector<8x9xf32>
    %280 = tpu.concatenate %278, %279 in 1 : vector<8x119xf32>, vector<8x9xf32> -> vector<8x128xf32>
    %c8_99 = arith.constant 8 : index
    %c0_100 = arith.constant 0 : index
    %281 = vector.load %arg16[%c8_99, %c0_100] : memref<9x128xf32, #tpu.memory_space<vmem>>, vector<1x128xf32>
    %282 = vector.broadcast %281 : vector<1x128xf32> to vector<8x128xf32>
    %283 = arith.mulf %280, %282 : vector<8x128xf32>
    %284 = tpu.concatenate %241, %247, %253, %259, %235, %265, %271, %277, %283 in 0 : vector<8x128xf32>, vector<8x128xf32>, vector<8x128xf32>, vector<8x128xf32>, vector<8x128xf32>, vector<8x128xf32>, vector<8x128xf32>, vector<8x128xf32>, vector<8x128xf32> -> vector<72x128xf32>
    %c0_101 = arith.constant 0 : index
    %c0_102 = arith.constant 0 : index
    %285 = vector.load %arg12[%c0_101, %c0_102] : memref<8x72xf32, #tpu.memory_space<vmem>>, vector<8x72xf32>
    %cst_103 = arith.constant dense<0.000000e+00> : vector<8x128xf32>
    %286 = tpu.matmul %285, %284, %cst_103 {dimension_numbers = #tpu.dot_dimension_numbers<[1], [0], [0], [1], [0, 0, 1, 1], [], []>} : vector<8x72xf32>, vector<72x128xf32>, vector<8x128xf32> -> vector<8x128xf32>
    %c0_104 = arith.constant 0 : index
    %c0_105 = arith.constant 0 : index
    %287 = vector.load %arg13[%c0_104, %c0_105] : memref<8x1xf32, #tpu.memory_space<vmem>>, vector<8x1xf32>
    %288 = vector.broadcast %287 : vector<8x1xf32> to vector<8x128xf32>
    %289 = arith.addf %286, %288 : vector<8x128xf32>
    %cst_106 = arith.constant 0.000000e+00 : f32
    %290 = vector.broadcast %cst_106 : f32 to vector<8x128xf32>
    %291 = arith.maximumf %289, %290 : vector<8x128xf32>
    %292 = vector.extract_strided_slice %291 {offsets = [0, 119], sizes = [8, 9], strides = [1, 1]} : vector<8x128xf32> to vector<8x9xf32>
    %293 = vector.extract_strided_slice %291 {offsets = [0, 0], sizes = [8, 119], strides = [1, 1]} : vector<8x128xf32> to vector<8x119xf32>
    %294 = tpu.concatenate %292, %293 in 1 : vector<8x9xf32>, vector<8x119xf32> -> vector<8x128xf32>
    %c0_107 = arith.constant 0 : index
    %c0_108 = arith.constant 0 : index
    %295 = vector.load %arg16[%c0_107, %c0_108] : memref<9x128xf32, #tpu.memory_space<vmem>>, vector<1x128xf32>
    %296 = vector.broadcast %295 : vector<1x128xf32> to vector<8x128xf32>
    %297 = arith.mulf %294, %296 : vector<8x128xf32>
    %298 = vector.extract_strided_slice %291 {offsets = [0, 120], sizes = [8, 8], strides = [1, 1]} : vector<8x128xf32> to vector<8x8xf32>
    %299 = vector.extract_strided_slice %291 {offsets = [0, 0], sizes = [8, 120], strides = [1, 1]} : vector<8x128xf32> to vector<8x120xf32>
    %300 = tpu.concatenate %298, %299 in 1 : vector<8x8xf32>, vector<8x120xf32> -> vector<8x128xf32>
    %c1_109 = arith.constant 1 : index
    %c0_110 = arith.constant 0 : index
    %301 = vector.load %arg16[%c1_109, %c0_110] : memref<9x128xf32, #tpu.memory_space<vmem>>, vector<1x128xf32>
    %302 = vector.broadcast %301 : vector<1x128xf32> to vector<8x128xf32>
    %303 = arith.mulf %300, %302 : vector<8x128xf32>
    %304 = vector.extract_strided_slice %291 {offsets = [0, 121], sizes = [8, 7], strides = [1, 1]} : vector<8x128xf32> to vector<8x7xf32>
    %305 = vector.extract_strided_slice %291 {offsets = [0, 0], sizes = [8, 121], strides = [1, 1]} : vector<8x128xf32> to vector<8x121xf32>
    %306 = tpu.concatenate %304, %305 in 1 : vector<8x7xf32>, vector<8x121xf32> -> vector<8x128xf32>
    %c2_111 = arith.constant 2 : index
    %c0_112 = arith.constant 0 : index
    %307 = vector.load %arg16[%c2_111, %c0_112] : memref<9x128xf32, #tpu.memory_space<vmem>>, vector<1x128xf32>
    %308 = vector.broadcast %307 : vector<1x128xf32> to vector<8x128xf32>
    %309 = arith.mulf %306, %308 : vector<8x128xf32>
    %310 = vector.extract_strided_slice %291 {offsets = [0, 127], sizes = [8, 1], strides = [1, 1]} : vector<8x128xf32> to vector<8x1xf32>
    %311 = vector.extract_strided_slice %291 {offsets = [0, 0], sizes = [8, 127], strides = [1, 1]} : vector<8x128xf32> to vector<8x127xf32>
    %312 = tpu.concatenate %310, %311 in 1 : vector<8x1xf32>, vector<8x127xf32> -> vector<8x128xf32>
    %c3_113 = arith.constant 3 : index
    %c0_114 = arith.constant 0 : index
    %313 = vector.load %arg16[%c3_113, %c0_114] : memref<9x128xf32, #tpu.memory_space<vmem>>, vector<1x128xf32>
    %314 = vector.broadcast %313 : vector<1x128xf32> to vector<8x128xf32>
    %315 = arith.mulf %312, %314 : vector<8x128xf32>
    %316 = vector.extract_strided_slice %291 {offsets = [0, 1], sizes = [8, 127], strides = [1, 1]} : vector<8x128xf32> to vector<8x127xf32>
    %317 = vector.extract_strided_slice %291 {offsets = [0, 0], sizes = [8, 1], strides = [1, 1]} : vector<8x128xf32> to vector<8x1xf32>
    %318 = tpu.concatenate %316, %317 in 1 : vector<8x127xf32>, vector<8x1xf32> -> vector<8x128xf32>
    %c5_115 = arith.constant 5 : index
    %c0_116 = arith.constant 0 : index
    %319 = vector.load %arg16[%c5_115, %c0_116] : memref<9x128xf32, #tpu.memory_space<vmem>>, vector<1x128xf32>
    %320 = vector.broadcast %319 : vector<1x128xf32> to vector<8x128xf32>
    %321 = arith.mulf %318, %320 : vector<8x128xf32>
    %322 = vector.extract_strided_slice %291 {offsets = [0, 7], sizes = [8, 121], strides = [1, 1]} : vector<8x128xf32> to vector<8x121xf32>
    %323 = vector.extract_strided_slice %291 {offsets = [0, 0], sizes = [8, 7], strides = [1, 1]} : vector<8x128xf32> to vector<8x7xf32>
    %324 = tpu.concatenate %322, %323 in 1 : vector<8x121xf32>, vector<8x7xf32> -> vector<8x128xf32>
    %c6_117 = arith.constant 6 : index
    %c0_118 = arith.constant 0 : index
    %325 = vector.load %arg16[%c6_117, %c0_118] : memref<9x128xf32, #tpu.memory_space<vmem>>, vector<1x128xf32>
    %326 = vector.broadcast %325 : vector<1x128xf32> to vector<8x128xf32>
    %327 = arith.mulf %324, %326 : vector<8x128xf32>
    %328 = vector.extract_strided_slice %291 {offsets = [0, 8], sizes = [8, 120], strides = [1, 1]} : vector<8x128xf32> to vector<8x120xf32>
    %329 = vector.extract_strided_slice %291 {offsets = [0, 0], sizes = [8, 8], strides = [1, 1]} : vector<8x128xf32> to vector<8x8xf32>
    %330 = tpu.concatenate %328, %329 in 1 : vector<8x120xf32>, vector<8x8xf32> -> vector<8x128xf32>
    %c7_119 = arith.constant 7 : index
    %c0_120 = arith.constant 0 : index
    %331 = vector.load %arg16[%c7_119, %c0_120] : memref<9x128xf32, #tpu.memory_space<vmem>>, vector<1x128xf32>
    %332 = vector.broadcast %331 : vector<1x128xf32> to vector<8x128xf32>
    %333 = arith.mulf %330, %332 : vector<8x128xf32>
    %334 = vector.extract_strided_slice %291 {offsets = [0, 9], sizes = [8, 119], strides = [1, 1]} : vector<8x128xf32> to vector<8x119xf32>
    %335 = vector.extract_strided_slice %291 {offsets = [0, 0], sizes = [8, 9], strides = [1, 1]} : vector<8x128xf32> to vector<8x9xf32>
    %336 = tpu.concatenate %334, %335 in 1 : vector<8x119xf32>, vector<8x9xf32> -> vector<8x128xf32>
    %c8_121 = arith.constant 8 : index
    %c0_122 = arith.constant 0 : index
    %337 = vector.load %arg16[%c8_121, %c0_122] : memref<9x128xf32, #tpu.memory_space<vmem>>, vector<1x128xf32>
    %338 = vector.broadcast %337 : vector<1x128xf32> to vector<8x128xf32>
    %339 = arith.mulf %336, %338 : vector<8x128xf32>
    %340 = tpu.concatenate %297, %303, %309, %315, %291, %321, %327, %333, %339 in 0 : vector<8x128xf32>, vector<8x128xf32>, vector<8x128xf32>, vector<8x128xf32>, vector<8x128xf32>, vector<8x128xf32>, vector<8x128xf32>, vector<8x128xf32>, vector<8x128xf32> -> vector<72x128xf32>
    %c0_123 = arith.constant 0 : index
    %c0_124 = arith.constant 0 : index
    %341 = vector.load %arg14[%c0_123, %c0_124] : memref<8x72xf32, #tpu.memory_space<vmem>>, vector<8x72xf32>
    %cst_125 = arith.constant dense<0.000000e+00> : vector<8x128xf32>
    %342 = tpu.matmul %341, %340, %cst_125 {dimension_numbers = #tpu.dot_dimension_numbers<[1], [0], [0], [1], [0, 0, 1, 1], [], []>} : vector<8x72xf32>, vector<72x128xf32>, vector<8x128xf32> -> vector<8x128xf32>
    %c0_126 = arith.constant 0 : index
    %c0_127 = arith.constant 0 : index
    %343 = vector.load %arg15[%c0_126, %c0_127] : memref<8x1xf32, #tpu.memory_space<vmem>>, vector<8x1xf32>
    %344 = vector.broadcast %343 : vector<8x1xf32> to vector<8x128xf32>
    %345 = arith.addf %342, %344 : vector<8x128xf32>
    %cst_128 = arith.constant 0.000000e+00 : f32
    %346 = vector.broadcast %cst_128 : f32 to vector<8x128xf32>
    %347 = arith.maximumf %345, %346 : vector<8x128xf32>
    %348 = vector.extract_strided_slice %347 {offsets = [0, 1], sizes = [8, 127], strides = [1, 1]} : vector<8x128xf32> to vector<8x127xf32>
    %349 = vector.extract_strided_slice %347 {offsets = [0, 0], sizes = [8, 1], strides = [1, 1]} : vector<8x128xf32> to vector<8x1xf32>
    %350 = tpu.concatenate %348, %349 in 1 : vector<8x127xf32>, vector<8x1xf32> -> vector<8x128xf32>
    %351 = arith.maximumf %347, %350 : vector<8x128xf32>
    %352 = vector.extract_strided_slice %351 {offsets = [0, 8], sizes = [8, 120], strides = [1, 1]} : vector<8x128xf32> to vector<8x120xf32>
    %353 = vector.extract_strided_slice %351 {offsets = [0, 0], sizes = [8, 8], strides = [1, 1]} : vector<8x128xf32> to vector<8x8xf32>
    %354 = tpu.concatenate %352, %353 in 1 : vector<8x120xf32>, vector<8x8xf32> -> vector<8x128xf32>
    %355 = arith.maximumf %351, %354 : vector<8x128xf32>
    %c0_129 = arith.constant 0 : index
    %c0_130 = arith.constant 0 : index
    %356 = vector.load %arg17[%c0_129, %c0_130] : memref<128x32xf32, #tpu.memory_space<vmem>>, vector<128x32xf32>
    %cst_131 = arith.constant dense<0.000000e+00> : vector<8x32xf32>
    %357 = tpu.matmul %355, %356, %cst_131 {dimension_numbers = #tpu.dot_dimension_numbers<[1], [0], [0], [1], [0, 0, 1, 1], [], []>} : vector<8x128xf32>, vector<128x32xf32>, vector<8x32xf32> -> vector<8x32xf32>
    %c0_132 = arith.constant 0 : index
    %c0_133 = arith.constant 0 : index
    %358 = vector.load %arg18[%c0_132, %c0_133] : memref<128x8xf32, #tpu.memory_space<vmem>>, vector<128x8xf32>
    %cst_134 = arith.constant dense<0.000000e+00> : vector<128x32xf32>
    %359 = tpu.matmul %358, %357, %cst_134 {dimension_numbers = #tpu.dot_dimension_numbers<[1], [0], [0], [1], [0, 0, 1, 1], [], []>} : vector<128x8xf32>, vector<8x32xf32>, vector<128x32xf32> -> vector<128x32xf32>
    %c0_135 = arith.constant 0 : index
    %c0_136 = arith.constant 0 : index
    %360 = vector.load %arg19[%c0_135, %c0_136] : memref<128x32xf32, #tpu.memory_space<vmem>>, vector<128x32xf32>
    %361 = arith.mulf %359, %360 : vector<128x32xf32>
    %c0_137 = arith.constant 0 : index
    %c0_138 = arith.constant 0 : index
    %362 = vector.load %arg20[%c0_137, %c0_138] : memref<32x2xf32, #tpu.memory_space<vmem>>, vector<32x2xf32>
    %cst_139 = arith.constant dense<0.000000e+00> : vector<128x2xf32>
    %363 = tpu.matmul %361, %362, %cst_139 {dimension_numbers = #tpu.dot_dimension_numbers<[1], [0], [0], [1], [0, 0, 1, 1], [], []>} : vector<128x32xf32>, vector<32x2xf32>, vector<128x2xf32> -> vector<128x2xf32>
    %c0_140 = arith.constant 0 : index
    %c0_141 = arith.constant 0 : index
    %364 = vector.load %arg21[%c0_140, %c0_141] : memref<32x128xf32, #tpu.memory_space<vmem>>, vector<32x128xf32>
    %cst_142 = arith.constant dense<0.000000e+00> : vector<32x2xf32>
    %365 = tpu.matmul %364, %363, %cst_142 {dimension_numbers = #tpu.dot_dimension_numbers<[1], [0], [0], [1], [0, 0, 1, 1], [], []>} : vector<32x128xf32>, vector<128x2xf32>, vector<32x2xf32> -> vector<32x2xf32>
    %c0_143 = arith.constant 0 : index
    %c0_144 = arith.constant 0 : index
    %366 = vector.load %arg22[%c0_143, %c0_144] : memref<32x1xf32, #tpu.memory_space<vmem>>, vector<32x1xf32>
    %367 = vector.broadcast %366 : vector<32x1xf32> to vector<32x2xf32>
    %368 = arith.addf %365, %367 : vector<32x2xf32>
    %c0_145 = arith.constant 0 : index
    %c0_146 = arith.constant 0 : index
    %c0_147 = arith.constant 0 : index
    %369 = vector.load %arg23[%c0_145, %c0_146, %c0_147] : memref<1x32x2xf32, #tpu.memory_space<vmem>>, vector<1x32x2xf32>
    %370 = vector.shape_cast %369 : vector<1x32x2xf32> to vector<32x2xf32>
    %371 = vector.shape_cast %368 : vector<32x2xf32> to vector<1x32x2xf32>
    tpu.vector_store %arg23[%c0_145, %c0_146, %c0_147], %371 {strides = array<i32>} : memref<1x32x2xf32, #tpu.memory_space<vmem>>, vector<1x32x2xf32>,
    return
  }
  func.func @transform_0(%arg0: i32) -> (i32, i32, i32) {
    %c0_i32 = arith.constant 0 : i32
    %c0_i32_0 = arith.constant 0 : i32
    %c0_i32_1 = arith.constant 0 : i32
    return %arg0, %c0_i32, %c0_i32_0 : i32, i32, i32
  }
  func.func @transform_1(%arg0: i32) -> (i32, i32) {
    %c0_i32 = arith.constant 0 : i32
    %c0_i32_0 = arith.constant 0 : i32
    %c0_i32_1 = arith.constant 0 : i32
    return %c0_i32, %c0_i32_0 : i32, i32
  }
  func.func @transform_2(%arg0: i32) -> (i32, i32) {
    %c0_i32 = arith.constant 0 : i32
    %c0_i32_0 = arith.constant 0 : i32
    %c0_i32_1 = arith.constant 0 : i32
    return %c0_i32, %c0_i32_0 : i32, i32
  }
  func.func @transform_3(%arg0: i32) -> (i32, i32) {
    %c0_i32 = arith.constant 0 : i32
    %c0_i32_0 = arith.constant 0 : i32
    %c0_i32_1 = arith.constant 0 : i32
    return %c0_i32, %c0_i32_0 : i32, i32
  }
  func.func @transform_4(%arg0: i32) -> (i32, i32) {
    %c0_i32 = arith.constant 0 : i32
    %c0_i32_0 = arith.constant 0 : i32
    %c0_i32_1 = arith.constant 0 : i32
    return %c0_i32, %c0_i32_0 : i32, i32
  }
  func.func @transform_5(%arg0: i32) -> (i32, i32) {
    %c0_i32 = arith.constant 0 : i32
    %c0_i32_0 = arith.constant 0 : i32
    %c0_i32_1 = arith.constant 0 : i32
    return %c0_i32, %c0_i32_0 : i32, i32
  }
  func.func @transform_6(%arg0: i32) -> (i32, i32) {
    %c0_i32 = arith.constant 0 : i32
    %c0_i32_0 = arith.constant 0 : i32
    %c0_i32_1 = arith.constant 0 : i32
    return %c0_i32, %c0_i32_0 : i32, i32
  }
  func.func @transform_7(%arg0: i32) -> (i32, i32) {
    %c0_i32 = arith.constant 0 : i32
    %c0_i32_0 = arith.constant 0 : i32
    %c0_i32_1 = arith.constant 0 : i32
    return %c0_i32, %c0_i32_0 : i32, i32
  }
  func.func @transform_8(%arg0: i32) -> (i32, i32) {
    %c0_i32 = arith.constant 0 : i32
    %c0_i32_0 = arith.constant 0 : i32
    %c0_i32_1 = arith.constant 0 : i32
    return %c0_i32, %c0_i32_0 : i32, i32
  }
  func.func @transform_9(%arg0: i32) -> (i32, i32) {
    %c0_i32 = arith.constant 0 : i32
    %c0_i32_0 = arith.constant 0 : i32
    %c0_i32_1 = arith.constant 0 : i32
    return %c0_i32, %c0_i32_0 : i32, i32
  }
  func.func @transform_10(%arg0: i32) -> (i32, i32) {
    %c0_i32 = arith.constant 0 : i32
    %c0_i32_0 = arith.constant 0 : i32
    %c0_i32_1 = arith.constant 0 : i32
    return %c0_i32, %c0_i32_0 : i32, i32
  }
  func.func @transform_11(%arg0: i32) -> (i32, i32) {
    %c0_i32 = arith.constant 0 : i32
    %c0_i32_0 = arith.constant 0 : i32
    %c0_i32_1 = arith.constant 0 : i32
    return %c0_i32, %c0_i32_0 : i32, i32
  }
  func.func @transform_12(%arg0: i32) -> (i32, i32) {
    %c0_i32 = arith.constant 0 : i32
    %c0_i32_0 = arith.constant 0 : i32
    %c0_i32_1 = arith.constant 0 : i32
    return %c0_i32, %c0_i32_0 : i32, i32
  }
  func.func @transform_13(%arg0: i32) -> (i32, i32) {
    %c0_i32 = arith.constant 0 : i32
    %c0_i32_0 = arith.constant 0 : i32
    %c0_i32_1 = arith.constant 0 : i32
    return %c0_i32, %c0_i32_0 : i32, i32
  }
  func.func @transform_14(%arg0: i32) -> (i32, i32) {
    %c0_i32 = arith.constant 0 : i32
    %c0_i32_0 = arith.constant 0 : i32
    %c0_i32_1 = arith.constant 0 : i32
    return %c0_i32, %c0_i32_0 : i32, i32
  }
  func.func @transform_15(%arg0: i32) -> (i32, i32) {
    %c0_i32 = arith.constant 0 : i32
    %c0_i32_0 = arith.constant 0 : i32
    %c0_i32_1 = arith.constant 0 : i32
    return %c0_i32, %c0_i32_0 : i32, i32
  }
  func.func @transform_16(%arg0: i32) -> (i32, i32) {
    %c0_i32 = arith.constant 0 : i32
    %c0_i32_0 = arith.constant 0 : i32
    %c0_i32_1 = arith.constant 0 : i32
    return %c0_i32, %c0_i32_0 : i32, i32
  }
  func.func @transform_17(%arg0: i32) -> (i32, i32) {
    %c0_i32 = arith.constant 0 : i32
    %c0_i32_0 = arith.constant 0 : i32
    %c0_i32_1 = arith.constant 0 : i32
    return %c0_i32, %c0_i32_0 : i32, i32
  }
  func.func @transform_18(%arg0: i32) -> (i32, i32) {
    %c0_i32 = arith.constant 0 : i32
    %c0_i32_0 = arith.constant 0 : i32
    %c0_i32_1 = arith.constant 0 : i32
    return %c0_i32, %c0_i32_0 : i32, i32
  }
  func.func @transform_19(%arg0: i32) -> (i32, i32) {
    %c0_i32 = arith.constant 0 : i32
    %c0_i32_0 = arith.constant 0 : i32
    %c0_i32_1 = arith.constant 0 : i32
    return %c0_i32, %c0_i32_0 : i32, i32
  }
  func.func @transform_20(%arg0: i32) -> (i32, i32) {
    %c0_i32 = arith.constant 0 : i32
    %c0_i32_0 = arith.constant 0 : i32
    %c0_i32_1 = arith.constant 0 : i32
    return %c0_i32, %c0_i32_0 : i32, i32
  }
  func.func @transform_21(%arg0: i32) -> (i32, i32) {
    %c0_i32 = arith.constant 0 : i32
    %c0_i32_0 = arith.constant 0 : i32
    %c0_i32_1 = arith.constant 0 : i32
    return %c0_i32, %c0_i32_0 : i32, i32
  }
  func.func @transform_22(%arg0: i32) -> (i32, i32, i32) {
    %c0_i32 = arith.constant 0 : i32
    %c0_i32_0 = arith.constant 0 : i32
    %c0_i32_1 = arith.constant 0 : i32
    return %arg0, %c0_i32, %c0_i32_0 : i32, i32, i32
  }
}

</mosaic_0001>

<llo_original>
// kernel: tpu_custom_call.1
$region0: #{tpu_custom_call.1}
  #allocation0 [shape = 'u32[]', space=smem, size = 0x4, offset = 0x4, fixed_abs, tag = 'smem constant byte address 0x4 - core index']
  #allocation1 [shape = 'u32[144,128]{1,0:T(1,128)}', space=vmem, size = 0x12000, scoped, tag = 'internal scratch']
  %s0 = inlined_call_operand.hbm [shape: f32[1,8,512], index: 0, kind: input, shape index: {}]
  %s1 = inlined_call_operand.hbm [shape: f32[8,72], index: 1, kind: input, shape index: {}]
  %s2 = inlined_call_operand.vmem [shape: f32[8,1], index: 2, kind: input, shape index: {}]
  %s3 = inlined_call_operand.hbm [shape: f32[8,72], index: 3, kind: input, shape index: {}]
  %s4 = inlined_call_operand.vmem [shape: f32[8,1], index: 4, kind: input, shape index: {}]
  %s5 = inlined_call_operand.hbm [shape: f32[8,72], index: 5, kind: input, shape index: {}]
  %s6 = inlined_call_operand.vmem [shape: f32[8,1], index: 6, kind: input, shape index: {}]
  %s7 = inlined_call_operand.vmem [shape: f32[9,512], index: 7, kind: input, shape index: {}]
  %s8 = inlined_call_operand.vmem [shape: f32[512,128], index: 8, kind: input, shape index: {}]
  %s9 = inlined_call_operand.hbm [shape: f32[8,72], index: 9, kind: input, shape index: {}]
  %s10 = inlined_call_operand.vmem [shape: f32[8,1], index: 10, kind: input, shape index: {}]
  %s11 = inlined_call_operand.hbm [shape: f32[8,72], index: 11, kind: input, shape index: {}]
  %s12 = inlined_call_operand.vmem [shape: f32[8,1], index: 12, kind: input, shape index: {}]
  %s13 = inlined_call_operand.hbm [shape: f32[8,72], index: 13, kind: input, shape index: {}]
  %s14 = inlined_call_operand.vmem [shape: f32[8,1], index: 14, kind: input, shape index: {}]
  %s15 = inlined_call_operand.hbm [shape: f32[9,128], index: 15, kind: input, shape index: {}]
  %s16 = inlined_call_operand.vmem [shape: f32[128,32], index: 16, kind: input, shape index: {}]
  %s17 = inlined_call_operand.vmem [shape: f32[128,8], index: 17, kind: input, shape index: {}]
  %s18 = inlined_call_operand.vmem [shape: f32[128,32], index: 18, kind: input, shape index: {}]
  %s19 = inlined_call_operand.vmem [shape: f32[32,2], index: 19, kind: input, shape index: {}]
  %s20 = inlined_call_operand.hbm [shape: f32[32,128], index: 20, kind: input, shape index: {}]
  %s21 = inlined_call_operand.vmem [shape: f32[32,1], index: 21, kind: input, shape index: {}]
  %s22 = inlined_call_operand.vmem [shape: f32[1,32,2], index: 22, kind: output, shape index: {}]
  %s23 = sld [smem:[#allocation0]]
  $region134: #{tpu_custom_call.1} parent=0
    _
  %s25 = ssub.s32 1, %s23
  %s26 = scalar_select 0, %s25, %s23
  $region1: #{tpu_custom_call.1} parent=0
    #allocation2 [shape = 'u8[16384]{0}', space=vmem, size = 0x4000, scoped, tag = 'input window, operand 0, single buffered']
    #allocation3 [shape = 's32[1]{0}', space=sflag, size = 0x4, scoped, tag = 'scoped memory for tpu_custom_call.1']
    #allocation4 [shape = 'u8[4096]{0}', space=vmem, size = 0x1000, scoped, tag = 'input window, operand 1, single buffered']
    #allocation5 [shape = 's32[1]{0}', space=sflag, size = 0x4, scoped, tag = 'scoped memory for tpu_custom_call.1']
    #allocation6 [shape = 'u8[4096]{0}', space=vmem, size = 0x1000, scoped, tag = 'input window, operand 3, single buffered']
    #allocation7 [shape = 'u8[4096]{0}', space=vmem, size = 0x1000, scoped, tag = 'input window, operand 5, single buffered']
    #allocation8 [shape = 's32[1]{0}', space=sflag, size = 0x4, scoped, tag = 'scoped memory for tpu_custom_call.1']
    #allocation9 [shape = 'u8[4096]{0}', space=vmem, size = 0x1000, scoped, tag = 'input window, operand 9, single buffered']
    #allocation10 [shape = 'u8[4096]{0}', space=vmem, size = 0x1000, scoped, tag = 'input window, operand 11, single buffered']
    #allocation11 [shape = 's32[1]{0}', space=sflag, size = 0x4, scoped, tag = 'scoped memory for tpu_custom_call.1']
    #allocation12 [shape = 'u8[4096]{0}', space=vmem, size = 0x1000, scoped, tag = 'input window, operand 13, single buffered']
    #allocation13 [shape = 'u8[8192]{0}', space=vmem, size = 0x2000, scoped, tag = 'input window, operand 15, single buffered']
    #allocation14 [shape = 's32[1]{0}', space=sflag, size = 0x4, scoped, tag = 'scoped memory for tpu_custom_call.1']
    #allocation15 [shape = 'u8[16384]{0}', space=vmem, size = 0x4000, scoped, tag = 'input window, operand 20, single buffered']
    %27 = vsyncpa [#allocation3], 0
    %28 = vsyncpa [#allocation5], 0
    %29 = vsyncpa [#allocation8], 0
    %30 = vsyncpa [#allocation11], 0
    %31 = vsyncpa [#allocation14], 0
    // Predicated region
    $region2: #{tpu_custom_call.1} parent=1 // pred_check
      _
    $region3: #{tpu_custom_call.1} parent=1 // pred_check_branch
      %33 = sbr.rel (0) target = $region5
    $region4: #{tpu_custom_call.1} parent=1 // pred_region
      %s35 = ssub.s32 512, 512
      %36 = vsyncadd [#allocation3], %s35
      %s38 = sshll.u32 [#allocation2], 4
      %s39 = int_to_ptr.vmem [resolvable:$true] %s38
      %41 = dma.hbm_to_vmem [thread:$0]  %s0, 512, %s39, [#allocation3]
    $region5: #{tpu_custom_call.1} parent=1 // pred_fallthru
      _
    // Predicated region
    $region6: #{tpu_custom_call.1} parent=1 // pred_check
      _
    $region7: #{tpu_custom_call.1} parent=1 // pred_check_branch
      %43 = sbr.rel (0) target = $region9
    $region8: #{tpu_custom_call.1} parent=1 // pred_region
      %s45 = ssub.s32 128, 128
      %46 = vsyncadd [#allocation5], %s45
      %s48 = sshll.u32 [#allocation4], 4
      %s49 = int_to_ptr.vmem [resolvable:$true] %s48
      %51 = dma.hbm_to_vmem [thread:$0]  %s1, 128, %s49, [#allocation5]
    $region9: #{tpu_custom_call.1} parent=1 // pred_fallthru
      _
    // Predicated region
    $region10: #{tpu_custom_call.1} parent=1 // pred_check
      _
    $region11: #{tpu_custom_call.1} parent=1 // pred_check_branch
      %53 = sbr.rel (0) target = $region13
    $region12: #{tpu_custom_call.1} parent=1 // pred_region
      _
    $region13: #{tpu_custom_call.1} parent=1 // pred_fallthru
      _
    // Predicated region
    $region14: #{tpu_custom_call.1} parent=1 // pred_check
      _
    $region15: #{tpu_custom_call.1} parent=1 // pred_check_branch
      %55 = sbr.rel (0) target = $region17
    $region16: #{tpu_custom_call.1} parent=1 // pred_region
      %s57 = ssub.s32 128, 128
      %58 = vsyncadd [#allocation5], %s57
      %s60 = sshll.u32 [#allocation6], 4
      %s61 = int_to_ptr.vmem [resolvable:$true] %s60
      %63 = dma.hbm_to_vmem [thread:$0]  %s3, 128, %s61, [#allocation5]
    $region17: #{tpu_custom_call.1} parent=1 // pred_fallthru
      _
    // Predicated region
    $region18: #{tpu_custom_call.1} parent=1 // pred_check
      _
    $region19: #{tpu_custom_call.1} parent=1 // pred_check_branch
      %65 = sbr.rel (0) target = $region21
    $region20: #{tpu_custom_call.1} parent=1 // pred_region
      _
    $region21: #{tpu_custom_call.1} parent=1 // pred_fallthru
      _
    // Predicated region
    $region22: #{tpu_custom_call.1} parent=1 // pred_check
      _
    $region23: #{tpu_custom_call.1} parent=1 // pred_check_branch
      %67 = sbr.rel (0) target = $region25
    $region24: #{tpu_custom_call.1} parent=1 // pred_region
      %s69 = ssub.s32 128, 128
      %70 = vsyncadd [#allocation8], %s69
      %s72 = sshll.u32 [#allocation7], 4
      %s73 = int_to_ptr.vmem [resolvable:$true] %s72
      %75 = dma.hbm_to_vmem [thread:$0]  %s5, 128, %s73, [#allocation8]
    $region25: #{tpu_custom_call.1} parent=1 // pred_fallthru
      _
    // Predicated region
    $region26: #{tpu_custom_call.1} parent=1 // pred_check
      _
    $region27: #{tpu_custom_call.1} parent=1 // pred_check_branch
      %77 = sbr.rel (0) target = $region29
    $region28: #{tpu_custom_call.1} parent=1 // pred_region
      _
    $region29: #{tpu_custom_call.1} parent=1 // pred_fallthru
      _
    // Predicated region
    $region30: #{tpu_custom_call.1} parent=1 // pred_check
      _
    $region31: #{tpu_custom_call.1} parent=1 // pred_check_branch
      %79 = sbr.rel (0) target = $region33
    $region32: #{tpu_custom_call.1} parent=1 // pred_region
      _
    $region33: #{tpu_custom_call.1} parent=1 // pred_fallthru
      _
    // Predicated region
    $region34: #{tpu_custom_call.1} parent=1 // pred_check
      _
    $region35: #{tpu_custom_call.1} parent=1 // pred_check_branch
      %81 = sbr.rel (0) target = $region37
    $region36: #{tpu_custom_call.1} parent=1 // pred_region
      _
    $region37: #{tpu_custom_call.1} parent=1 // pred_fallthru
      _
    // Predicated region
    $region38: #{tpu_custom_call.1} parent=1 // pred_check
      _
    $region39: #{tpu_custom_call.1} parent=1 // pred_check_branch
      %83 = sbr.rel (0) target = $region41
    $region40: #{tpu_custom_call.1} parent=1 // pred_region
      %s85 = ssub.s32 128, 128
      %86 = vsyncadd [#allocation8], %s85
      %s88 = sshll.u32 [#allocation9], 4
      %s89 = int_to_ptr.vmem [resolvable:$true] %s88
      %91 = dma.hbm_to_vmem [thread:$0]  %s9, 128, %s89, [#allocation8]
    $region41: #{tpu_custom_call.1} parent=1 // pred_fallthru
      _
    // Predicated region
    $region42: #{tpu_custom_call.1} parent=1 // pred_check
      _
    $region43: #{tpu_custom_call.1} parent=1 // pred_check_branch
      %93 = sbr.rel (0) target = $region45
    $region44: #{tpu_custom_call.1} parent=1 // pred_region
      _
    $region45: #{tpu_custom_call.1} parent=1 // pred_fallthru
      _
    // Predicated region
    $region46: #{tpu_custom_call.1} parent=1 // pred_check
      _
    $region47: #{tpu_custom_call.1} parent=1 // pred_check_branch
      %95 = sbr.rel (0) target = $region49
    $region48: #{tpu_custom_call.1} parent=1 // pred_region
      %s97 = ssub.s32 128, 128
      %98 = vsyncadd [#allocation11], %s97
      %s100 = sshll.u32 [#allocation10], 4
      %s101 = int_to_ptr.vmem [resolvable:$true] %s100
      %103 = dma.hbm_to_vmem [thread:$0]  %s11, 128, %s101, [#allocation11]
    $region49: #{tpu_custom_call.1} parent=1 // pred_fallthru
      _
    // Predicated region
    $region50: #{tpu_custom_call.1} parent=1 // pred_check
      _
    $region51: #{tpu_custom_call.1} parent=1 // pred_check_branch
      %105 = sbr.rel (0) target = $region53
    $region52: #{tpu_custom_call.1} parent=1 // pred_region
      _
    $region53: #{tpu_custom_call.1} parent=1 // pred_fallthru
      _
    // Predicated region
    $region54: #{tpu_custom_call.1} parent=1 // pred_check
      _
    $region55: #{tpu_custom_call.1} parent=1 // pred_check_branch
      %107 = sbr.rel (0) target = $region57
    $region56: #{tpu_custom_call.1} parent=1 // pred_region
      %s109 = ssub.s32 128, 128
      %110 = vsyncadd [#allocation11], %s109
      %s112 = sshll.u32 [#allocation12], 4
      %s113 = int_to_ptr.vmem [resolvable:$true] %s112
      %115 = dma.hbm_to_vmem [thread:$0]  %s13, 128, %s113, [#allocation11]
    $region57: #{tpu_custom_call.1} parent=1 // pred_fallthru
      _
    // Predicated region
    $region58: #{tpu_custom_call.1} parent=1 // pred_check
      _
    $region59: #{tpu_custom_call.1} parent=1 // pred_check_branch
      %117 = sbr.rel (0) target = $region61
    $region60: #{tpu_custom_call.1} parent=1 // pred_region
      _
    $region61: #{tpu_custom_call.1} parent=1 // pred_fallthru
      _
    // Predicated region
    $region62: #{tpu_custom_call.1} parent=1 // pred_check
      _
    $region63: #{tpu_custom_call.1} parent=1 // pred_check_branch
      %119 = sbr.rel (0) target = $region65
    $region64: #{tpu_custom_call.1} parent=1 // pred_region
      %s121 = ssub.s32 256, 256
      %122 = vsyncadd [#allocation14], %s121
      %s123 = sshll.u32 [#allocation13], 4
      %s124 = int_to_ptr.vmem [resolvable:$true] %s123
      %129 = dma.hbm_to_vmem [thread:$0]  %s15, 256, %s124, [#allocation14], 128, 128, 8
    $region65: #{tpu_custom_call.1} parent=1 // pred_fallthru
      _
    // Predicated region
    $region66: #{tpu_custom_call.1} parent=1 // pred_check
      _
    $region67: #{tpu_custom_call.1} parent=1 // pred_check_branch
      %131 = sbr.rel (0) target = $region69
    $region68: #{tpu_custom_call.1} parent=1 // pred_region
      _
    $region69: #{tpu_custom_call.1} parent=1 // pred_fallthru
      _
    // Predicated region
    $region70: #{tpu_custom_call.1} parent=1 // pred_check
      _
    $region71: #{tpu_custom_call.1} parent=1 // pred_check_branch
      %133 = sbr.rel (0) target = $region73
    $region72: #{tpu_custom_call.1} parent=1 // pred_region
      _
    $region73: #{tpu_custom_call.1} parent=1 // pred_fallthru
      _
    // Predicated region
    $region74: #{tpu_custom_call.1} parent=1 // pred_check
      _
    $region75: #{tpu_custom_call.1} parent=1 // pred_check_branch
      %135 = sbr.rel (0) target = $region77
    $region76: #{tpu_custom_call.1} parent=1 // pred_region
      _
    $region77: #{tpu_custom_call.1} parent=1 // pred_fallthru
      _
    // Predicated region
    $region78: #{tpu_custom_call.1} parent=1 // pred_check
      _
    $region79: #{tpu_custom_call.1} parent=1 // pred_check_branch
      %137 = sbr.rel (0) target = $region81
    $region80: #{tpu_custom_call.1} parent=1 // pred_region
      _
    $region81: #{tpu_custom_call.1} parent=1 // pred_fallthru
      _
    // Predicated region
    $region82: #{tpu_custom_call.1} parent=1 // pred_check
      _
    $region83: #{tpu_custom_call.1} parent=1 // pred_check_branch
      %139 = sbr.rel (0) target = $region85
    $region84: #{tpu_custom_call.1} parent=1 // pred_region
      %s141 = ssub.s32 512, 512
      %142 = vsyncadd [#allocation14], %s141
      %s143 = sshll.u32 [#allocation15], 4
      %s144 = int_to_ptr.vmem [resolvable:$true] %s143
      %149 = dma.hbm_to_vmem [thread:$0]  %s20, 512, %s144, [#allocation14], 128, 128, 8
    $region85: #{tpu_custom_call.1} parent=1 // pred_fallthru
      _
    // Predicated region
    $region86: #{tpu_custom_call.1} parent=1 // pred_check
      _
    $region87: #{tpu_custom_call.1} parent=1 // pred_check_branch
      %151 = sbr.rel (0) target = $region89
    $region88: #{tpu_custom_call.1} parent=1 // pred_region
      _
    $region89: #{tpu_custom_call.1} parent=1 // pred_fallthru
      _
    // Predicated region
    $region90: #{tpu_custom_call.1} parent=1 // pred_check
      _
    $region91: #{tpu_custom_call.1} parent=1 // pred_check_branch
      %153 = sbr.rel (0) target = $region93
    $region92: #{tpu_custom_call.1} parent=1 // pred_region
      %154 = dma.done [#allocation3], 512
    $region93: #{tpu_custom_call.1} parent=1 // pred_fallthru
      _
    // Predicated region
    $region94: #{tpu_custom_call.1} parent=1 // pred_check
      _
    $region95: #{tpu_custom_call.1} parent=1 // pred_check_branch
      %156 = sbr.rel (0) target = $region97
    $region96: #{tpu_custom_call.1} parent=1 // pred_region
      %157 = dma.done [#allocation5], 128
    $region97: #{tpu_custom_call.1} parent=1 // pred_fallthru
      _
    // Predicated region
    $region98: #{tpu_custom_call.1} parent=1 // pred_check
      _
    $region99: #{tpu_custom_call.1} parent=1 // pred_check_branch
      %159 = sbr.rel (0) target = $region101
    $region100: #{tpu_custom_call.1} parent=1 // pred_region
      %160 = dma.done [#allocation5], 128
    $region101: #{tpu_custom_call.1} parent=1 // pred_fallthru
      _
    // Predicated region
    $region102: #{tpu_custom_call.1} parent=1 // pred_check
      _
    $region103: #{tpu_custom_call.1} parent=1 // pred_check_branch
      %162 = sbr.rel (0) target = $region105
    $region104: #{tpu_custom_call.1} parent=1 // pred_region
      %163 = dma.done [#allocation8], 128
    $region105: #{tpu_custom_call.1} parent=1 // pred_fallthru
      _
    // Predicated region
    $region106: #{tpu_custom_call.1} parent=1 // pred_check
      _
    $region107: #{tpu_custom_call.1} parent=1 // pred_check_branch
      %165 = sbr.rel (0) target = $region109
    $region108: #{tpu_custom_call.1} parent=1 // pred_region
      %166 = dma.done [#allocation8], 128
    $region109: #{tpu_custom_call.1} parent=1 // pred_fallthru
      _
    // Predicated region
    $region110: #{tpu_custom_call.1} parent=1 // pred_check
      _
    $region111: #{tpu_custom_call.1} parent=1 // pred_check_branch
      %168 = sbr.rel (0) target = $region113
    $region112: #{tpu_custom_call.1} parent=1 // pred_region
      %169 = dma.done [#allocation11], 128
    $region113: #{tpu_custom_call.1} parent=1 // pred_fallthru
      _
    // Predicated region
    $region114: #{tpu_custom_call.1} parent=1 // pred_check
      _
    $region115: #{tpu_custom_call.1} parent=1 // pred_check_branch
      %171 = sbr.rel (0) target = $region117
    $region116: #{tpu_custom_call.1} parent=1 // pred_region
      %172 = dma.done [#allocation11], 128
    $region117: #{tpu_custom_call.1} parent=1 // pred_fallthru
      _
    // Predicated region
    $region118: #{tpu_custom_call.1} parent=1 // pred_check
      _
    $region119: #{tpu_custom_call.1} parent=1 // pred_check_branch
      %174 = sbr.rel (0) target = $region121
    $region120: #{tpu_custom_call.1} parent=1 // pred_region
      %175 = dma.done [#allocation14], 256
    $region121: #{tpu_custom_call.1} parent=1 // pred_fallthru
      _
    // Predicated region
    $region122: #{tpu_custom_call.1} parent=1 // pred_check
      _
    $region123: #{tpu_custom_call.1} parent=1 // pred_check_branch
      %177 = sbr.rel (0) target = $region125
    $region124: #{tpu_custom_call.1} parent=1 // pred_region
      %178 = dma.done [#allocation14], 512
    $region125: #{tpu_custom_call.1} parent=1 // pred_fallthru
      _
    %v179 = vld [vmem:[#allocation2] sm:$0xff]
    %v180 = vld [vmem:[#allocation2 + $0x8] sm:$0xff]
    %v181 = vld [vmem:[#allocation2 + $0x10] sm:$0xff]
    %v182 = vld [vmem:[#allocation2 + $0x18] sm:$0xff]
    %184 = vrot.lane.b32.xlu0 %v182, 17
    %v185 = vpop.permute.xlu0 %184
    %190 = vrot.lane.b32.xlu0 %v179, 17
    %v191 = vpop.permute.xlu0 %190
    %192 = vrot.lane.b32.xlu0 %v180, 17
    %v193 = vpop.permute.xlu0 %192
    %194 = vrot.lane.b32.xlu0 %v181, 17
    %v195 = vpop.permute.xlu0 %194
    %vm196 = vcmask 138240
    %v197 = vsel %vm196, %v191, %v193
    %v198 = vsel %vm196, %v193, %v195
    %v199 = vsel %vm196, %v195, %v185
    %v204 = vsel %vm196, %v185, %v191
    %v205 = vld [vmem:[%s7] ss:$8 sm:$0xf]
    %v207 = vlaneseq
    %v208 = vshrl.u32 %v207, 7
    %v209 = vsub.s32 0, %v208
    %v210 = vrot.slane %v205, %v209
    %v211 = vlaneseq
    %v212 = vshrl.u32 %v211, 7
    %v213 = vsub.s32 1, %v212
    %v214 = vrot.slane %v205, %v213
    %v215 = vlaneseq
    %v216 = vshrl.u32 %v215, 7
    %v217 = vsub.s32 2, %v216
    %v218 = vrot.slane %v205, %v217
    %v219 = vlaneseq
    %v220 = vshrl.u32 %v219, 7
    %v221 = vsub.s32 3, %v220
    %v222 = vrot.slane %v205, %v221
    %v227 = vmul.f32 %v204, %v210
    %v228 = vmul.f32 %v197, %v214
    %v229 = vmul.f32 %v198, %v218
    %v230 = vmul.f32 %v199, %v222
    %231 = vrot.lane.b32.xlu0 %v182, 16
    %v232 = vpop.permute.xlu0 %231
    %234 = vrot.lane.b32.xlu0 %v179, 16
    %v235 = vpop.permute.xlu0 %234
    %236 = vrot.lane.b32.xlu0 %v180, 16
    %v237 = vpop.permute.xlu0 %236
    %238 = vrot.lane.b32.xlu0 %v181, 16
    %v239 = vpop.permute.xlu0 %238
    %vm240 = vcmask 130048
    %v241 = vsel %vm240, %v235, %v237
    %v242 = vsel %vm240, %v237, %v239
    %v243 = vsel %vm240, %v239, %v232
    %v248 = vsel %vm240, %v232, %v235
    %s249 = scalar_lea.vmem %s7, 1
    %v250 = vld [vmem:[%s249] ss:$8 sm:$0xf]
    %v252 = vlaneseq
    %v253 = vshrl.u32 %v252, 7
    %v254 = vsub.s32 0, %v253
    %v255 = vrot.slane %v250, %v254
    %v256 = vlaneseq
    %v257 = vshrl.u32 %v256, 7
    %v258 = vsub.s32 1, %v257
    %v259 = vrot.slane %v250, %v258
    %v260 = vlaneseq
    %v261 = vshrl.u32 %v260, 7
    %v262 = vsub.s32 2, %v261
    %v263 = vrot.slane %v250, %v262
    %v264 = vlaneseq
    %v265 = vshrl.u32 %v264, 7
    %v266 = vsub.s32 3, %v265
    %v267 = vrot.slane %v250, %v266
    %v272 = vmul.f32 %v248, %v255
    %v273 = vmul.f32 %v241, %v259
    %v274 = vmul.f32 %v242, %v263
    %v275 = vmul.f32 %v243, %v267
    %276 = vrot.lane.b32.xlu0 %v182, 15
    %v277 = vpop.permute.xlu0 %276
    %279 = vrot.lane.b32.xlu0 %v179, 15
    %v280 = vpop.permute.xlu0 %279
    %281 = vrot.lane.b32.xlu0 %v180, 15
    %v282 = vpop.permute.xlu0 %281
    %283 = vrot.lane.b32.xlu0 %v181, 15
    %v284 = vpop.permute.xlu0 %283
    %vm285 = vcmask 121856
    %v286 = vsel %vm285, %v280, %v282
    %v287 = vsel %vm285, %v282, %v284
    %v288 = vsel %vm285, %v284, %v277
    %v293 = vsel %vm285, %v277, %v280
    %s294 = scalar_lea.vmem %s7, 2
    %v295 = vld [vmem:[%s294] ss:$8 sm:$0xf]
    %v297 = vlaneseq
    %v298 = vshrl.u32 %v297, 7
    %v299 = vsub.s32 0, %v298
    %v300 = vrot.slane %v295, %v299
    %v301 = vlaneseq
    %v302 = vshrl.u32 %v301, 7
    %v303 = vsub.s32 1, %v302
    %v304 = vrot.slane %v295, %v303
    %v305 = vlaneseq
    %v306 = vshrl.u32 %v305, 7
    %v307 = vsub.s32 2, %v306
    %v308 = vrot.slane %v295, %v307
    %v309 = vlaneseq
    %v310 = vshrl.u32 %v309, 7
    %v311 = vsub.s32 3, %v310
    %v312 = vrot.slane %v295, %v311
    %v317 = vmul.f32 %v293, %v300
    %v318 = vmul.f32 %v286, %v304
    %v319 = vmul.f32 %v287, %v308
    %v320 = vmul.f32 %v288, %v312
    %321 = vrot.lane.b32.xlu0 %v182, 1
    %v322 = vpop.permute.xlu0 %321
    %324 = vrot.lane.b32.xlu0 %v179, 1
    %v325 = vpop.permute.xlu0 %324
    %326 = vrot.lane.b32.xlu0 %v180, 1
    %v327 = vpop.permute.xlu0 %326
    %328 = vrot.lane.b32.xlu0 %v181, 1
    %v329 = vpop.permute.xlu0 %328
    %vm330 = vcmask 7168
    %v331 = vsel %vm330, %v325, %v327
    %v332 = vsel %vm330, %v327, %v329
    %v333 = vsel %vm330, %v329, %v322
    %v338 = vsel %vm330, %v322, %v325
    %s339 = scalar_lea.vmem %s7, 3
    %v340 = vld [vmem:[%s339] ss:$8 sm:$0xf]
    %v342 = vlaneseq
    %v343 = vshrl.u32 %v342, 7
    %v344 = vsub.s32 0, %v343
    %v345 = vrot.slane %v340, %v344
    %v346 = vlaneseq
    %v347 = vshrl.u32 %v346, 7
    %v348 = vsub.s32 1, %v347
    %v349 = vrot.slane %v340, %v348
    %v350 = vlaneseq
    %v351 = vshrl.u32 %v350, 7
    %v352 = vsub.s32 2, %v351
    %v353 = vrot.slane %v340, %v352
    %v354 = vlaneseq
    %v355 = vshrl.u32 %v354, 7
    %v356 = vsub.s32 3, %v355
    %v357 = vrot.slane %v340, %v356
    %v362 = vmul.f32 %v338, %v345
    %v363 = vmul.f32 %v331, %v349
    %v364 = vmul.f32 %v332, %v353
    %v365 = vmul.f32 %v333, %v357
    %366 = vrot.lane.b32.xlu0 %v179, 127
    %v367 = vpop.permute.xlu0 %366
    %368 = vrot.lane.b32.xlu0 %v180, 127
    %v369 = vpop.permute.xlu0 %368
    %370 = vrot.lane.b32.xlu0 %v181, 127
    %v371 = vpop.permute.xlu0 %370
    %372 = vrot.lane.b32.xlu0 %v182, 127
    %v373 = vpop.permute.xlu0 %372
    %vm374 = vcmask 1039360
    %v375 = vsel %vm374, %v367, %v369
    %v376 = vsel %vm374, %v369, %v371
    %v377 = vsel %vm374, %v371, %v373
    %v383 = vsel %vm374, %v373, %v367
    %s384 = scalar_lea.vmem %s7, 5
    %v385 = vld [vmem:[%s384] ss:$8 sm:$0xf]
    %v387 = vlaneseq
    %v388 = vshrl.u32 %v387, 7
    %v389 = vsub.s32 0, %v388
    %v390 = vrot.slane %v385, %v389
    %v391 = vlaneseq
    %v392 = vshrl.u32 %v391, 7
    %v393 = vsub.s32 1, %v392
    %v394 = vrot.slane %v385, %v393
    %v395 = vlaneseq
    %v396 = vshrl.u32 %v395, 7
    %v397 = vsub.s32 2, %v396
    %v398 = vrot.slane %v385, %v397
    %v399 = vlaneseq
    %v400 = vshrl.u32 %v399, 7
    %v401 = vsub.s32 3, %v400
    %v402 = vrot.slane %v385, %v401
    %v407 = vmul.f32 %v375, %v390
    %v408 = vmul.f32 %v376, %v394
    %v409 = vmul.f32 %v377, %v398
    %v410 = vmul.f32 %v383, %v402
    %411 = vrot.lane.b32.xlu0 %v179, 113
    %v412 = vpop.permute.xlu0 %411
    %413 = vrot.lane.b32.xlu0 %v180, 113
    %v414 = vpop.permute.xlu0 %413
    %415 = vrot.lane.b32.xlu0 %v181, 113
    %v416 = vpop.permute.xlu0 %415
    %417 = vrot.lane.b32.xlu0 %v182, 113
    %v418 = vpop.permute.xlu0 %417
    %vm419 = vcmask 924672
    %v420 = vsel %vm419, %v412, %v414
    %v421 = vsel %vm419, %v414, %v416
    %v422 = vsel %vm419, %v416, %v418
    %v428 = vsel %vm419, %v418, %v412
    %s429 = scalar_lea.vmem %s7, 6
    %v430 = vld [vmem:[%s429] ss:$8 sm:$0xf]
    %v432 = vlaneseq
    %v433 = vshrl.u32 %v432, 7
    %v434 = vsub.s32 0, %v433
    %v435 = vrot.slane %v430, %v434
    %v436 = vlaneseq
    %v437 = vshrl.u32 %v436, 7
    %v438 = vsub.s32 1, %v437
    %v439 = vrot.slane %v430, %v438
    %v440 = vlaneseq
    %v441 = vshrl.u32 %v440, 7
    %v442 = vsub.s32 2, %v441
    %v443 = vrot.slane %v430, %v442
    %v444 = vlaneseq
    %v445 = vshrl.u32 %v444, 7
    %v446 = vsub.s32 3, %v445
    %v447 = vrot.slane %v430, %v446
    %v452 = vmul.f32 %v420, %v435
    %v453 = vmul.f32 %v421, %v439
    %v454 = vmul.f32 %v422, %v443
    %v455 = vmul.f32 %v428, %v447
    %456 = vrot.lane.b32.xlu0 %v179, 112
    %v457 = vpop.permute.xlu0 %456
    %458 = vrot.lane.b32.xlu0 %v180, 112
    %v459 = vpop.permute.xlu0 %458
    %460 = vrot.lane.b32.xlu0 %v181, 112
    %v461 = vpop.permute.xlu0 %460
    %462 = vrot.lane.b32.xlu0 %v182, 112
    %v463 = vpop.permute.xlu0 %462
    %vm464 = vcmask 916480
    %v465 = vsel %vm464, %v457, %v459
    %v466 = vsel %vm464, %v459, %v461
    %v467 = vsel %vm464, %v461, %v463
    %v473 = vsel %vm464, %v463, %v457
    %s474 = scalar_lea.vmem %s7, 7
    %v475 = vld [vmem:[%s474] ss:$8 sm:$0xf]
    %v477 = vlaneseq
    %v478 = vshrl.u32 %v477, 7
    %v479 = vsub.s32 0, %v478
    %v480 = vrot.slane %v475, %v479
    %v481 = vlaneseq
    %v482 = vshrl.u32 %v481, 7
    %v483 = vsub.s32 1, %v482
    %v484 = vrot.slane %v475, %v483
    %v485 = vlaneseq
    %v486 = vshrl.u32 %v485, 7
    %v487 = vsub.s32 2, %v486
    %v488 = vrot.slane %v475, %v487
    %v489 = vlaneseq
    %v490 = vshrl.u32 %v489, 7
    %v491 = vsub.s32 3, %v490
    %v492 = vrot.slane %v475, %v491
    %v497 = vmul.f32 %v465, %v480
    %v498 = vmul.f32 %v466, %v484
    %v499 = vmul.f32 %v467, %v488
    %v500 = vmul.f32 %v473, %v492
    %501 = vrot.lane.b32.xlu0 %v179, 111
    %v502 = vpop.permute.xlu0 %501
    %503 = vrot.lane.b32.xlu0 %v180, 111
    %v504 = vpop.permute.xlu0 %503
    %505 = vrot.lane.b32.xlu0 %v181, 111
    %v506 = vpop.permute.xlu0 %505
    %507 = vrot.lane.b32.xlu0 %v182, 111
    %v508 = vpop.permute.xlu0 %507
    %vm509 = vcmask 908288
    %v510 = vsel %vm509, %v502, %v504
    %v511 = vsel %vm509, %v504, %v506
    %v512 = vsel %vm509, %v506, %v508
    %v518 = vsel %vm509, %v508, %v502
    %s519 = scalar_lea.vmem %s7, 32
    %v520 = vld [vmem:[%s519] ss:$8 sm:$0xf]
    %v522 = vlaneseq
    %v523 = vshrl.u32 %v522, 7
    %v524 = vsub.s32 0, %v523
    %v525 = vrot.slane %v520, %v524
    %v526 = vlaneseq
    %v527 = vshrl.u32 %v526, 7
    %v528 = vsub.s32 1, %v527
    %v529 = vrot.slane %v520, %v528
    %v530 = vlaneseq
    %v531 = vshrl.u32 %v530, 7
    %v532 = vsub.s32 2, %v531
    %v533 = vrot.slane %v520, %v532
    %v534 = vlaneseq
    %v535 = vshrl.u32 %v534, 7
    %v536 = vsub.s32 3, %v535
    %v537 = vrot.slane %v520, %v536
    %v542 = vmul.f32 %v510, %v525
    %v543 = vmul.f32 %v511, %v529
    %v544 = vmul.f32 %v512, %v533
    %v545 = vmul.f32 %v518, %v537
    %v546 = vld [vmem:[#allocation4] sm:$0xff]
    %v547 = vld [vmem:[%s2] sm:$0xff]
    %549 = vset.pattern.permute.xlu0 0
    %550 = vperm.xlu0 %549, %v547
    %v551 = vpop.permute.xlu0 %550
    %vm553 = vcmask 588800
    %v555 = vsel %vm553, %v546, 0
    %557 = vmatprep.subr.mxu0 %v228
    %558 = vmatpush1.msra.mxu0 %v227
    %559 = vmatprep.subr.mxu0 %v273
    %560 = vmatpush1.msra.mxu0 %v272
    %561 = vmatprep.subr.mxu0 %v318
    %562 = vmatpush1.msra.mxu0 %v317
    %563 = vmatprep.subr.mxu0 %v363
    %564 = vmatpush1.msra.mxu0 %v362
    %565 = vmatprep.subr.mxu0 %v180
    %566 = vmatpush1.msra.mxu0 %v179
    %567 = vmatprep.subr.mxu0 %v408
    %568 = vmatpush1.msra.mxu0 %v407
    %569 = vmatprep.subr.mxu0 %v453
    %570 = vmatpush1.msra.mxu0 %v452
    %571 = vmatprep.subr.mxu0 %v498
    %572 = vmatpush1.msra.mxu0 %v497
    %573 = vmatprep.subr.mxu0 %v543
    %574 = vmatpush1.msra.mxu0 %v542
    %575 = vmatprep.subr.mxu0 0.0
    %576 = vmatpush1.msra.mxu0 0.0
    %577 = vmatprep.subr.mxu0 0.0
    %578 = vmatpush1.msra.mxu0 0.0
    %579 = vmatprep.subr.mxu0 0.0
    %580 = vmatpush1.msra.mxu0 0.0
    %581 = vmatprep.subr.mxu0 0.0
    %582 = vmatpush1.msra.mxu0 0.0
    %583 = vmatprep.subr.mxu0 0.0
    %584 = vmatpush1.msra.mxu0 0.0
    %585 = vmatprep.subr.mxu0 0.0
    %586 = vmatpush1.msra.mxu0 0.0
    %587 = vmatprep.subr.mxu0 0.0
    %588 = vmatpush1.msra.mxu0 0.0
    %589 = vmatprep.subr.mxu0 0.0
    %590 = vmatpush1.msra.mxu0 0.0
    %591 = vmatprep.subr.mxu0 0.0
    %592 = vmatpush1.msra.mxu0 0.0
    %593 = vmatprep.subr.mxu0 0.0
    %594 = vmatpush1.msra.mxu0 0.0
    %595 = vmatprep.subr.mxu0 0.0
    %596 = vmatpush1.msra.mxu0 0.0
    %597 = vmatprep.subr.mxu0 0.0
    %598 = vmatpush1.msra.mxu0 0.0
    %599 = vmatprep.subr.mxu0 0.0
    %600 = vmatpush1.msra.mxu0 0.0
    %601 = vmatprep.subr.mxu0 0.0
    %602 = vmatpush1.msra.mxu0 0.0
    %603 = vmatprep.subr.mxu0 0.0
    %604 = vmatpush1.msra.mxu0 0.0
    %605 = vmatprep.subr.mxu0 0.0
    %606 = vmatpush1.msra.mxu0 0.0
    %607 = vmatprep.subr.mxu0 0.0
    %608 = vmatpush1.msra.mxu0 0.0
    %609 = vmatprep.subr.mxu0 0.0
    %610 = vmatpush1.msra.mxu0 0.0
    %611 = vmatprep.subr.mxu0 0.0
    %612 = vmatpush1.msra.mxu0 0.0
    %613 = vmatprep.subr.mxu0 0.0
    %614 = vmatpush1.msra.mxu0 0.0
    %615 = vmatprep.subr.mxu0 0.0
    %616 = vmatpush1.msra.mxu0 0.0
    %617 = vmatprep.subr.mxu0 0.0
    %618 = vmatpush1.msra.mxu0 0.0
    %619 = vmatprep.subr.mxu0 0.0
    %620 = vmatpush1.msra.mxu0 0.0
    %621 = vmatprep.mubr.f32.mxu0 0.0
    %622 = vmatmul.mubr.f32.gmra.mrb[0].mxu0 %v555
    %v623 = vpop.f32.mrb[0].mxu0
    %v624 = vadd.f32 %v551, %v623
    %v625 = vpop.f32.mrb[0].mxu0
    %v626 = vadd.f32 %v551, %v625
    %627 = vdwg.mxu0
    %628 = vmatprep.subr.mxu0 %v230
    %629 = vmatpush1.msra.mxu0 %v229
    %630 = vmatprep.subr.mxu0 %v275
    %631 = vmatpush1.msra.mxu0 %v274
    %632 = vmatprep.subr.mxu0 %v320
    %633 = vmatpush1.msra.mxu0 %v319
    %634 = vmatprep.subr.mxu0 %v365
    %635 = vmatpush1.msra.mxu0 %v364
    %636 = vmatprep.subr.mxu0 %v182
    %637 = vmatpush1.msra.mxu0 %v181
    %638 = vmatprep.subr.mxu0 %v410
    %639 = vmatpush1.msra.mxu0 %v409
    %640 = vmatprep.subr.mxu0 %v455
    %641 = vmatpush1.msra.mxu0 %v454
    %642 = vmatprep.subr.mxu0 %v500
    %643 = vmatpush1.msra.mxu0 %v499
    %644 = vmatprep.subr.mxu0 %v545
    %645 = vmatpush1.msra.mxu0 %v544
    %646 = vmatprep.subr.mxu0 0.0
    %647 = vmatpush1.msra.mxu0 0.0
    %648 = vmatprep.subr.mxu0 0.0
    %649 = vmatpush1.msra.mxu0 0.0
    %650 = vmatprep.subr.mxu0 0.0
    %651 = vmatpush1.msra.mxu0 0.0
    %652 = vmatprep.subr.mxu0 0.0
    %653 = vmatpush1.msra.mxu0 0.0
    %654 = vmatprep.subr.mxu0 0.0
    %655 = vmatpush1.msra.mxu0 0.0
    %656 = vmatprep.subr.mxu0 0.0
    %657 = vmatpush1.msra.mxu0 0.0
    %658 = vmatprep.subr.mxu0 0.0
    %659 = vmatpush1.msra.mxu0 0.0
    %660 = vmatprep.subr.mxu0 0.0
    %661 = vmatpush1.msra.mxu0 0.0
    %662 = vmatprep.subr.mxu0 0.0
    %663 = vmatpush1.msra.mxu0 0.0
    %664 = vmatprep.subr.mxu0 0.0
    %665 = vmatpush1.msra.mxu0 0.0
    %666 = vmatprep.subr.mxu0 0.0
    %667 = vmatpush1.msra.mxu0 0.0
    %668 = vmatprep.subr.mxu0 0.0
    %669 = vmatpush1.msra.mxu0 0.0
    %670 = vmatprep.subr.mxu0 0.0
    %671 = vmatpush1.msra.mxu0 0.0
    %672 = vmatprep.subr.mxu0 0.0
    %673 = vmatpush1.msra.mxu0 0.0
    %674 = vmatprep.subr.mxu0 0.0
    %675 = vmatpush1.msra.mxu0 0.0
    %676 = vmatprep.subr.mxu0 0.0
    %677 = vmatpush1.msra.mxu0 0.0
    %678 = vmatprep.subr.mxu0 0.0
    %679 = vmatpush1.msra.mxu0 0.0
    %680 = vmatprep.subr.mxu0 0.0
    %681 = vmatpush1.msra.mxu0 0.0
    %682 = vmatprep.subr.mxu0 0.0
    %683 = vmatpush1.msra.mxu0 0.0
    %684 = vmatprep.subr.mxu0 0.0
    %685 = vmatpush1.msra.mxu0 0.0
    %686 = vmatprep.subr.mxu0 0.0
    %687 = vmatpush1.msra.mxu0 0.0
    %688 = vmatprep.subr.mxu0 0.0
    %689 = vmatpush1.msra.mxu0 0.0
    %690 = vmatprep.subr.mxu0 0.0
    %691 = vmatpush1.msra.mxu0 0.0
    %692 = vmatprep.mubr.f32.mxu0 0.0
    %693 = vmatmul.mubr.f32.gmra.mrb[0].mxu0 %v555
    %v694 = vpop.f32.mrb[0].mxu0
    %v695 = vadd.f32 %v551, %v694
    %v696 = vpop.f32.mrb[0].mxu0
    %v697 = vadd.f32 %v551, %v696
    %698 = vdwg.mxu0
    %v699 = vmax.f32 %v624, 0.0
    %v700 = vmax.f32 %v626, 0.0
    %v701 = vmax.f32 %v695, 0.0
    %v702 = vmax.f32 %v697, 0.0
    %704 = vrot.lane.b32.xlu0 %v702, 17
    %v705 = vpop.permute.xlu0 %704
    %710 = vrot.lane.b32.xlu0 %v699, 17
    %v711 = vpop.permute.xlu0 %710
    %712 = vrot.lane.b32.xlu0 %v700, 17
    %v713 = vpop.permute.xlu0 %712
    %714 = vrot.lane.b32.xlu0 %v701, 17
    %v715 = vpop.permute.xlu0 %714
    %v716 = vsel %vm196, %v711, %v713
    %v717 = vsel %vm196, %v713, %v715
    %v718 = vsel %vm196, %v715, %v705
    %v723 = vsel %vm196, %v705, %v711
    %v724 = vmul.f32 %v723, %v210
    %v725 = vmul.f32 %v716, %v214
    %v726 = vmul.f32 %v717, %v218
    %v727 = vmul.f32 %v718, %v222
    %728 = vrot.lane.b32.xlu0 %v702, 16
    %v729 = vpop.permute.xlu0 %728
    %731 = vrot.lane.b32.xlu0 %v699, 16
    %v732 = vpop.permute.xlu0 %731
    %733 = vrot.lane.b32.xlu0 %v700, 16
    %v734 = vpop.permute.xlu0 %733
    %735 = vrot.lane.b32.xlu0 %v701, 16
    %v736 = vpop.permute.xlu0 %735
    %v737 = vsel %vm240, %v732, %v734
    %v738 = vsel %vm240, %v734, %v736
    %v739 = vsel %vm240, %v736, %v729
    %v744 = vsel %vm240, %v729, %v732
    %v745 = vmul.f32 %v744, %v255
    %v746 = vmul.f32 %v737, %v259
    %v747 = vmul.f32 %v738, %v263
    %v748 = vmul.f32 %v739, %v267
    %749 = vrot.lane.b32.xlu0 %v702, 15
    %v750 = vpop.permute.xlu0 %749
    %752 = vrot.lane.b32.xlu0 %v699, 15
    %v753 = vpop.permute.xlu0 %752
    %754 = vrot.lane.b32.xlu0 %v700, 15
    %v755 = vpop.permute.xlu0 %754
    %756 = vrot.lane.b32.xlu0 %v701, 15
    %v757 = vpop.permute.xlu0 %756
    %v758 = vsel %vm285, %v753, %v755
    %v759 = vsel %vm285, %v755, %v757
    %v760 = vsel %vm285, %v757, %v750
    %v765 = vsel %vm285, %v750, %v753
    %v766 = vmul.f32 %v765, %v300
    %v767 = vmul.f32 %v758, %v304
    %v768 = vmul.f32 %v759, %v308
    %v769 = vmul.f32 %v760, %v312
    %770 = vrot.lane.b32.xlu0 %v702, 1
    %v771 = vpop.permute.xlu0 %770
    %773 = vrot.lane.b32.xlu0 %v699, 1
    %v774 = vpop.permute.xlu0 %773
    %775 = vrot.lane.b32.xlu0 %v700, 1
    %v776 = vpop.permute.xlu0 %775
    %777 = vrot.lane.b32.xlu0 %v701, 1
    %v778 = vpop.permute.xlu0 %777
    %v779 = vsel %vm330, %v774, %v776
    %v780 = vsel %vm330, %v776, %v778
    %v781 = vsel %vm330, %v778, %v771
    %v786 = vsel %vm330, %v771, %v774
    %v787 = vmul.f32 %v786, %v345
    %v788 = vmul.f32 %v779, %v349
    %v789 = vmul.f32 %v780, %v353
    %v790 = vmul.f32 %v781, %v357
    %791 = vrot.lane.b32.xlu0 %v699, 127
    %v792 = vpop.permute.xlu0 %791
    %793 = vrot.lane.b32.xlu0 %v700, 127
    %v794 = vpop.permute.xlu0 %793
    %795 = vrot.lane.b32.xlu0 %v701, 127
    %v796 = vpop.permute.xlu0 %795
    %797 = vrot.lane.b32.xlu0 %v702, 127
    %v798 = vpop.permute.xlu0 %797
    %v799 = vsel %vm374, %v792, %v794
    %v800 = vsel %vm374, %v794, %v796
    %v801 = vsel %vm374, %v796, %v798
    %v807 = vsel %vm374, %v798, %v792
    %v808 = vmul.f32 %v799, %v390
    %v809 = vmul.f32 %v800, %v394
    %v810 = vmul.f32 %v801, %v398
    %v811 = vmul.f32 %v807, %v402
    %812 = vrot.lane.b32.xlu0 %v699, 113
    %v813 = vpop.permute.xlu0 %812
    %814 = vrot.lane.b32.xlu0 %v700, 113
    %v815 = vpop.permute.xlu0 %814
    %816 = vrot.lane.b32.xlu0 %v701, 113
    %v817 = vpop.permute.xlu0 %816
    %818 = vrot.lane.b32.xlu0 %v702, 113
    %v819 = vpop.permute.xlu0 %818
    %v820 = vsel %vm419, %v813, %v815
    %v821 = vsel %vm419, %v815, %v817
    %v822 = vsel %vm419, %v817, %v819
    %v828 = vsel %vm419, %v819, %v813
    %v829 = vmul.f32 %v820, %v435
    %v830 = vmul.f32 %v821, %v439
    %v831 = vmul.f32 %v822, %v443
    %v832 = vmul.f32 %v828, %v447
    %833 = vrot.lane.b32.xlu0 %v699, 112
    %v834 = vpop.permute.xlu0 %833
    %835 = vrot.lane.b32.xlu0 %v700, 112
    %v836 = vpop.permute.xlu0 %835
    %837 = vrot.lane.b32.xlu0 %v701, 112
    %v838 = vpop.permute.xlu0 %837
    %839 = vrot.lane.b32.xlu0 %v702, 112
    %v840 = vpop.permute.xlu0 %839
    %v841 = vsel %vm464, %v834, %v836
    %v842 = vsel %vm464, %v836, %v838
    %v843 = vsel %vm464, %v838, %v840
    %v849 = vsel %vm464, %v840, %v834
    %v850 = vmul.f32 %v841, %v480
    %v851 = vmul.f32 %v842, %v484
    %v852 = vmul.f32 %v843, %v488
    %v853 = vmul.f32 %v849, %v492
    %854 = vrot.lane.b32.xlu0 %v699, 111
    %v855 = vpop.permute.xlu0 %854
    %856 = vrot.lane.b32.xlu0 %v700, 111
    %v857 = vpop.permute.xlu0 %856
    %858 = vrot.lane.b32.xlu0 %v701, 111
    %v859 = vpop.permute.xlu0 %858
    %860 = vrot.lane.b32.xlu0 %v702, 111
    %v861 = vpop.permute.xlu0 %860
    %v862 = vsel %vm509, %v855, %v857
    %v863 = vsel %vm509, %v857, %v859
    %v864 = vsel %vm509, %v859, %v861
    %v870 = vsel %vm509, %v861, %v855
    %v871 = vmul.f32 %v862, %v525
    %v872 = vmul.f32 %v863, %v529
    %v873 = vmul.f32 %v864, %v533
    %v874 = vmul.f32 %v870, %v537
    %v875 = vld [vmem:[#allocation6] sm:$0xff]
    %v876 = vld [vmem:[%s4] sm:$0xff]
    %878 = vset.pattern.permute.xlu0 0
    %879 = vperm.xlu0 %878, %v876
    %v880 = vpop.permute.xlu0 %879
    %v883 = vsel %vm553, %v875, 0
    %885 = vmatprep.subr.mxu0 %v725
    %886 = vmatpush1.msra.mxu0 %v724
    %887 = vmatprep.subr.mxu0 %v746
    %888 = vmatpush1.msra.mxu0 %v745
    %889 = vmatprep.subr.mxu0 %v767
    %890 = vmatpush1.msra.mxu0 %v766
    %891 = vmatprep.subr.mxu0 %v788
    %892 = vmatpush1.msra.mxu0 %v787
    %893 = vmatprep.subr.mxu0 %v700
    %894 = vmatpush1.msra.mxu0 %v699
    %895 = vmatprep.subr.mxu0 %v809
    %896 = vmatpush1.msra.mxu0 %v808
    %897 = vmatprep.subr.mxu0 %v830
    %898 = vmatpush1.msra.mxu0 %v829
    %899 = vmatprep.subr.mxu0 %v851
    %900 = vmatpush1.msra.mxu0 %v850
    %901 = vmatprep.subr.mxu0 %v872
    %902 = vmatpush1.msra.mxu0 %v871
    %903 = vmatprep.subr.mxu0 0.0
    %904 = vmatpush1.msra.mxu0 0.0
    %905 = vmatprep.subr.mxu0 0.0
    %906 = vmatpush1.msra.mxu0 0.0
    %907 = vmatprep.subr.mxu0 0.0
    %908 = vmatpush1.msra.mxu0 0.0
    %909 = vmatprep.subr.mxu0 0.0
    %910 = vmatpush1.msra.mxu0 0.0
    %911 = vmatprep.subr.mxu0 0.0
    %912 = vmatpush1.msra.mxu0 0.0
    %913 = vmatprep.subr.mxu0 0.0
    %914 = vmatpush1.msra.mxu0 0.0
    %915 = vmatprep.subr.mxu0 0.0
    %916 = vmatpush1.msra.mxu0 0.0
    %917 = vmatprep.subr.mxu0 0.0
    %918 = vmatpush1.msra.mxu0 0.0
    %919 = vmatprep.subr.mxu0 0.0
    %920 = vmatpush1.msra.mxu0 0.0
    %921 = vmatprep.subr.mxu0 0.0
    %922 = vmatpush1.msra.mxu0 0.0
    %923 = vmatprep.subr.mxu0 0.0
    %924 = vmatpush1.msra.mxu0 0.0
    %925 = vmatprep.subr.mxu0 0.0
    %926 = vmatpush1.msra.mxu0 0.0
    %927 = vmatprep.subr.mxu0 0.0
    %928 = vmatpush1.msra.mxu0 0.0
    %929 = vmatprep.subr.mxu0 0.0
    %930 = vmatpush1.msra.mxu0 0.0
    %931 = vmatprep.subr.mxu0 0.0
    %932 = vmatpush1.msra.mxu0 0.0
    %933 = vmatprep.subr.mxu0 0.0
    %934 = vmatpush1.msra.mxu0 0.0
    %935 = vmatprep.subr.mxu0 0.0
    %936 = vmatpush1.msra.mxu0 0.0
    %937 = vmatprep.subr.mxu0 0.0
    %938 = vmatpush1.msra.mxu0 0.0
    %939 = vmatprep.subr.mxu0 0.0
    %940 = vmatpush1.msra.mxu0 0.0
    %941 = vmatprep.subr.mxu0 0.0
    %942 = vmatpush1.msra.mxu0 0.0
    %943 = vmatprep.subr.mxu0 0.0
    %944 = vmatpush1.msra.mxu0 0.0
    %945 = vmatprep.subr.mxu0 0.0
    %946 = vmatpush1.msra.mxu0 0.0
    %947 = vmatprep.subr.mxu0 0.0
    %948 = vmatpush1.msra.mxu0 0.0
    %949 = vmatprep.mubr.f32.mxu0 0.0
    %950 = vmatmul.mubr.f32.gmra.mrb[0].mxu0 %v883
    %v951 = vpop.f32.mrb[0].mxu0
    %v952 = vadd.f32 %v880, %v951
    %v953 = vpop.f32.mrb[0].mxu0
    %v954 = vadd.f32 %v880, %v953
    %955 = vdwg.mxu0
    %956 = vmatprep.subr.mxu0 %v727
    %957 = vmatpush1.msra.mxu0 %v726
    %958 = vmatprep.subr.mxu0 %v748
    %959 = vmatpush1.msra.mxu0 %v747
    %960 = vmatprep.subr.mxu0 %v769
    %961 = vmatpush1.msra.mxu0 %v768
    %962 = vmatprep.subr.mxu0 %v790
    %963 = vmatpush1.msra.mxu0 %v789
    %964 = vmatprep.subr.mxu0 %v702
    %965 = vmatpush1.msra.mxu0 %v701
    %966 = vmatprep.subr.mxu0 %v811
    %967 = vmatpush1.msra.mxu0 %v810
    %968 = vmatprep.subr.mxu0 %v832
    %969 = vmatpush1.msra.mxu0 %v831
    %970 = vmatprep.subr.mxu0 %v853
    %971 = vmatpush1.msra.mxu0 %v852
    %972 = vmatprep.subr.mxu0 %v874
    %973 = vmatpush1.msra.mxu0 %v873
    %974 = vmatprep.subr.mxu0 0.0
    %975 = vmatpush1.msra.mxu0 0.0
    %976 = vmatprep.subr.mxu0 0.0
    %977 = vmatpush1.msra.mxu0 0.0
    %978 = vmatprep.subr.mxu0 0.0
    %979 = vmatpush1.msra.mxu0 0.0
    %980 = vmatprep.subr.mxu0 0.0
    %981 = vmatpush1.msra.mxu0 0.0
    %982 = vmatprep.subr.mxu0 0.0
    %983 = vmatpush1.msra.mxu0 0.0
    %984 = vmatprep.subr.mxu0 0.0
    %985 = vmatpush1.msra.mxu0 0.0
    %986 = vmatprep.subr.mxu0 0.0
    %987 = vmatpush1.msra.mxu0 0.0
    %988 = vmatprep.subr.mxu0 0.0
    %989 = vmatpush1.msra.mxu0 0.0
    %990 = vmatprep.subr.mxu0 0.0
    %991 = vmatpush1.msra.mxu0 0.0
    %992 = vmatprep.subr.mxu0 0.0
    %993 = vmatpush1.msra.mxu0 0.0
    %994 = vmatprep.subr.mxu0 0.0
    %995 = vmatpush1.msra.mxu0 0.0
    %996 = vmatprep.subr.mxu0 0.0
    %997 = vmatpush1.msra.mxu0 0.0
    %998 = vmatprep.subr.mxu0 0.0
    %999 = vmatpush1.msra.mxu0 0.0
    %1000 = vmatprep.subr.mxu0 0.0
    %1001 = vmatpush1.msra.mxu0 0.0
    %1002 = vmatprep.subr.mxu0 0.0
    %1003 = vmatpush1.msra.mxu0 0.0
    %1004 = vmatprep.subr.mxu0 0.0
    %1005 = vmatpush1.msra.mxu0 0.0
    %1006 = vmatprep.subr.mxu0 0.0
    %1007 = vmatpush1.msra.mxu0 0.0
    %1008 = vmatprep.subr.mxu0 0.0
    %1009 = vmatpush1.msra.mxu0 0.0
    %1010 = vmatprep.subr.mxu0 0.0
    %1011 = vmatpush1.msra.mxu0 0.0
    %1012 = vmatprep.subr.mxu0 0.0
    %1013 = vmatpush1.msra.mxu0 0.0
    %1014 = vmatprep.subr.mxu0 0.0
    %1015 = vmatpush1.msra.mxu0 0.0
    %1016 = vmatprep.subr.mxu0 0.0
    %1017 = vmatpush1.msra.mxu0 0.0
    %1018 = vmatprep.subr.mxu0 0.0
    %1019 = vmatpush1.msra.mxu0 0.0
    %1020 = vmatprep.mubr.f32.mxu0 0.0
    %1021 = vmatmul.mubr.f32.gmra.mrb[0].mxu0 %v883
    %v1022 = vpop.f32.mrb[0].mxu0
    %v1023 = vadd.f32 %v880, %v1022
    %v1024 = vpop.f32.mrb[0].mxu0
    %v1025 = vadd.f32 %v880, %v1024
    %1026 = vdwg.mxu0
    %v1027 = vmax.f32 %v952, 0.0
    %v1028 = vmax.f32 %v954, 0.0
    %v1029 = vmax.f32 %v1023, 0.0
    %v1030 = vmax.f32 %v1025, 0.0
    %1032 = vrot.lane.b32.xlu0 %v1030, 17
    %v1033 = vpop.permute.xlu0 %1032
    %1038 = vrot.lane.b32.xlu0 %v1027, 17
    %v1039 = vpop.permute.xlu0 %1038
    %1040 = vrot.lane.b32.xlu0 %v1028, 17
    %v1041 = vpop.permute.xlu0 %1040
    %1042 = vrot.lane.b32.xlu0 %v1029, 17
    %v1043 = vpop.permute.xlu0 %1042
    %v1044 = vsel %vm196, %v1039, %v1041
    %v1045 = vsel %vm196, %v1041, %v1043
    %v1046 = vsel %vm196, %v1043, %v1033
    %v1051 = vsel %vm196, %v1033, %v1039
    %v1052 = vmul.f32 %v1051, %v210
    %v1053 = vmul.f32 %v1044, %v214
    %v1054 = vmul.f32 %v1045, %v218
    %v1055 = vmul.f32 %v1046, %v222
    %1056 = vrot.lane.b32.xlu0 %v1030, 16
    %v1057 = vpop.permute.xlu0 %1056
    %1059 = vrot.lane.b32.xlu0 %v1027, 16
    %v1060 = vpop.permute.xlu0 %1059
    %1061 = vrot.lane.b32.xlu0 %v1028, 16
    %v1062 = vpop.permute.xlu0 %1061
    %1063 = vrot.lane.b32.xlu0 %v1029, 16
    %v1064 = vpop.permute.xlu0 %1063
    %v1065 = vsel %vm240, %v1060, %v1062
    %v1066 = vsel %vm240, %v1062, %v1064
    %v1067 = vsel %vm240, %v1064, %v1057
    %v1072 = vsel %vm240, %v1057, %v1060
    %v1073 = vmul.f32 %v1072, %v255
    %v1074 = vmul.f32 %v1065, %v259
    %v1075 = vmul.f32 %v1066, %v263
    %v1076 = vmul.f32 %v1067, %v267
    %1077 = vrot.lane.b32.xlu0 %v1030, 15
    %v1078 = vpop.permute.xlu0 %1077
    %1080 = vrot.lane.b32.xlu0 %v1027, 15
    %v1081 = vpop.permute.xlu0 %1080
    %1082 = vrot.lane.b32.xlu0 %v1028, 15
    %v1083 = vpop.permute.xlu0 %1082
    %1084 = vrot.lane.b32.xlu0 %v1029, 15
    %v1085 = vpop.permute.xlu0 %1084
    %v1086 = vsel %vm285, %v1081, %v1083
    %v1087 = vsel %vm285, %v1083, %v1085
    %v1088 = vsel %vm285, %v1085, %v1078
    %v1093 = vsel %vm285, %v1078, %v1081
    %v1094 = vmul.f32 %v1093, %v300
    %v1095 = vmul.f32 %v1086, %v304
    %v1096 = vmul.f32 %v1087, %v308
    %v1097 = vmul.f32 %v1088, %v312
    %1098 = vrot.lane.b32.xlu0 %v1030, 1
    %v1099 = vpop.permute.xlu0 %1098
    %1101 = vrot.lane.b32.xlu0 %v1027, 1
    %v1102 = vpop.permute.xlu0 %1101
    %1103 = vrot.lane.b32.xlu0 %v1028, 1
    %v1104 = vpop.permute.xlu0 %1103
    %1105 = vrot.lane.b32.xlu0 %v1029, 1
    %v1106 = vpop.permute.xlu0 %1105
    %v1107 = vsel %vm330, %v1102, %v1104
    %v1108 = vsel %vm330, %v1104, %v1106
    %v1109 = vsel %vm330, %v1106, %v1099
    %v1114 = vsel %vm330, %v1099, %v1102
    %v1115 = vmul.f32 %v1114, %v345
    %v1116 = vmul.f32 %v1107, %v349
    %v1117 = vmul.f32 %v1108, %v353
    %v1118 = vmul.f32 %v1109, %v357
    %1119 = vrot.lane.b32.xlu0 %v1027, 127
    %v1120 = vpop.permute.xlu0 %1119
    %1121 = vrot.lane.b32.xlu0 %v1028, 127
    %v1122 = vpop.permute.xlu0 %1121
    %1123 = vrot.lane.b32.xlu0 %v1029, 127
    %v1124 = vpop.permute.xlu0 %1123
    %1125 = vrot.lane.b32.xlu0 %v1030, 127
    %v1126 = vpop.permute.xlu0 %1125
    %v1127 = vsel %vm374, %v1120, %v1122
    %v1128 = vsel %vm374, %v1122, %v1124
    %v1129 = vsel %vm374, %v1124, %v1126
    %v1135 = vsel %vm374, %v1126, %v1120
    %v1136 = vmul.f32 %v1127, %v390
    %v1137 = vmul.f32 %v1128, %v394
    %v1138 = vmul.f32 %v1129, %v398
    %v1139 = vmul.f32 %v1135, %v402
    %1140 = vrot.lane.b32.xlu0 %v1027, 113
    %v1141 = vpop.permute.xlu0 %1140
    %1142 = vrot.lane.b32.xlu0 %v1028, 113
    %v1143 = vpop.permute.xlu0 %1142
    %1144 = vrot.lane.b32.xlu0 %v1029, 113
    %v1145 = vpop.permute.xlu0 %1144
    %1146 = vrot.lane.b32.xlu0 %v1030, 113
    %v1147 = vpop.permute.xlu0 %1146
    %v1148 = vsel %vm419, %v1141, %v1143
    %v1149 = vsel %vm419, %v1143, %v1145
    %v1150 = vsel %vm419, %v1145, %v1147
    %v1156 = vsel %vm419, %v1147, %v1141
    %v1157 = vmul.f32 %v1148, %v435
    %v1158 = vmul.f32 %v1149, %v439
    %v1159 = vmul.f32 %v1150, %v443
    %v1160 = vmul.f32 %v1156, %v447
    %1161 = vrot.lane.b32.xlu0 %v1027, 112
    %v1162 = vpop.permute.xlu0 %1161
    %1163 = vrot.lane.b32.xlu0 %v1028, 112
    %v1164 = vpop.permute.xlu0 %1163
    %1165 = vrot.lane.b32.xlu0 %v1029, 112
    %v1166 = vpop.permute.xlu0 %1165
    %1167 = vrot.lane.b32.xlu0 %v1030, 112
    %v1168 = vpop.permute.xlu0 %1167
    %v1169 = vsel %vm464, %v1162, %v1164
    %v1170 = vsel %vm464, %v1164, %v1166
    %v1171 = vsel %vm464, %v1166, %v1168
    %v1177 = vsel %vm464, %v1168, %v1162
    %v1178 = vmul.f32 %v1169, %v480
    %v1179 = vmul.f32 %v1170, %v484
    %v1180 = vmul.f32 %v1171, %v488
    %v1181 = vmul.f32 %v1177, %v492
    %1182 = vrot.lane.b32.xlu0 %v1027, 111
    %v1183 = vpop.permute.xlu0 %1182
    %1184 = vrot.lane.b32.xlu0 %v1028, 111
    %v1185 = vpop.permute.xlu0 %1184
    %1186 = vrot.lane.b32.xlu0 %v1029, 111
    %v1187 = vpop.permute.xlu0 %1186
    %1188 = vrot.lane.b32.xlu0 %v1030, 111
    %v1189 = vpop.permute.xlu0 %1188
    %v1190 = vsel %vm509, %v1183, %v1185
    %v1191 = vsel %vm509, %v1185, %v1187
    %v1192 = vsel %vm509, %v1187, %v1189
    %v1198 = vsel %vm509, %v1189, %v1183
    %v1199 = vmul.f32 %v1190, %v525
    %v1200 = vmul.f32 %v1191, %v529
    %v1201 = vmul.f32 %v1192, %v533
    %v1202 = vmul.f32 %v1198, %v537
    %v1203 = vld [vmem:[#allocation7] sm:$0xff]
    %v1204 = vld [vmem:[%s6] sm:$0xff]
    %1206 = vset.pattern.permute.xlu0 0
    %1207 = vperm.xlu0 %1206, %v1204
    %v1208 = vpop.permute.xlu0 %1207
    %v1211 = vsel %vm553, %v1203, 0
    %1213 = vmatprep.subr.mxu0 %v1053
    %1214 = vmatpush1.msra.mxu0 %v1052
    %1215 = vmatprep.subr.mxu0 %v1074
    %1216 = vmatpush1.msra.mxu0 %v1073
    %1217 = vmatprep.subr.mxu0 %v1095
    %1218 = vmatpush1.msra.mxu0 %v1094
    %1219 = vmatprep.subr.mxu0 %v1116
    %1220 = vmatpush1.msra.mxu0 %v1115
    %1221 = vmatprep.subr.mxu0 %v1028
    %1222 = vmatpush1.msra.mxu0 %v1027
    %1223 = vmatprep.subr.mxu0 %v1137
    %1224 = vmatpush1.msra.mxu0 %v1136
    %1225 = vmatprep.subr.mxu0 %v1158
    %1226 = vmatpush1.msra.mxu0 %v1157
    %1227 = vmatprep.subr.mxu0 %v1179
    %1228 = vmatpush1.msra.mxu0 %v1178
    %1229 = vmatprep.subr.mxu0 %v1200
    %1230 = vmatpush1.msra.mxu0 %v1199
    %1231 = vmatprep.subr.mxu0 0.0
    %1232 = vmatpush1.msra.mxu0 0.0
    %1233 = vmatprep.subr.mxu0 0.0
    %1234 = vmatpush1.msra.mxu0 0.0
    %1235 = vmatprep.subr.mxu0 0.0
    %1236 = vmatpush1.msra.mxu0 0.0
    %1237 = vmatprep.subr.mxu0 0.0
    %1238 = vmatpush1.msra.mxu0 0.0
    %1239 = vmatprep.subr.mxu0 0.0
    %1240 = vmatpush1.msra.mxu0 0.0
    %1241 = vmatprep.subr.mxu0 0.0
    %1242 = vmatpush1.msra.mxu0 0.0
    %1243 = vmatprep.subr.mxu0 0.0
    %1244 = vmatpush1.msra.mxu0 0.0
    %1245 = vmatprep.subr.mxu0 0.0
    %1246 = vmatpush1.msra.mxu0 0.0
    %1247 = vmatprep.subr.mxu0 0.0
    %1248 = vmatpush1.msra.mxu0 0.0
    %1249 = vmatprep.subr.mxu0 0.0
    %1250 = vmatpush1.msra.mxu0 0.0
    %1251 = vmatprep.subr.mxu0 0.0
    %1252 = vmatpush1.msra.mxu0 0.0
    %1253 = vmatprep.subr.mxu0 0.0
    %1254 = vmatpush1.msra.mxu0 0.0
    %1255 = vmatprep.subr.mxu0 0.0
    %1256 = vmatpush1.msra.mxu0 0.0
    %1257 = vmatprep.subr.mxu0 0.0
    %1258 = vmatpush1.msra.mxu0 0.0
    %1259 = vmatprep.subr.mxu0 0.0
    %1260 = vmatpush1.msra.mxu0 0.0
    %1261 = vmatprep.subr.mxu0 0.0
    %1262 = vmatpush1.msra.mxu0 0.0
    %1263 = vmatprep.subr.mxu0 0.0
    %1264 = vmatpush1.msra.mxu0 0.0
    %1265 = vmatprep.subr.mxu0 0.0
    %1266 = vmatpush1.msra.mxu0 0.0
    %1267 = vmatprep.subr.mxu0 0.0
    %1268 = vmatpush1.msra.mxu0 0.0
    %1269 = vmatprep.subr.mxu0 0.0
    %1270 = vmatpush1.msra.mxu0 0.0
    %1271 = vmatprep.subr.mxu0 0.0
    %1272 = vmatpush1.msra.mxu0 0.0
    %1273 = vmatprep.subr.mxu0 0.0
    %1274 = vmatpush1.msra.mxu0 0.0
    %1275 = vmatprep.subr.mxu0 0.0
    %1276 = vmatpush1.msra.mxu0 0.0
    %1277 = vmatprep.mubr.f32.mxu0 0.0
    %1278 = vmatmul.mubr.f32.gmra.mrb[0].mxu0 %v1211
    %v1279 = vpop.f32.mrb[0].mxu0
    %v1280 = vadd.f32 %v1208, %v1279
    %v1281 = vpop.f32.mrb[0].mxu0
    %v1282 = vadd.f32 %v1208, %v1281
    %1283 = vdwg.mxu0
    %1284 = vmatprep.subr.mxu0 %v1055
    %1285 = vmatpush1.msra.mxu0 %v1054
    %1286 = vmatprep.subr.mxu0 %v1076
    %1287 = vmatpush1.msra.mxu0 %v1075
    %1288 = vmatprep.subr.mxu0 %v1097
    %1289 = vmatpush1.msra.mxu0 %v1096
    %1290 = vmatprep.subr.mxu0 %v1118
    %1291 = vmatpush1.msra.mxu0 %v1117
    %1292 = vmatprep.subr.mxu0 %v1030
    %1293 = vmatpush1.msra.mxu0 %v1029
    %1294 = vmatprep.subr.mxu0 %v1139
    %1295 = vmatpush1.msra.mxu0 %v1138
    %1296 = vmatprep.subr.mxu0 %v1160
    %1297 = vmatpush1.msra.mxu0 %v1159
    %1298 = vmatprep.subr.mxu0 %v1181
    %1299 = vmatpush1.msra.mxu0 %v1180
    %1300 = vmatprep.subr.mxu0 %v1202
    %1301 = vmatpush1.msra.mxu0 %v1201
    %1302 = vmatprep.subr.mxu0 0.0
    %1303 = vmatpush1.msra.mxu0 0.0
    %1304 = vmatprep.subr.mxu0 0.0
    %1305 = vmatpush1.msra.mxu0 0.0
    %1306 = vmatprep.subr.mxu0 0.0
    %1307 = vmatpush1.msra.mxu0 0.0
    %1308 = vmatprep.subr.mxu0 0.0
    %1309 = vmatpush1.msra.mxu0 0.0
    %1310 = vmatprep.subr.mxu0 0.0
    %1311 = vmatpush1.msra.mxu0 0.0
    %1312 = vmatprep.subr.mxu0 0.0
    %1313 = vmatpush1.msra.mxu0 0.0
    %1314 = vmatprep.subr.mxu0 0.0
    %1315 = vmatpush1.msra.mxu0 0.0
    %1316 = vmatprep.subr.mxu0 0.0
    %1317 = vmatpush1.msra.mxu0 0.0
    %1318 = vmatprep.subr.mxu0 0.0
    %1319 = vmatpush1.msra.mxu0 0.0
    %1320 = vmatprep.subr.mxu0 0.0
    %1321 = vmatpush1.msra.mxu0 0.0
    %1322 = vmatprep.subr.mxu0 0.0
    %1323 = vmatpush1.msra.mxu0 0.0
    %1324 = vmatprep.subr.mxu0 0.0
    %1325 = vmatpush1.msra.mxu0 0.0
    %1326 = vmatprep.subr.mxu0 0.0
    %1327 = vmatpush1.msra.mxu0 0.0
    %1328 = vmatprep.subr.mxu0 0.0
    %1329 = vmatpush1.msra.mxu0 0.0
    %1330 = vmatprep.subr.mxu0 0.0
    %1331 = vmatpush1.msra.mxu0 0.0
    %1332 = vmatprep.subr.mxu0 0.0
    %1333 = vmatpush1.msra.mxu0 0.0
    %1334 = vmatprep.subr.mxu0 0.0
    %1335 = vmatpush1.msra.mxu0 0.0
    %1336 = vmatprep.subr.mxu0 0.0
    %1337 = vmatpush1.msra.mxu0 0.0
    %1338 = vmatprep.subr.mxu0 0.0
    %1339 = vmatpush1.msra.mxu0 0.0
    %1340 = vmatprep.subr.mxu0 0.0
    %1341 = vmatpush1.msra.mxu0 0.0
    %1342 = vmatprep.subr.mxu0 0.0
    %1343 = vmatpush1.msra.mxu0 0.0
    %1344 = vmatprep.subr.mxu0 0.0
    %1345 = vmatpush1.msra.mxu0 0.0
    %1346 = vmatprep.subr.mxu0 0.0
    %1347 = vmatpush1.msra.mxu0 0.0
    %1348 = vmatprep.mubr.f32.mxu0 0.0
    %1349 = vmatmul.mubr.f32.gmra.mrb[0].mxu0 %v1211
    %v1350 = vpop.f32.mrb[0].mxu0
    %v1351 = vadd.f32 %v1208, %v1350
    %v1352 = vpop.f32.mrb[0].mxu0
    %v1353 = vadd.f32 %v1208, %v1352
    %1354 = vdwg.mxu0
    %v1355 = vmax.f32 %v1280, 0.0
    %v1356 = vmax.f32 %v1282, 0.0
    %v1357 = vmax.f32 %v1351, 0.0
    %v1358 = vmax.f32 %v1353, 0.0
    %1363 = vrot.lane.b32.xlu0 %v1355, 127
    %v1364 = vpop.permute.xlu0 %1363
    %1365 = vrot.lane.b32.xlu0 %v1356, 127
    %v1366 = vpop.permute.xlu0 %1365
    %1367 = vrot.lane.b32.xlu0 %v1357, 127
    %v1368 = vpop.permute.xlu0 %1367
    %1369 = vrot.lane.b32.xlu0 %v1358, 127
    %v1370 = vpop.permute.xlu0 %1369
    %v1371 = vsel %vm374, %v1364, %v1366
    %v1372 = vsel %vm374, %v1366, %v1368
    %v1373 = vsel %vm374, %v1368, %v1370
    %v1379 = vsel %vm374, %v1370, %v1364
    %v1380 = vmax.f32 %v1355, %v1371
    %v1381 = vmax.f32 %v1356, %v1372
    %v1382 = vmax.f32 %v1357, %v1373
    %v1383 = vmax.f32 %v1358, %v1379
    %1388 = vrot.lane.b32.xlu0 %v1380, 112
    %v1389 = vpop.permute.xlu0 %1388
    %1390 = vrot.lane.b32.xlu0 %v1381, 112
    %v1391 = vpop.permute.xlu0 %1390
    %1392 = vrot.lane.b32.xlu0 %v1382, 112
    %v1393 = vpop.permute.xlu0 %1392
    %1394 = vrot.lane.b32.xlu0 %v1383, 112
    %v1395 = vpop.permute.xlu0 %1394
    %v1396 = vsel %vm464, %v1389, %v1391
    %v1397 = vsel %vm464, %v1391, %v1393
    %v1398 = vsel %vm464, %v1393, %v1395
    %v1404 = vsel %vm464, %v1395, %v1389
    %v1405 = vmax.f32 %v1380, %v1396
    %v1406 = vmax.f32 %v1381, %v1397
    %v1407 = vmax.f32 %v1382, %v1398
    %v1408 = vmax.f32 %v1383, %v1404
    %v1409 = vld [vmem:[%s8] sm:$0xff]
    %v1410 = vld [vmem:[%s8 + $0x8] sm:$0xff]
    %v1411 = vld [vmem:[%s8 + $0x10] sm:$0xff]
    %v1412 = vld [vmem:[%s8 + $0x18] sm:$0xff]
    %v1413 = vld [vmem:[%s8 + $0x20] sm:$0xff]
    %v1414 = vld [vmem:[%s8 + $0x28] sm:$0xff]
    %v1415 = vld [vmem:[%s8 + $0x30] sm:$0xff]
    %v1416 = vld [vmem:[%s8 + $0x38] sm:$0xff]
    %v1417 = vld [vmem:[%s8 + $0x40] sm:$0xff]
    %v1418 = vld [vmem:[%s8 + $0x48] sm:$0xff]
    %v1419 = vld [vmem:[%s8 + $0x50] sm:$0xff]
    %v1420 = vld [vmem:[%s8 + $0x58] sm:$0xff]
    %v1421 = vld [vmem:[%s8 + $0x60] sm:$0xff]
    %v1422 = vld [vmem:[%s8 + $0x68] sm:$0xff]
    %v1423 = vld [vmem:[%s8 + $0x70] sm:$0xff]
    %v1424 = vld [vmem:[%s8 + $0x78] sm:$0xff]
    %v1425 = vld [vmem:[%s8 + $0x80] sm:$0xff]
    %v1426 = vld [vmem:[%s8 + $0x88] sm:$0xff]
    %v1427 = vld [vmem:[%s8 + $0x90] sm:$0xff]
    %v1428 = vld [vmem:[%s8 + $0x98] sm:$0xff]
    %v1429 = vld [vmem:[%s8 + $0xa0] sm:$0xff]
    %v1430 = vld [vmem:[%s8 + $0xa8] sm:$0xff]
    %v1431 = vld [vmem:[%s8 + $0xb0] sm:$0xff]
    %v1432 = vld [vmem:[%s8 + $0xb8] sm:$0xff]
    %v1433 = vld [vmem:[%s8 + $0xc0] sm:$0xff]
    %v1434 = vld [vmem:[%s8 + $0xc8] sm:$0xff]
    %v1435 = vld [vmem:[%s8 + $0xd0] sm:$0xff]
    %v1436 = vld [vmem:[%s8 + $0xd8] sm:$0xff]
    %v1437 = vld [vmem:[%s8 + $0xe0] sm:$0xff]
    %v1438 = vld [vmem:[%s8 + $0xe8] sm:$0xff]
    %v1439 = vld [vmem:[%s8 + $0xf0] sm:$0xff]
    %v1440 = vld [vmem:[%s8 + $0xf8] sm:$0xff]
    %v1441 = vld [vmem:[%s8 + $0x100] sm:$0xff]
    %v1442 = vld [vmem:[%s8 + $0x108] sm:$0xff]
    %v1443 = vld [vmem:[%s8 + $0x110] sm:$0xff]
    %v1444 = vld [vmem:[%s8 + $0x118] sm:$0xff]
    %v1445 = vld [vmem:[%s8 + $0x120] sm:$0xff]
    %v1446 = vld [vmem:[%s8 + $0x128] sm:$0xff]
    %v1447 = vld [vmem:[%s8 + $0x130] sm:$0xff]
    %v1448 = vld [vmem:[%s8 + $0x138] sm:$0xff]
    %v1449 = vld [vmem:[%s8 + $0x140] sm:$0xff]
    %v1450 = vld [vmem:[%s8 + $0x148] sm:$0xff]
    %v1451 = vld [vmem:[%s8 + $0x150] sm:$0xff]
    %v1452 = vld [vmem:[%s8 + $0x158] sm:$0xff]
    %v1453 = vld [vmem:[%s8 + $0x160] sm:$0xff]
    %v1454 = vld [vmem:[%s8 + $0x168] sm:$0xff]
    %v1455 = vld [vmem:[%s8 + $0x170] sm:$0xff]
    %v1456 = vld [vmem:[%s8 + $0x178] sm:$0xff]
    %v1457 = vld [vmem:[%s8 + $0x180] sm:$0xff]
    %v1458 = vld [vmem:[%s8 + $0x188] sm:$0xff]
    %v1459 = vld [vmem:[%s8 + $0x190] sm:$0xff]
    %v1460 = vld [vmem:[%s8 + $0x198] sm:$0xff]
    %v1461 = vld [vmem:[%s8 + $0x1a0] sm:$0xff]
    %v1462 = vld [vmem:[%s8 + $0x1a8] sm:$0xff]
    %v1463 = vld [vmem:[%s8 + $0x1b0] sm:$0xff]
    %v1464 = vld [vmem:[%s8 + $0x1b8] sm:$0xff]
    %v1465 = vld [vmem:[%s8 + $0x1c0] sm:$0xff]
    %v1466 = vld [vmem:[%s8 + $0x1c8] sm:$0xff]
    %v1467 = vld [vmem:[%s8 + $0x1d0] sm:$0xff]
    %v1468 = vld [vmem:[%s8 + $0x1d8] sm:$0xff]
    %v1469 = vld [vmem:[%s8 + $0x1e0] sm:$0xff]
    %v1470 = vld [vmem:[%s8 + $0x1e8] sm:$0xff]
    %v1471 = vld [vmem:[%s8 + $0x1f0] sm:$0xff]
    %v1472 = vld [vmem:[%s8 + $0x1f8] sm:$0xff]
    %1473 = vmatprep.subr.mxu0 0.0
    %1474 = vmatpush1.msra.mxu0 %v1409
    %1475 = vmatprep.subr.mxu0 0.0
    %1476 = vmatpush1.msra.mxu0 %v1410
    %1477 = vmatprep.subr.mxu0 0.0
    %1478 = vmatpush1.msra.mxu0 %v1411
    %1479 = vmatprep.subr.mxu0 0.0
    %1480 = vmatpush1.msra.mxu0 %v1412
    %1481 = vmatprep.subr.mxu0 0.0
    %1482 = vmatpush1.msra.mxu0 %v1413
    %1483 = vmatprep.subr.mxu0 0.0
    %1484 = vmatpush1.msra.mxu0 %v1414
    %1485 = vmatprep.subr.mxu0 0.0
    %1486 = vmatpush1.msra.mxu0 %v1415
    %1487 = vmatprep.subr.mxu0 0.0
    %1488 = vmatpush1.msra.mxu0 %v1416
    %1489 = vmatprep.subr.mxu0 0.0
    %1490 = vmatpush1.msra.mxu0 %v1417
    %1491 = vmatprep.subr.mxu0 0.0
    %1492 = vmatpush1.msra.mxu0 %v1418
    %1493 = vmatprep.subr.mxu0 0.0
    %1494 = vmatpush1.msra.mxu0 %v1419
    %1495 = vmatprep.subr.mxu0 0.0
    %1496 = vmatpush1.msra.mxu0 %v1420
    %1497 = vmatprep.subr.mxu0 0.0
    %1498 = vmatpush1.msra.mxu0 %v1421
    %1499 = vmatprep.subr.mxu0 0.0
    %1500 = vmatpush1.msra.mxu0 %v1422
    %1501 = vmatprep.subr.mxu0 0.0
    %1502 = vmatpush1.msra.mxu0 %v1423
    %1503 = vmatprep.subr.mxu0 0.0
    %1504 = vmatpush1.msra.mxu0 %v1424
    %1505 = vmatprep.subr.mxu0 0.0
    %1506 = vmatpush1.msra.mxu0 %v1425
    %1507 = vmatprep.subr.mxu0 0.0
    %1508 = vmatpush1.msra.mxu0 %v1426
    %1509 = vmatprep.subr.mxu0 0.0
    %1510 = vmatpush1.msra.mxu0 %v1427
    %1511 = vmatprep.subr.mxu0 0.0
    %1512 = vmatpush1.msra.mxu0 %v1428
    %1513 = vmatprep.subr.mxu0 0.0
    %1514 = vmatpush1.msra.mxu0 %v1429
    %1515 = vmatprep.subr.mxu0 0.0
    %1516 = vmatpush1.msra.mxu0 %v1430
    %1517 = vmatprep.subr.mxu0 0.0
    %1518 = vmatpush1.msra.mxu0 %v1431
    %1519 = vmatprep.subr.mxu0 0.0
    %1520 = vmatpush1.msra.mxu0 %v1432
    %1521 = vmatprep.subr.mxu0 0.0
    %1522 = vmatpush1.msra.mxu0 %v1433
    %1523 = vmatprep.subr.mxu0 0.0
    %1524 = vmatpush1.msra.mxu0 %v1434
    %1525 = vmatprep.subr.mxu0 0.0
    %1526 = vmatpush1.msra.mxu0 %v1435
    %1527 = vmatprep.subr.mxu0 0.0
    %1528 = vmatpush1.msra.mxu0 %v1436
    %1529 = vmatprep.subr.mxu0 0.0
    %1530 = vmatpush1.msra.mxu0 %v1437
    %1531 = vmatprep.subr.mxu0 0.0
    %1532 = vmatpush1.msra.mxu0 %v1438
    %1533 = vmatprep.subr.mxu0 0.0
    %1534 = vmatpush1.msra.mxu0 %v1439
    %1535 = vmatprep.subr.mxu0 0.0
    %1536 = vmatpush1.msra.mxu0 %v1440
    %1537 = vmatprep.mubr.f32.mxu0 %v1406
    %1538 = vmatmul.mubr.f32.gmra.mrb[0].mxu0 %v1405
    %v1539 = vpop.f32.mrb[0].mxu0
    %v1540 = vadd.f32 0.0, %v1539
    %v1541 = vpop.f32.mrb[0].mxu0
    %1542 = vdwg.mxu0
    %1543 = vmatprep.subr.mxu0 0.0
    %1544 = vmatpush1.msra.mxu0 %v1441
    %1545 = vmatprep.subr.mxu0 0.0
    %1546 = vmatpush1.msra.mxu0 %v1442
    %1547 = vmatprep.subr.mxu0 0.0
    %1548 = vmatpush1.msra.mxu0 %v1443
    %1549 = vmatprep.subr.mxu0 0.0
    %1550 = vmatpush1.msra.mxu0 %v1444
    %1551 = vmatprep.subr.mxu0 0.0
    %1552 = vmatpush1.msra.mxu0 %v1445
    %1553 = vmatprep.subr.mxu0 0.0
    %1554 = vmatpush1.msra.mxu0 %v1446
    %1555 = vmatprep.subr.mxu0 0.0
    %1556 = vmatpush1.msra.mxu0 %v1447
    %1557 = vmatprep.subr.mxu0 0.0
    %1558 = vmatpush1.msra.mxu0 %v1448
    %1559 = vmatprep.subr.mxu0 0.0
    %1560 = vmatpush1.msra.mxu0 %v1449
    %1561 = vmatprep.subr.mxu0 0.0
    %1562 = vmatpush1.msra.mxu0 %v1450
    %1563 = vmatprep.subr.mxu0 0.0
    %1564 = vmatpush1.msra.mxu0 %v1451
    %1565 = vmatprep.subr.mxu0 0.0
    %1566 = vmatpush1.msra.mxu0 %v1452
    %1567 = vmatprep.subr.mxu0 0.0
    %1568 = vmatpush1.msra.mxu0 %v1453
    %1569 = vmatprep.subr.mxu0 0.0
    %1570 = vmatpush1.msra.mxu0 %v1454
    %1571 = vmatprep.subr.mxu0 0.0
    %1572 = vmatpush1.msra.mxu0 %v1455
    %1573 = vmatprep.subr.mxu0 0.0
    %1574 = vmatpush1.msra.mxu0 %v1456
    %1575 = vmatprep.subr.mxu0 0.0
    %1576 = vmatpush1.msra.mxu0 %v1457
    %1577 = vmatprep.subr.mxu0 0.0
    %1578 = vmatpush1.msra.mxu0 %v1458
    %1579 = vmatprep.subr.mxu0 0.0
    %1580 = vmatpush1.msra.mxu0 %v1459
    %1581 = vmatprep.subr.mxu0 0.0
    %1582 = vmatpush1.msra.mxu0 %v1460
    %1583 = vmatprep.subr.mxu0 0.0
    %1584 = vmatpush1.msra.mxu0 %v1461
    %1585 = vmatprep.subr.mxu0 0.0
    %1586 = vmatpush1.msra.mxu0 %v1462
    %1587 = vmatprep.subr.mxu0 0.0
    %1588 = vmatpush1.msra.mxu0 %v1463
    %1589 = vmatprep.subr.mxu0 0.0
    %1590 = vmatpush1.msra.mxu0 %v1464
    %1591 = vmatprep.subr.mxu0 0.0
    %1592 = vmatpush1.msra.mxu0 %v1465
    %1593 = vmatprep.subr.mxu0 0.0
    %1594 = vmatpush1.msra.mxu0 %v1466
    %1595 = vmatprep.subr.mxu0 0.0
    %1596 = vmatpush1.msra.mxu0 %v1467
    %1597 = vmatprep.subr.mxu0 0.0
    %1598 = vmatpush1.msra.mxu0 %v1468
    %1599 = vmatprep.subr.mxu0 0.0
    %1600 = vmatpush1.msra.mxu0 %v1469
    %1601 = vmatprep.subr.mxu0 0.0
    %1602 = vmatpush1.msra.mxu0 %v1470
    %1603 = vmatprep.subr.mxu0 0.0
    %1604 = vmatpush1.msra.mxu0 %v1471
    %1605 = vmatprep.subr.mxu0 0.0
    %1606 = vmatpush1.msra.mxu0 %v1472
    %1607 = vmatprep.mubr.f32.mxu0 %v1408
    %1608 = vmatmul.mubr.f32.gmra.mrb[0].mxu0 %v1407
    %v1609 = vpop.f32.mrb[0].mxu0
    %v1610 = vadd.f32 %v1540, %v1609
    %v1611 = vpop.f32.mrb[0].mxu0
    %1612 = vdwg.mxu0
    %1614 = vrot.lane.b32.xlu0 %v1610, 9
    %v1615 = vpop.permute.xlu0 %1614
    %v1617 = vld [vmem:[#allocation13] sm:$0x1]
    %v1618 = vlaneseq
    %v1619 = vshrl.u32 %v1618, 7
    %v1620 = vsub.s32 0, %v1619
    %v1621 = vrot.slane %v1617, %v1620
    %v1622 = vmul.f32 %v1615, %v1621
    %1623 = vrot.lane.b32.xlu0 %v1610, 8
    %v1624 = vpop.permute.xlu0 %1623
    %vm1626 = vcmask 64512
    %v1627 = vld [vmem:[#allocation13 + $0x1] sm:$0x1]
    %v1628 = vlaneseq
    %v1629 = vshrl.u32 %v1628, 7
    %v1630 = vsub.s32 0, %v1629
    %v1631 = vrot.slane %v1627, %v1630
    %v1632 = vmul.f32 %v1624, %v1631
    %1633 = vrot.lane.b32.xlu0 %v1610, 7
    %v1634 = vpop.permute.xlu0 %1633
    %v1636 = vld [vmem:[#allocation13 + $0x2] sm:$0x1]
    %v1637 = vlaneseq
    %v1638 = vshrl.u32 %v1637, 7
    %v1639 = vsub.s32 0, %v1638
    %v1640 = vrot.slane %v1636, %v1639
    %v1641 = vmul.f32 %v1634, %v1640
    %1642 = vrot.lane.b32.xlu0 %v1610, 1
    %v1643 = vpop.permute.xlu0 %1642
    %v1645 = vld [vmem:[#allocation13 + $0x3] sm:$0x1]
    %v1646 = vlaneseq
    %v1647 = vshrl.u32 %v1646, 7
    %v1648 = vsub.s32 0, %v1647
    %v1649 = vrot.slane %v1645, %v1648
    %v1650 = vmul.f32 %v1643, %v1649
    %1651 = vrot.lane.b32.xlu0 %v1610, 127
    %v1652 = vpop.permute.xlu0 %1651
    %v1654 = vld [vmem:[#allocation13 + $0x5] sm:$0x1]
    %v1655 = vlaneseq
    %v1656 = vshrl.u32 %v1655, 7
    %v1657 = vsub.s32 0, %v1656
    %v1658 = vrot.slane %v1654, %v1657
    %v1659 = vmul.f32 %v1652, %v1658
    %1660 = vrot.lane.b32.xlu0 %v1610, 121
    %v1661 = vpop.permute.xlu0 %1660
    %v1663 = vld [vmem:[#allocation13 + $0x6] sm:$0x1]
    %v1664 = vlaneseq
    %v1665 = vshrl.u32 %v1664, 7
    %v1666 = vsub.s32 0, %v1665
    %v1667 = vrot.slane %v1663, %v1666
    %v1668 = vmul.f32 %v1661, %v1667
    %1669 = vrot.lane.b32.xlu0 %v1610, 120
    %v1670 = vpop.permute.xlu0 %1669
    %v1672 = vld [vmem:[#allocation13 + $0x7] sm:$0x1]
    %v1673 = vlaneseq
    %v1674 = vshrl.u32 %v1673, 7
    %v1675 = vsub.s32 0, %v1674
    %v1676 = vrot.slane %v1672, %v1675
    %v1677 = vmul.f32 %v1670, %v1676
    %1678 = vrot.lane.b32.xlu0 %v1610, 119
    %v1679 = vpop.permute.xlu0 %1678
    %v1681 = vld [vmem:[#allocation13 + $0x8] sm:$0x1]
    %v1682 = vlaneseq
    %v1683 = vshrl.u32 %v1682, 7
    %v1684 = vsub.s32 0, %v1683
    %v1685 = vrot.slane %v1681, %v1684
    %v1686 = vmul.f32 %v1679, %v1685
    %v1687 = vld [vmem:[#allocation9] sm:$0xff]
    %v1688 = vld [vmem:[%s10] sm:$0xff]
    %1690 = vset.pattern.permute.xlu0 0
    %1691 = vperm.xlu0 %1690, %v1688
    %v1692 = vpop.permute.xlu0 %1691
    %v1695 = vsel %vm553, %v1687, 0
    %1697 = vmatprep.subr.mxu0 0.0
    %1698 = vmatpush1.msra.mxu0 %v1622
    %1699 = vmatprep.subr.mxu0 0.0
    %1700 = vmatpush1.msra.mxu0 %v1632
    %1701 = vmatprep.subr.mxu0 0.0
    %1702 = vmatpush1.msra.mxu0 %v1641
    %1703 = vmatprep.subr.mxu0 0.0
    %1704 = vmatpush1.msra.mxu0 %v1650
    %1705 = vmatprep.subr.mxu0 0.0
    %1706 = vmatpush1.msra.mxu0 %v1610
    %1707 = vmatprep.subr.mxu0 0.0
    %1708 = vmatpush1.msra.mxu0 %v1659
    %1709 = vmatprep.subr.mxu0 0.0
    %1710 = vmatpush1.msra.mxu0 %v1668
    %1711 = vmatprep.subr.mxu0 0.0
    %1712 = vmatpush1.msra.mxu0 %v1677
    %1713 = vmatprep.subr.mxu0 0.0
    %1714 = vmatpush1.msra.mxu0 %v1686
    %1715 = vmatprep.subr.mxu0 0.0
    %1716 = vmatpush1.msra.mxu0 0.0
    %1717 = vmatprep.subr.mxu0 0.0
    %1718 = vmatpush1.msra.mxu0 0.0
    %1719 = vmatprep.subr.mxu0 0.0
    %1720 = vmatpush1.msra.mxu0 0.0
    %1721 = vmatprep.subr.mxu0 0.0
    %1722 = vmatpush1.msra.mxu0 0.0
    %1723 = vmatprep.subr.mxu0 0.0
    %1724 = vmatpush1.msra.mxu0 0.0
    %1725 = vmatprep.subr.mxu0 0.0
    %1726 = vmatpush1.msra.mxu0 0.0
    %1727 = vmatprep.subr.mxu0 0.0
    %1728 = vmatpush1.msra.mxu0 0.0
    %1729 = vmatprep.subr.mxu0 0.0
    %1730 = vmatpush1.msra.mxu0 0.0
    %1731 = vmatprep.subr.mxu0 0.0
    %1732 = vmatpush1.msra.mxu0 0.0
    %1733 = vmatprep.subr.mxu0 0.0
    %1734 = vmatpush1.msra.mxu0 0.0
    %1735 = vmatprep.subr.mxu0 0.0
    %1736 = vmatpush1.msra.mxu0 0.0
    %1737 = vmatprep.subr.mxu0 0.0
    %1738 = vmatpush1.msra.mxu0 0.0
    %1739 = vmatprep.subr.mxu0 0.0
    %1740 = vmatpush1.msra.mxu0 0.0
    %1741 = vmatprep.subr.mxu0 0.0
    %1742 = vmatpush1.msra.mxu0 0.0
    %1743 = vmatprep.subr.mxu0 0.0
    %1744 = vmatpush1.msra.mxu0 0.0
    %1745 = vmatprep.subr.mxu0 0.0
    %1746 = vmatpush1.msra.mxu0 0.0
    %1747 = vmatprep.subr.mxu0 0.0
    %1748 = vmatpush1.msra.mxu0 0.0
    %1749 = vmatprep.subr.mxu0 0.0
    %1750 = vmatpush1.msra.mxu0 0.0
    %1751 = vmatprep.subr.mxu0 0.0
    %1752 = vmatpush1.msra.mxu0 0.0
    %1753 = vmatprep.subr.mxu0 0.0
    %1754 = vmatpush1.msra.mxu0 0.0
    %1755 = vmatprep.subr.mxu0 0.0
    %1756 = vmatpush1.msra.mxu0 0.0
    %1757 = vmatprep.subr.mxu0 0.0
    %1758 = vmatpush1.msra.mxu0 0.0
    %1759 = vmatprep.subr.mxu0 0.0
    %1760 = vmatpush1.msra.mxu0 0.0
    %1761 = vmatprep.mubr.f32.mxu0 0.0
    %1762 = vmatmul.mubr.f32.gmra.mrb[0].mxu0 %v1695
    %v1763 = vpop.f32.mrb[0].mxu0
    %v1764 = vadd.f32 %v1692, %v1763
    %v1765 = vpop.f32.mrb[0].mxu0
    %1766 = vdwg.mxu0
    %v1767 = vmax.f32 %v1764, 0.0
    %1769 = vrot.lane.b32.xlu0 %v1767, 9
    %v1770 = vpop.permute.xlu0 %1769
    %v1772 = vmul.f32 %v1770, %v1621
    %1773 = vrot.lane.b32.xlu0 %v1767, 8
    %v1774 = vpop.permute.xlu0 %1773
    %v1776 = vmul.f32 %v1774, %v1631
    %1777 = vrot.lane.b32.xlu0 %v1767, 7
    %v1778 = vpop.permute.xlu0 %1777
    %v1780 = vmul.f32 %v1778, %v1640
    %1781 = vrot.lane.b32.xlu0 %v1767, 1
    %v1782 = vpop.permute.xlu0 %1781
    %v1784 = vmul.f32 %v1782, %v1649
    %1785 = vrot.lane.b32.xlu0 %v1767, 127
    %v1786 = vpop.permute.xlu0 %1785
    %v1788 = vmul.f32 %v1786, %v1658
    %1789 = vrot.lane.b32.xlu0 %v1767, 121
    %v1790 = vpop.permute.xlu0 %1789
    %v1792 = vmul.f32 %v1790, %v1667
    %1793 = vrot.lane.b32.xlu0 %v1767, 120
    %v1794 = vpop.permute.xlu0 %1793
    %v1796 = vmul.f32 %v1794, %v1676
    %1797 = vrot.lane.b32.xlu0 %v1767, 119
    %v1798 = vpop.permute.xlu0 %1797
    %v1800 = vmul.f32 %v1798, %v1685
    %v1801 = vld [vmem:[#allocation10] sm:$0xff]
    %v1802 = vld [vmem:[%s12] sm:$0xff]
    %1804 = vset.pattern.permute.xlu0 0
    %1805 = vperm.xlu0 %1804, %v1802
    %v1806 = vpop.permute.xlu0 %1805
    %v1809 = vsel %vm553, %v1801, 0
    %1811 = vmatprep.subr.mxu0 0.0
    %1812 = vmatpush1.msra.mxu0 %v1772
    %1813 = vmatprep.subr.mxu0 0.0
    %1814 = vmatpush1.msra.mxu0 %v1776
    %1815 = vmatprep.subr.mxu0 0.0
    %1816 = vmatpush1.msra.mxu0 %v1780
    %1817 = vmatprep.subr.mxu0 0.0
    %1818 = vmatpush1.msra.mxu0 %v1784
    %1819 = vmatprep.subr.mxu0 0.0
    %1820 = vmatpush1.msra.mxu0 %v1767
    %1821 = vmatprep.subr.mxu0 0.0
    %1822 = vmatpush1.msra.mxu0 %v1788
    %1823 = vmatprep.subr.mxu0 0.0
    %1824 = vmatpush1.msra.mxu0 %v1792
    %1825 = vmatprep.subr.mxu0 0.0
    %1826 = vmatpush1.msra.mxu0 %v1796
    %1827 = vmatprep.subr.mxu0 0.0
    %1828 = vmatpush1.msra.mxu0 %v1800
    %1829 = vmatprep.subr.mxu0 0.0
    %1830 = vmatpush1.msra.mxu0 0.0
    %1831 = vmatprep.subr.mxu0 0.0
    %1832 = vmatpush1.msra.mxu0 0.0
    %1833 = vmatprep.subr.mxu0 0.0
    %1834 = vmatpush1.msra.mxu0 0.0
    %1835 = vmatprep.subr.mxu0 0.0
    %1836 = vmatpush1.msra.mxu0 0.0
    %1837 = vmatprep.subr.mxu0 0.0
    %1838 = vmatpush1.msra.mxu0 0.0
    %1839 = vmatprep.subr.mxu0 0.0
    %1840 = vmatpush1.msra.mxu0 0.0
    %1841 = vmatprep.subr.mxu0 0.0
    %1842 = vmatpush1.msra.mxu0 0.0
    %1843 = vmatprep.subr.mxu0 0.0
    %1844 = vmatpush1.msra.mxu0 0.0
    %1845 = vmatprep.subr.mxu0 0.0
    %1846 = vmatpush1.msra.mxu0 0.0
    %1847 = vmatprep.subr.mxu0 0.0
    %1848 = vmatpush1.msra.mxu0 0.0
    %1849 = vmatprep.subr.mxu0 0.0
    %1850 = vmatpush1.msra.mxu0 0.0
    %1851 = vmatprep.subr.mxu0 0.0
    %1852 = vmatpush1.msra.mxu0 0.0
    %1853 = vmatprep.subr.mxu0 0.0
    %1854 = vmatpush1.msra.mxu0 0.0
    %1855 = vmatprep.subr.mxu0 0.0
    %1856 = vmatpush1.msra.mxu0 0.0
    %1857 = vmatprep.subr.mxu0 0.0
    %1858 = vmatpush1.msra.mxu0 0.0
    %1859 = vmatprep.subr.mxu0 0.0
    %1860 = vmatpush1.msra.mxu0 0.0
    %1861 = vmatprep.subr.mxu0 0.0
    %1862 = vmatpush1.msra.mxu0 0.0
    %1863 = vmatprep.subr.mxu0 0.0
    %1864 = vmatpush1.msra.mxu0 0.0
    %1865 = vmatprep.subr.mxu0 0.0
    %1866 = vmatpush1.msra.mxu0 0.0
    %1867 = vmatprep.subr.mxu0 0.0
    %1868 = vmatpush1.msra.mxu0 0.0
    %1869 = vmatprep.subr.mxu0 0.0
    %1870 = vmatpush1.msra.mxu0 0.0
    %1871 = vmatprep.subr.mxu0 0.0
    %1872 = vmatpush1.msra.mxu0 0.0
    %1873 = vmatprep.subr.mxu0 0.0
    %1874 = vmatpush1.msra.mxu0 0.0
    %1875 = vmatprep.mubr.f32.mxu0 0.0
    %1876 = vmatmul.mubr.f32.gmra.mrb[0].mxu0 %v1809
    %v1877 = vpop.f32.mrb[0].mxu0
    %v1878 = vadd.f32 %v1806, %v1877
    %v1879 = vpop.f32.mrb[0].mxu0
    %1880 = vdwg.mxu0
    %v1881 = vmax.f32 %v1878, 0.0
    %1883 = vrot.lane.b32.xlu0 %v1881, 9
    %v1884 = vpop.permute.xlu0 %1883
    %v1886 = vmul.f32 %v1884, %v1621
    %1887 = vrot.lane.b32.xlu0 %v1881, 8
    %v1888 = vpop.permute.xlu0 %1887
    %v1890 = vmul.f32 %v1888, %v1631
    %1891 = vrot.lane.b32.xlu0 %v1881, 7
    %v1892 = vpop.permute.xlu0 %1891
    %v1894 = vmul.f32 %v1892, %v1640
    %1895 = vrot.lane.b32.xlu0 %v1881, 1
    %v1896 = vpop.permute.xlu0 %1895
    %v1898 = vmul.f32 %v1896, %v1649
    %1899 = vrot.lane.b32.xlu0 %v1881, 127
    %v1900 = vpop.permute.xlu0 %1899
    %v1902 = vmul.f32 %v1900, %v1658
    %1903 = vrot.lane.b32.xlu0 %v1881, 121
    %v1904 = vpop.permute.xlu0 %1903
    %v1906 = vmul.f32 %v1904, %v1667
    %1907 = vrot.lane.b32.xlu0 %v1881, 120
    %v1908 = vpop.permute.xlu0 %1907
    %v1910 = vmul.f32 %v1908, %v1676
    %1911 = vrot.lane.b32.xlu0 %v1881, 119
    %v1912 = vpop.permute.xlu0 %1911
    %v1914 = vmul.f32 %v1912, %v1685
    %v1915 = vld [vmem:[#allocation12] sm:$0xff]
    %v1916 = vld [vmem:[%s14] sm:$0xff]
    %1918 = vset.pattern.permute.xlu0 0
    %1919 = vperm.xlu0 %1918, %v1916
    %v1920 = vpop.permute.xlu0 %1919
    %v1923 = vsel %vm553, %v1915, 0
    %1925 = vmatprep.subr.mxu0 0.0
    %1926 = vmatpush1.msra.mxu0 %v1886
    %1927 = vmatprep.subr.mxu0 0.0
    %1928 = vmatpush1.msra.mxu0 %v1890
    %1929 = vmatprep.subr.mxu0 0.0
    %1930 = vmatpush1.msra.mxu0 %v1894
    %1931 = vmatprep.subr.mxu0 0.0
    %1932 = vmatpush1.msra.mxu0 %v1898
    %1933 = vmatprep.subr.mxu0 0.0
    %1934 = vmatpush1.msra.mxu0 %v1881
    %1935 = vmatprep.subr.mxu0 0.0
    %1936 = vmatpush1.msra.mxu0 %v1902
    %1937 = vmatprep.subr.mxu0 0.0
    %1938 = vmatpush1.msra.mxu0 %v1906
    %1939 = vmatprep.subr.mxu0 0.0
    %1940 = vmatpush1.msra.mxu0 %v1910
    %1941 = vmatprep.subr.mxu0 0.0
    %1942 = vmatpush1.msra.mxu0 %v1914
    %1943 = vmatprep.subr.mxu0 0.0
    %1944 = vmatpush1.msra.mxu0 0.0
    %1945 = vmatprep.subr.mxu0 0.0
    %1946 = vmatpush1.msra.mxu0 0.0
    %1947 = vmatprep.subr.mxu0 0.0
    %1948 = vmatpush1.msra.mxu0 0.0
    %1949 = vmatprep.subr.mxu0 0.0
    %1950 = vmatpush1.msra.mxu0 0.0
    %1951 = vmatprep.subr.mxu0 0.0
    %1952 = vmatpush1.msra.mxu0 0.0
    %1953 = vmatprep.subr.mxu0 0.0
    %1954 = vmatpush1.msra.mxu0 0.0
    %1955 = vmatprep.subr.mxu0 0.0
    %1956 = vmatpush1.msra.mxu0 0.0
    %1957 = vmatprep.subr.mxu0 0.0
    %1958 = vmatpush1.msra.mxu0 0.0
    %1959 = vmatprep.subr.mxu0 0.0
    %1960 = vmatpush1.msra.mxu0 0.0
    %1961 = vmatprep.subr.mxu0 0.0
    %1962 = vmatpush1.msra.mxu0 0.0
    %1963 = vmatprep.subr.mxu0 0.0
    %1964 = vmatpush1.msra.mxu0 0.0
    %1965 = vmatprep.subr.mxu0 0.0
    %1966 = vmatpush1.msra.mxu0 0.0
    %1967 = vmatprep.subr.mxu0 0.0
    %1968 = vmatpush1.msra.mxu0 0.0
    %1969 = vmatprep.subr.mxu0 0.0
    %1970 = vmatpush1.msra.mxu0 0.0
    %1971 = vmatprep.subr.mxu0 0.0
    %1972 = vmatpush1.msra.mxu0 0.0
    %1973 = vmatprep.subr.mxu0 0.0
    %1974 = vmatpush1.msra.mxu0 0.0
    %1975 = vmatprep.subr.mxu0 0.0
    %1976 = vmatpush1.msra.mxu0 0.0
    %1977 = vmatprep.subr.mxu0 0.0
    %1978 = vmatpush1.msra.mxu0 0.0
    %1979 = vmatprep.subr.mxu0 0.0
    %1980 = vmatpush1.msra.mxu0 0.0
    %1981 = vmatprep.subr.mxu0 0.0
    %1982 = vmatpush1.msra.mxu0 0.0
    %1983 = vmatprep.subr.mxu0 0.0
    %1984 = vmatpush1.msra.mxu0 0.0
    %1985 = vmatprep.subr.mxu0 0.0
    %1986 = vmatpush1.msra.mxu0 0.0
    %1987 = vmatprep.subr.mxu0 0.0
    %1988 = vmatpush1.msra.mxu0 0.0
    %1989 = vmatprep.mubr.f32.mxu0 0.0
    %1990 = vmatmul.mubr.f32.gmra.mrb[0].mxu0 %v1923
    %v1991 = vpop.f32.mrb[0].mxu0
    %v1992 = vadd.f32 %v1920, %v1991
    %v1993 = vpop.f32.mrb[0].mxu0
    %1994 = vdwg.mxu0
    %v1995 = vmax.f32 %v1992, 0.0
    %1997 = vrot.lane.b32.xlu0 %v1995, 127
    %v1998 = vpop.permute.xlu0 %1997
    %v2000 = vmax.f32 %v1995, %v1998
    %2002 = vrot.lane.b32.xlu0 %v2000, 120
    %v2003 = vpop.permute.xlu0 %2002
    %v2005 = vmax.f32 %v2000, %v2003
    %v2006 = vld [vmem:[%s16] sm:$0xff]
    %v2007 = vld [vmem:[%s16 + $0x8] sm:$0xff]
    %v2008 = vld [vmem:[%s16 + $0x10] sm:$0xff]
    %v2009 = vld [vmem:[%s16 + $0x18] sm:$0xff]
    %v2010 = vld [vmem:[%s16 + $0x20] sm:$0xff]
    %v2011 = vld [vmem:[%s16 + $0x28] sm:$0xff]
    %v2012 = vld [vmem:[%s16 + $0x30] sm:$0xff]
    %v2013 = vld [vmem:[%s16 + $0x38] sm:$0xff]
    %v2014 = vld [vmem:[%s16 + $0x40] sm:$0xff]
    %v2015 = vld [vmem:[%s16 + $0x48] sm:$0xff]
    %v2016 = vld [vmem:[%s16 + $0x50] sm:$0xff]
    %v2017 = vld [vmem:[%s16 + $0x58] sm:$0xff]
    %v2018 = vld [vmem:[%s16 + $0x60] sm:$0xff]
    %v2019 = vld [vmem:[%s16 + $0x68] sm:$0xff]
    %v2020 = vld [vmem:[%s16 + $0x70] sm:$0xff]
    %v2021 = vld [vmem:[%s16 + $0x78] sm:$0xff]
    %2022 = vmatprep.subr.mxu0 0.0
    %2023 = vmatpush1.msra.mxu0 %v2006
    %2024 = vmatprep.subr.mxu0 0.0
    %2025 = vmatpush1.msra.mxu0 %v2007
    %2026 = vmatprep.subr.mxu0 0.0
    %2027 = vmatpush1.msra.mxu0 %v2008
    %2028 = vmatprep.subr.mxu0 0.0
    %2029 = vmatpush1.msra.mxu0 %v2009
    %2030 = vmatprep.subr.mxu0 0.0
    %2031 = vmatpush1.msra.mxu0 %v2010
    %2032 = vmatprep.subr.mxu0 0.0
    %2033 = vmatpush1.msra.mxu0 %v2011
    %2034 = vmatprep.subr.mxu0 0.0
    %2035 = vmatpush1.msra.mxu0 %v2012
    %2036 = vmatprep.subr.mxu0 0.0
    %2037 = vmatpush1.msra.mxu0 %v2013
    %2038 = vmatprep.subr.mxu0 0.0
    %2039 = vmatpush1.msra.mxu0 %v2014
    %2040 = vmatprep.subr.mxu0 0.0
    %2041 = vmatpush1.msra.mxu0 %v2015
    %2042 = vmatprep.subr.mxu0 0.0
    %2043 = vmatpush1.msra.mxu0 %v2016
    %2044 = vmatprep.subr.mxu0 0.0
    %2045 = vmatpush1.msra.mxu0 %v2017
    %2046 = vmatprep.subr.mxu0 0.0
    %2047 = vmatpush1.msra.mxu0 %v2018
    %2048 = vmatprep.subr.mxu0 0.0
    %2049 = vmatpush1.msra.mxu0 %v2019
    %2050 = vmatprep.subr.mxu0 0.0
    %2051 = vmatpush1.msra.mxu0 %v2020
    %2052 = vmatprep.subr.mxu0 0.0
    %2053 = vmatpush1.msra.mxu0 %v2021
    %2054 = vmatprep.subr.mxu0 0.0
    %2055 = vmatpush1.msra.mxu0 0.0
    %2056 = vmatprep.subr.mxu0 0.0
    %2057 = vmatpush1.msra.mxu0 0.0
    %2058 = vmatprep.subr.mxu0 0.0
    %2059 = vmatpush1.msra.mxu0 0.0
    %2060 = vmatprep.subr.mxu0 0.0
    %2061 = vmatpush1.msra.mxu0 0.0
    %2062 = vmatprep.subr.mxu0 0.0
    %2063 = vmatpush1.msra.mxu0 0.0
    %2064 = vmatprep.subr.mxu0 0.0
    %2065 = vmatpush1.msra.mxu0 0.0
    %2066 = vmatprep.subr.mxu0 0.0
    %2067 = vmatpush1.msra.mxu0 0.0
    %2068 = vmatprep.subr.mxu0 0.0
    %2069 = vmatpush1.msra.mxu0 0.0
    %2070 = vmatprep.subr.mxu0 0.0
    %2071 = vmatpush1.msra.mxu0 0.0
    %2072 = vmatprep.subr.mxu0 0.0
    %2073 = vmatpush1.msra.mxu0 0.0
    %2074 = vmatprep.subr.mxu0 0.0
    %2075 = vmatpush1.msra.mxu0 0.0
    %2076 = vmatprep.subr.mxu0 0.0
    %2077 = vmatpush1.msra.mxu0 0.0
    %2078 = vmatprep.subr.mxu0 0.0
    %2079 = vmatpush1.msra.mxu0 0.0
    %2080 = vmatprep.subr.mxu0 0.0
    %2081 = vmatpush1.msra.mxu0 0.0
    %2082 = vmatprep.subr.mxu0 0.0
    %2083 = vmatpush1.msra.mxu0 0.0
    %2084 = vmatprep.subr.mxu0 0.0
    %2085 = vmatpush1.msra.mxu0 0.0
    %2086 = vmatprep.mubr.f32.mxu0 0.0
    %2087 = vmatmul.mubr.f32.gmra.mrb[0].mxu0 %v2005
    %v2088 = vpop.f32.mrb[0].mxu0
    %v2089 = vadd.f32 0.0, %v2088
    %v2090 = vpop.f32.mrb[0].mxu0
    %2091 = vdwg.mxu0
    %v2092 = vld [vmem:[%s17] sm:$0xff]
    %v2093 = vld [vmem:[%s17 + $0x8] sm:$0xff]
    %v2094 = vld [vmem:[%s17 + $0x10] sm:$0xff]
    %v2095 = vld [vmem:[%s17 + $0x18] sm:$0xff]
    %v2096 = vld [vmem:[%s17 + $0x20] sm:$0xff]
    %v2097 = vld [vmem:[%s17 + $0x28] sm:$0xff]
    %v2098 = vld [vmem:[%s17 + $0x30] sm:$0xff]
    %v2099 = vld [vmem:[%s17 + $0x38] sm:$0xff]
    %v2100 = vld [vmem:[%s17 + $0x40] sm:$0xff]
    %v2101 = vld [vmem:[%s17 + $0x48] sm:$0xff]
    %v2102 = vld [vmem:[%s17 + $0x50] sm:$0xff]
    %v2103 = vld [vmem:[%s17 + $0x58] sm:$0xff]
    %v2104 = vld [vmem:[%s17 + $0x60] sm:$0xff]
    %v2105 = vld [vmem:[%s17 + $0x68] sm:$0xff]
    %v2106 = vld [vmem:[%s17 + $0x70] sm:$0xff]
    %v2107 = vld [vmem:[%s17 + $0x78] sm:$0xff]
    %v2109 = vsel %vm1626, %v2092, 0
    %v2112 = vsel %vm1626, %v2093, 0
    %v2115 = vsel %vm1626, %v2094, 0
    %v2118 = vsel %vm1626, %v2095, 0
    %v2121 = vsel %vm1626, %v2096, 0
    %v2124 = vsel %vm1626, %v2097, 0
    %v2127 = vsel %vm1626, %v2098, 0
    %v2130 = vsel %vm1626, %v2099, 0
    %v2133 = vsel %vm1626, %v2100, 0
    %v2136 = vsel %vm1626, %v2101, 0
    %v2139 = vsel %vm1626, %v2102, 0
    %v2142 = vsel %vm1626, %v2103, 0
    %v2145 = vsel %vm1626, %v2104, 0
    %v2148 = vsel %vm1626, %v2105, 0
    %v2151 = vsel %vm1626, %v2106, 0
    %v2154 = vsel %vm1626, %v2107, 0
    %2156 = vmatprep.subr.mxu0 0.0
    %2157 = vmatpush1.msra.mxu0 %v2089
    %2158 = vmatprep.subr.mxu0 0.0
    %2159 = vmatpush1.msra.mxu0 0.0
    %2160 = vmatprep.subr.mxu0 0.0
    %2161 = vmatpush1.msra.mxu0 0.0
    %2162 = vmatprep.subr.mxu0 0.0
    %2163 = vmatpush1.msra.mxu0 0.0
    %2164 = vmatprep.subr.mxu0 0.0
    %2165 = vmatpush1.msra.mxu0 0.0
    %2166 = vmatprep.subr.mxu0 0.0
    %2167 = vmatpush1.msra.mxu0 0.0
    %2168 = vmatprep.subr.mxu0 0.0
    %2169 = vmatpush1.msra.mxu0 0.0
    %2170 = vmatprep.subr.mxu0 0.0
    %2171 = vmatpush1.msra.mxu0 0.0
    %2172 = vmatprep.subr.mxu0 0.0
    %2173 = vmatpush1.msra.mxu0 0.0
    %2174 = vmatprep.subr.mxu0 0.0
    %2175 = vmatpush1.msra.mxu0 0.0
    %2176 = vmatprep.subr.mxu0 0.0
    %2177 = vmatpush1.msra.mxu0 0.0
    %2178 = vmatprep.subr.mxu0 0.0
    %2179 = vmatpush1.msra.mxu0 0.0
    %2180 = vmatprep.subr.mxu0 0.0
    %2181 = vmatpush1.msra.mxu0 0.0
    %2182 = vmatprep.subr.mxu0 0.0
    %2183 = vmatpush1.msra.mxu0 0.0
    %2184 = vmatprep.subr.mxu0 0.0
    %2185 = vmatpush1.msra.mxu0 0.0
    %2186 = vmatprep.subr.mxu0 0.0
    %2187 = vmatpush1.msra.mxu0 0.0
    %2188 = vmatprep.subr.mxu0 0.0
    %2189 = vmatpush1.msra.mxu0 0.0
    %2190 = vmatprep.subr.mxu0 0.0
    %2191 = vmatpush1.msra.mxu0 0.0
    %2192 = vmatprep.subr.mxu0 0.0
    %2193 = vmatpush1.msra.mxu0 0.0
    %2194 = vmatprep.subr.mxu0 0.0
    %2195 = vmatpush1.msra.mxu0 0.0
    %2196 = vmatprep.subr.mxu0 0.0
    %2197 = vmatpush1.msra.mxu0 0.0
    %2198 = vmatprep.subr.mxu0 0.0
    %2199 = vmatpush1.msra.mxu0 0.0
    %2200 = vmatprep.subr.mxu0 0.0
    %2201 = vmatpush1.msra.mxu0 0.0
    %2202 = vmatprep.subr.mxu0 0.0
    %2203 = vmatpush1.msra.mxu0 0.0
    %2204 = vmatprep.subr.mxu0 0.0
    %2205 = vmatpush1.msra.mxu0 0.0
    %2206 = vmatprep.subr.mxu0 0.0
    %2207 = vmatpush1.msra.mxu0 0.0
    %2208 = vmatprep.subr.mxu0 0.0
    %2209 = vmatpush1.msra.mxu0 0.0
    %2210 = vmatprep.subr.mxu0 0.0
    %2211 = vmatpush1.msra.mxu0 0.0
    %2212 = vmatprep.subr.mxu0 0.0
    %2213 = vmatpush1.msra.mxu0 0.0
    %2214 = vmatprep.subr.mxu0 0.0
    %2215 = vmatpush1.msra.mxu0 0.0
    %2216 = vmatprep.subr.mxu0 0.0
    %2217 = vmatpush1.msra.mxu0 0.0
    %2218 = vmatprep.subr.mxu0 0.0
    %2219 = vmatpush1.msra.mxu0 0.0
    %2220 = vmatprep.mubr.f32.mxu0 0.0
    %2221 = vmatmul.mubr.f32.gmra.mrb[0].mxu0 %v2109
    %v2222 = vpop.f32.mrb[0].mxu0
    %v2223 = vadd.f32 0.0, %v2222
    %v2224 = vpop.f32.mrb[0].mxu0
    %2225 = vmatprep.mubr.f32.mxu0 0.0
    %2226 = vmatmul.mubr.f32.gmra.mrb[0].mxu0 %v2112
    %v2227 = vpop.f32.mrb[0].mxu0
    %v2228 = vadd.f32 0.0, %v2227
    %v2229 = vpop.f32.mrb[0].mxu0
    %2230 = vmatprep.mubr.f32.mxu0 0.0
    %2231 = vmatmul.mubr.f32.gmra.mrb[0].mxu0 %v2115
    %v2232 = vpop.f32.mrb[0].mxu0
    %v2233 = vadd.f32 0.0, %v2232
    %v2234 = vpop.f32.mrb[0].mxu0
    %2235 = vmatprep.mubr.f32.mxu0 0.0
    %2236 = vmatmul.mubr.f32.gmra.mrb[0].mxu0 %v2118
    %v2237 = vpop.f32.mrb[0].mxu0
    %v2238 = vadd.f32 0.0, %v2237
    %v2239 = vpop.f32.mrb[0].mxu0
    %2240 = vmatprep.mubr.f32.mxu0 0.0
    %2241 = vmatmul.mubr.f32.gmra.mrb[0].mxu0 %v2121
    %v2242 = vpop.f32.mrb[0].mxu0
    %v2243 = vadd.f32 0.0, %v2242
    %v2244 = vpop.f32.mrb[0].mxu0
    %2245 = vmatprep.mubr.f32.mxu0 0.0
    %2246 = vmatmul.mubr.f32.gmra.mrb[0].mxu0 %v2124
    %v2247 = vpop.f32.mrb[0].mxu0
    %v2248 = vadd.f32 0.0, %v2247
    %v2249 = vpop.f32.mrb[0].mxu0
    %2250 = vmatprep.mubr.f32.mxu0 0.0
    %2251 = vmatmul.mubr.f32.gmra.mrb[0].mxu0 %v2127
    %v2252 = vpop.f32.mrb[0].mxu0
    %v2253 = vadd.f32 0.0, %v2252
    %v2254 = vpop.f32.mrb[0].mxu0
    %2255 = vmatprep.mubr.f32.mxu0 0.0
    %2256 = vmatmul.mubr.f32.gmra.mrb[0].mxu0 %v2130
    %v2257 = vpop.f32.mrb[0].mxu0
    %v2258 = vadd.f32 0.0, %v2257
    %v2259 = vpop.f32.mrb[0].mxu0
    %2260 = vmatprep.mubr.f32.mxu0 0.0
    %2261 = vmatmul.mubr.f32.gmra.mrb[0].mxu0 %v2133
    %v2262 = vpop.f32.mrb[0].mxu0
    %v2263 = vadd.f32 0.0, %v2262
    %v2264 = vpop.f32.mrb[0].mxu0
    %2265 = vmatprep.mubr.f32.mxu0 0.0
    %2266 = vmatmul.mubr.f32.gmra.mrb[0].mxu0 %v2136
    %v2267 = vpop.f32.mrb[0].mxu0
    %v2268 = vadd.f32 0.0, %v2267
    %v2269 = vpop.f32.mrb[0].mxu0
    %2270 = vmatprep.mubr.f32.mxu0 0.0
    %2271 = vmatmul.mubr.f32.gmra.mrb[0].mxu0 %v2139
    %v2272 = vpop.f32.mrb[0].mxu0
    %v2273 = vadd.f32 0.0, %v2272
    %v2274 = vpop.f32.mrb[0].mxu0
    %2275 = vmatprep.mubr.f32.mxu0 0.0
    %2276 = vmatmul.mubr.f32.gmra.mrb[0].mxu0 %v2142
    %v2277 = vpop.f32.mrb[0].mxu0
    %v2278 = vadd.f32 0.0, %v2277
    %v2279 = vpop.f32.mrb[0].mxu0
    %2280 = vmatprep.mubr.f32.mxu0 0.0
    %2281 = vmatmul.mubr.f32.gmra.mrb[0].mxu0 %v2145
    %v2282 = vpop.f32.mrb[0].mxu0
    %v2283 = vadd.f32 0.0, %v2282
    %v2284 = vpop.f32.mrb[0].mxu0
    %2285 = vmatprep.mubr.f32.mxu0 0.0
    %2286 = vmatmul.mubr.f32.gmra.mrb[0].mxu0 %v2148
    %v2287 = vpop.f32.mrb[0].mxu0
    %v2288 = vadd.f32 0.0, %v2287
    %v2289 = vpop.f32.mrb[0].mxu0
    %2290 = vmatprep.mubr.f32.mxu0 0.0
    %2291 = vmatmul.mubr.f32.gmra.mrb[0].mxu0 %v2151
    %v2292 = vpop.f32.mrb[0].mxu0
    %v2293 = vadd.f32 0.0, %v2292
    %v2294 = vpop.f32.mrb[0].mxu0
    %2295 = vmatprep.mubr.f32.mxu0 0.0
    %2296 = vmatmul.mubr.f32.gmra.mrb[0].mxu0 %v2154
    %v2297 = vpop.f32.mrb[0].mxu0
    %v2298 = vadd.f32 0.0, %v2297
    %v2299 = vpop.f32.mrb[0].mxu0
    %2300 = vdwg.mxu0
    %v2301 = vld [vmem:[%s18] sm:$0xff]
    %v2302 = vld [vmem:[%s18 + $0x8] sm:$0xff]
    %v2303 = vld [vmem:[%s18 + $0x10] sm:$0xff]
    %v2304 = vld [vmem:[%s18 + $0x18] sm:$0xff]
    %v2305 = vld [vmem:[%s18 + $0x20] sm:$0xff]
    %v2306 = vld [vmem:[%s18 + $0x28] sm:$0xff]
    %v2307 = vld [vmem:[%s18 + $0x30] sm:$0xff]
    %v2308 = vld [vmem:[%s18 + $0x38] sm:$0xff]
    %v2309 = vld [vmem:[%s18 + $0x40] sm:$0xff]
    %v2310 = vld [vmem:[%s18 + $0x48] sm:$0xff]
    %v2311 = vld [vmem:[%s18 + $0x50] sm:$0xff]
    %v2312 = vld [vmem:[%s18 + $0x58] sm:$0xff]
    %v2313 = vld [vmem:[%s18 + $0x60] sm:$0xff]
    %v2314 = vld [vmem:[%s18 + $0x68] sm:$0xff]
    %v2315 = vld [vmem:[%s18 + $0x70] sm:$0xff]
    %v2316 = vld [vmem:[%s18 + $0x78] sm:$0xff]
    %v2317 = vmul.f32 %v2223, %v2301
    %v2318 = vmul.f32 %v2228, %v2302
    %v2319 = vmul.f32 %v2233, %v2303
    %v2320 = vmul.f32 %v2238, %v2304
    %v2321 = vmul.f32 %v2243, %v2305
    %v2322 = vmul.f32 %v2248, %v2306
    %v2323 = vmul.f32 %v2253, %v2307
    %v2324 = vmul.f32 %v2258, %v2308
    %v2325 = vmul.f32 %v2263, %v2309
    %v2326 = vmul.f32 %v2268, %v2310
    %v2327 = vmul.f32 %v2273, %v2311
    %v2328 = vmul.f32 %v2278, %v2312
    %v2329 = vmul.f32 %v2283, %v2313
    %v2330 = vmul.f32 %v2288, %v2314
    %v2331 = vmul.f32 %v2293, %v2315
    %v2332 = vmul.f32 %v2298, %v2316
    %v2333 = vld [vmem:[%s19] sm:$0xff]
    %v2334 = vld [vmem:[%s19 + $0x8] sm:$0xff]
    %v2335 = vld [vmem:[%s19 + $0x10] sm:$0xff]
    %v2336 = vld [vmem:[%s19 + $0x18] sm:$0xff]
    %vm2337 = vcmask 261120
    %v2339 = vsel %vm2337, %v2317, 0
    %v2342 = vsel %vm2337, %v2318, 0
    %v2345 = vsel %vm2337, %v2319, 0
    %v2348 = vsel %vm2337, %v2320, 0
    %v2351 = vsel %vm2337, %v2321, 0
    %v2354 = vsel %vm2337, %v2322, 0
    %v2357 = vsel %vm2337, %v2323, 0
    %v2360 = vsel %vm2337, %v2324, 0
    %v2363 = vsel %vm2337, %v2325, 0
    %v2366 = vsel %vm2337, %v2326, 0
    %v2369 = vsel %vm2337, %v2327, 0
    %v2372 = vsel %vm2337, %v2328, 0
    %v2375 = vsel %vm2337, %v2329, 0
    %v2378 = vsel %vm2337, %v2330, 0
    %v2381 = vsel %vm2337, %v2331, 0
    %v2384 = vsel %vm2337, %v2332, 0
    %2386 = vmatprep.subr.mxu0 0.0
    %2387 = vmatpush1.msra.mxu0 %v2333
    %2388 = vmatprep.subr.mxu0 0.0
    %2389 = vmatpush1.msra.mxu0 %v2334
    %2390 = vmatprep.subr.mxu0 0.0
    %2391 = vmatpush1.msra.mxu0 %v2335
    %2392 = vmatprep.subr.mxu0 0.0
    %2393 = vmatpush1.msra.mxu0 %v2336
    %2394 = vmatprep.subr.mxu0 0.0
    %2395 = vmatpush1.msra.mxu0 0.0
    %2396 = vmatprep.subr.mxu0 0.0
    %2397 = vmatpush1.msra.mxu0 0.0
    %2398 = vmatprep.subr.mxu0 0.0
    %2399 = vmatpush1.msra.mxu0 0.0
    %2400 = vmatprep.subr.mxu0 0.0
    %2401 = vmatpush1.msra.mxu0 0.0
    %2402 = vmatprep.subr.mxu0 0.0
    %2403 = vmatpush1.msra.mxu0 0.0
    %2404 = vmatprep.subr.mxu0 0.0
    %2405 = vmatpush1.msra.mxu0 0.0
    %2406 = vmatprep.subr.mxu0 0.0
    %2407 = vmatpush1.msra.mxu0 0.0
    %2408 = vmatprep.subr.mxu0 0.0
    %2409 = vmatpush1.msra.mxu0 0.0
    %2410 = vmatprep.subr.mxu0 0.0
    %2411 = vmatpush1.msra.mxu0 0.0
    %2412 = vmatprep.subr.mxu0 0.0
    %2413 = vmatpush1.msra.mxu0 0.0
    %2414 = vmatprep.subr.mxu0 0.0
    %2415 = vmatpush1.msra.mxu0 0.0
    %2416 = vmatprep.subr.mxu0 0.0
    %2417 = vmatpush1.msra.mxu0 0.0
    %2418 = vmatprep.subr.mxu0 0.0
    %2419 = vmatpush1.msra.mxu0 0.0
    %2420 = vmatprep.subr.mxu0 0.0
    %2421 = vmatpush1.msra.mxu0 0.0
    %2422 = vmatprep.subr.mxu0 0.0
    %2423 = vmatpush1.msra.mxu0 0.0
    %2424 = vmatprep.subr.mxu0 0.0
    %2425 = vmatpush1.msra.mxu0 0.0
    %2426 = vmatprep.subr.mxu0 0.0
    %2427 = vmatpush1.msra.mxu0 0.0
    %2428 = vmatprep.subr.mxu0 0.0
    %2429 = vmatpush1.msra.mxu0 0.0
    %2430 = vmatprep.subr.mxu0 0.0
    %2431 = vmatpush1.msra.mxu0 0.0
    %2432 = vmatprep.subr.mxu0 0.0
    %2433 = vmatpush1.msra.mxu0 0.0
    %2434 = vmatprep.subr.mxu0 0.0
    %2435 = vmatpush1.msra.mxu0 0.0
    %2436 = vmatprep.subr.mxu0 0.0
    %2437 = vmatpush1.msra.mxu0 0.0
    %2438 = vmatprep.subr.mxu0 0.0
    %2439 = vmatpush1.msra.mxu0 0.0
    %2440 = vmatprep.subr.mxu0 0.0
    %2441 = vmatpush1.msra.mxu0 0.0
    %2442 = vmatprep.subr.mxu0 0.0
    %2443 = vmatpush1.msra.mxu0 0.0
    %2444 = vmatprep.subr.mxu0 0.0
    %2445 = vmatpush1.msra.mxu0 0.0
    %2446 = vmatprep.subr.mxu0 0.0
    %2447 = vmatpush1.msra.mxu0 0.0
    %2448 = vmatprep.subr.mxu0 0.0
    %2449 = vmatpush1.msra.mxu0 0.0
    %2450 = vmatprep.mubr.f32.mxu0 0.0
    %2451 = vmatmul.mubr.f32.gmra.mrb[0].mxu0 %v2339
    %v2452 = vpop.f32.mrb[0].mxu0
    %v2453 = vadd.f32 0.0, %v2452
    %v2454 = vpop.f32.mrb[0].mxu0
    %2455 = vmatprep.mubr.f32.mxu0 0.0
    %2456 = vmatmul.mubr.f32.gmra.mrb[0].mxu0 %v2342
    %v2457 = vpop.f32.mrb[0].mxu0
    %v2458 = vadd.f32 0.0, %v2457
    %v2459 = vpop.f32.mrb[0].mxu0
    %2460 = vmatprep.mubr.f32.mxu0 0.0
    %2461 = vmatmul.mubr.f32.gmra.mrb[0].mxu0 %v2345
    %v2462 = vpop.f32.mrb[0].mxu0
    %v2463 = vadd.f32 0.0, %v2462
    %v2464 = vpop.f32.mrb[0].mxu0
    %2465 = vmatprep.mubr.f32.mxu0 0.0
    %2466 = vmatmul.mubr.f32.gmra.mrb[0].mxu0 %v2348
    %v2467 = vpop.f32.mrb[0].mxu0
    %v2468 = vadd.f32 0.0, %v2467
    %v2469 = vpop.f32.mrb[0].mxu0
    %2470 = vmatprep.mubr.f32.mxu0 0.0
    %2471 = vmatmul.mubr.f32.gmra.mrb[0].mxu0 %v2351
    %v2472 = vpop.f32.mrb[0].mxu0
    %v2473 = vadd.f32 0.0, %v2472
    %v2474 = vpop.f32.mrb[0].mxu0
    %2475 = vmatprep.mubr.f32.mxu0 0.0
    %2476 = vmatmul.mubr.f32.gmra.mrb[0].mxu0 %v2354
    %v2477 = vpop.f32.mrb[0].mxu0
    %v2478 = vadd.f32 0.0, %v2477
    %v2479 = vpop.f32.mrb[0].mxu0
    %2480 = vmatprep.mubr.f32.mxu0 0.0
    %2481 = vmatmul.mubr.f32.gmra.mrb[0].mxu0 %v2357
    %v2482 = vpop.f32.mrb[0].mxu0
    %v2483 = vadd.f32 0.0, %v2482
    %v2484 = vpop.f32.mrb[0].mxu0
    %2485 = vmatprep.mubr.f32.mxu0 0.0
    %2486 = vmatmul.mubr.f32.gmra.mrb[0].mxu0 %v2360
    %v2487 = vpop.f32.mrb[0].mxu0
    %v2488 = vadd.f32 0.0, %v2487
    %v2489 = vpop.f32.mrb[0].mxu0
    %2490 = vmatprep.mubr.f32.mxu0 0.0
    %2491 = vmatmul.mubr.f32.gmra.mrb[0].mxu0 %v2363
    %v2492 = vpop.f32.mrb[0].mxu0
    %v2493 = vadd.f32 0.0, %v2492
    %v2494 = vpop.f32.mrb[0].mxu0
    %2495 = vmatprep.mubr.f32.mxu0 0.0
    %2496 = vmatmul.mubr.f32.gmra.mrb[0].mxu0 %v2366
    %v2497 = vpop.f32.mrb[0].mxu0
    %v2498 = vadd.f32 0.0, %v2497
    %v2499 = vpop.f32.mrb[0].mxu0
    %2500 = vmatprep.mubr.f32.mxu0 0.0
    %2501 = vmatmul.mubr.f32.gmra.mrb[0].mxu0 %v2369
    %v2502 = vpop.f32.mrb[0].mxu0
    %v2503 = vadd.f32 0.0, %v2502
    %v2504 = vpop.f32.mrb[0].mxu0
    %2505 = vmatprep.mubr.f32.mxu0 0.0
    %2506 = vmatmul.mubr.f32.gmra.mrb[0].mxu0 %v2372
    %v2507 = vpop.f32.mrb[0].mxu0
    %v2508 = vadd.f32 0.0, %v2507
    %v2509 = vpop.f32.mrb[0].mxu0
    %2510 = vmatprep.mubr.f32.mxu0 0.0
    %2511 = vmatmul.mubr.f32.gmra.mrb[0].mxu0 %v2375
    %v2512 = vpop.f32.mrb[0].mxu0
    %v2513 = vadd.f32 0.0, %v2512
    %v2514 = vpop.f32.mrb[0].mxu0
    %2515 = vmatprep.mubr.f32.mxu0 0.0
    %2516 = vmatmul.mubr.f32.gmra.mrb[0].mxu0 %v2378
    %v2517 = vpop.f32.mrb[0].mxu0
    %v2518 = vadd.f32 0.0, %v2517
    %v2519 = vpop.f32.mrb[0].mxu0
    %2520 = vmatprep.mubr.f32.mxu0 0.0
    %2521 = vmatmul.mubr.f32.gmra.mrb[0].mxu0 %v2381
    %v2522 = vpop.f32.mrb[0].mxu0
    %v2523 = vadd.f32 0.0, %v2522
    %v2524 = vpop.f32.mrb[0].mxu0
    %2525 = vmatprep.mubr.f32.mxu0 0.0
    %2526 = vmatmul.mubr.f32.gmra.mrb[0].mxu0 %v2384
    %v2527 = vpop.f32.mrb[0].mxu0
    %v2528 = vadd.f32 0.0, %v2527
    %v2529 = vpop.f32.mrb[0].mxu0
    %2530 = vdwg.mxu0
    %v2531 = vld [vmem:[#allocation15] sm:$0xff]
    %v2532 = vld [vmem:[#allocation15 + $0x8] sm:$0xff]
    %v2533 = vld [vmem:[#allocation15 + $0x10] sm:$0xff]
    %v2534 = vld [vmem:[#allocation15 + $0x18] sm:$0xff]
    %v2535 = vld [vmem:[%s21] sm:$0xff]
    %v2536 = vld [vmem:[%s21 + $0x8] sm:$0xff]
    %v2537 = vld [vmem:[%s21 + $0x10] sm:$0xff]
    %v2538 = vld [vmem:[%s21 + $0x18] sm:$0xff]
    %2540 = vset.pattern.permute.xlu0 0
    %2541 = vperm.xlu0 %2540, %v2535
    %v2542 = vpop.permute.xlu0 %2541
    %2545 = vset.pattern.permute.xlu0 0
    %2546 = vperm.xlu0 %2545, %v2536
    %v2547 = vpop.permute.xlu0 %2546
    %2550 = vset.pattern.permute.xlu0 0
    %2551 = vperm.xlu0 %2550, %v2537
    %v2552 = vpop.permute.xlu0 %2551
    %2555 = vset.pattern.permute.xlu0 0
    %2556 = vperm.xlu0 %2555, %v2538
    %v2557 = vpop.permute.xlu0 %2556
    %2559 = vmatprep.subr.mxu0 0.0
    %2560 = vmatpush1.msra.mxu0 %v2453
    %2561 = vmatprep.subr.mxu0 0.0
    %2562 = vmatpush1.msra.mxu0 %v2458
    %2563 = vmatprep.subr.mxu0 0.0
    %2564 = vmatpush1.msra.mxu0 %v2463
    %2565 = vmatprep.subr.mxu0 0.0
    %2566 = vmatpush1.msra.mxu0 %v2468
    %2567 = vmatprep.subr.mxu0 0.0
    %2568 = vmatpush1.msra.mxu0 %v2473
    %2569 = vmatprep.subr.mxu0 0.0
    %2570 = vmatpush1.msra.mxu0 %v2478
    %2571 = vmatprep.subr.mxu0 0.0
    %2572 = vmatpush1.msra.mxu0 %v2483
    %2573 = vmatprep.subr.mxu0 0.0
    %2574 = vmatpush1.msra.mxu0 %v2488
    %2575 = vmatprep.subr.mxu0 0.0
    %2576 = vmatpush1.msra.mxu0 %v2493
    %2577 = vmatprep.subr.mxu0 0.0
    %2578 = vmatpush1.msra.mxu0 %v2498
    %2579 = vmatprep.subr.mxu0 0.0
    %2580 = vmatpush1.msra.mxu0 %v2503
    %2581 = vmatprep.subr.mxu0 0.0
    %2582 = vmatpush1.msra.mxu0 %v2508
    %2583 = vmatprep.subr.mxu0 0.0
    %2584 = vmatpush1.msra.mxu0 %v2513
    %2585 = vmatprep.subr.mxu0 0.0
    %2586 = vmatpush1.msra.mxu0 %v2518
    %2587 = vmatprep.subr.mxu0 0.0
    %2588 = vmatpush1.msra.mxu0 %v2523
    %2589 = vmatprep.subr.mxu0 0.0
    %2590 = vmatpush1.msra.mxu0 %v2528
    %2591 = vmatprep.subr.mxu0 0.0
    %2592 = vmatpush1.msra.mxu0 0.0
    %2593 = vmatprep.subr.mxu0 0.0
    %2594 = vmatpush1.msra.mxu0 0.0
    %2595 = vmatprep.subr.mxu0 0.0
    %2596 = vmatpush1.msra.mxu0 0.0
    %2597 = vmatprep.subr.mxu0 0.0
    %2598 = vmatpush1.msra.mxu0 0.0
    %2599 = vmatprep.subr.mxu0 0.0
    %2600 = vmatpush1.msra.mxu0 0.0
    %2601 = vmatprep.subr.mxu0 0.0
    %2602 = vmatpush1.msra.mxu0 0.0
    %2603 = vmatprep.subr.mxu0 0.0
    %2604 = vmatpush1.msra.mxu0 0.0
    %2605 = vmatprep.subr.mxu0 0.0
    %2606 = vmatpush1.msra.mxu0 0.0
    %2607 = vmatprep.subr.mxu0 0.0
    %2608 = vmatpush1.msra.mxu0 0.0
    %2609 = vmatprep.subr.mxu0 0.0
    %2610 = vmatpush1.msra.mxu0 0.0
    %2611 = vmatprep.subr.mxu0 0.0
    %2612 = vmatpush1.msra.mxu0 0.0
    %2613 = vmatprep.subr.mxu0 0.0
    %2614 = vmatpush1.msra.mxu0 0.0
    %2615 = vmatprep.subr.mxu0 0.0
    %2616 = vmatpush1.msra.mxu0 0.0
    %2617 = vmatprep.subr.mxu0 0.0
    %2618 = vmatpush1.msra.mxu0 0.0
    %2619 = vmatprep.subr.mxu0 0.0
    %2620 = vmatpush1.msra.mxu0 0.0
    %2621 = vmatprep.subr.mxu0 0.0
    %2622 = vmatpush1.msra.mxu0 0.0
    %2623 = vmatprep.mubr.f32.mxu0 0.0
    %2624 = vmatmul.mubr.f32.gmra.mrb[0].mxu0 %v2531
    %v2625 = vpop.f32.mrb[0].mxu0
    %v2626 = vadd.f32 %v2542, %v2625
    %v2627 = vpop.f32.mrb[0].mxu0
    %2628 = vmatprep.mubr.f32.mxu0 0.0
    %2629 = vmatmul.mubr.f32.gmra.mrb[0].mxu0 %v2532
    %v2630 = vpop.f32.mrb[0].mxu0
    %v2631 = vadd.f32 %v2547, %v2630
    %v2632 = vpop.f32.mrb[0].mxu0
    %2633 = vmatprep.mubr.f32.mxu0 0.0
    %2634 = vmatmul.mubr.f32.gmra.mrb[0].mxu0 %v2533
    %v2635 = vpop.f32.mrb[0].mxu0
    %v2636 = vadd.f32 %v2552, %v2635
    %v2637 = vpop.f32.mrb[0].mxu0
    %2638 = vmatprep.mubr.f32.mxu0 0.0
    %2639 = vmatmul.mubr.f32.gmra.mrb[0].mxu0 %v2534
    %v2640 = vpop.f32.mrb[0].mxu0
    %v2641 = vadd.f32 %v2557, %v2640
    %v2642 = vpop.f32.mrb[0].mxu0
    %2643 = vdwg.mxu0
    %vm2644 = vcmask 15360
    %2645 = vst.msk [vmem:[%s22] sm:$0xff] %vm2644, %v2626
    %2646 = vst.msk [vmem:[%s22 + $0x8] sm:$0xff] %vm2644, %v2631
    %2647 = vst.msk [vmem:[%s22 + $0x10] sm:$0xff] %vm2644, %v2636
    %2648 = vst.msk [vmem:[%s22 + $0x18] sm:$0xff] %vm2644, %v2641
    // Predicated region
    $region126: #{tpu_custom_call.1} parent=1 // pred_check
      _
    $region127: #{tpu_custom_call.1} parent=1 // pred_check_branch
      %2650 = sbr.rel (0) target = $region129
    $region128: #{tpu_custom_call.1} parent=1 // pred_region
      _
    $region129: #{tpu_custom_call.1} parent=1 // pred_fallthru
      _
    // Predicated region
    $region130: #{tpu_custom_call.1} parent=1 // pred_check
      _
    $region131: #{tpu_custom_call.1} parent=1 // pred_check_branch
      %2652 = sbr.rel (0) target = $region133
    $region132: #{tpu_custom_call.1} parent=1 // pred_region
      _
    $region133: #{tpu_custom_call.1} parent=1 // pred_fallthru
      _
    %2653 = vsyncpa [#allocation3], 1
    %2654 = vsyncpa [#allocation5], 1
    %2655 = vsyncpa [#allocation8], 1
    %2656 = vsyncpa [#allocation11], 1
    %2657 = vsyncpa [#allocation14], 1

</llo_original>
